<compile_context>
chip_gen: v5e
topology: v5e:2x2
jax: 0.10.0
libtpu: 0.0.40
codegen_flags: <defaults>
</compile_context>

<pallas_src>
import functools

import jax
import jax.numpy as jnp
from jax.experimental import pallas as pl
from jax.experimental.pallas import tpu as pltpu

KSIZE = 7
PAD = 3

_FUSED_BLOCK_CAP = 6 << 20      # per-(Bb, C, HWp) block byte cap for the fused path
_STATS_F32_CHUNK_CAP = 1 << 20  # f32 temp cap for chunked channel statistics


def _round_up(n, m):
    return (n + m - 1) // m * m


def _pick_batch_block(B, per_batch_bytes, cap):
    """Largest divisor of B fitting `cap`, keeping >=2 (>=4 when B allows) grid steps."""
    if B >= 4:
        max_bb = B // 4
    elif B >= 2:
        max_bb = B // 2
    else:
        max_bb = 1          # B == 1: cannot pipeline over batch
    best = 1
    for bb in range(1, max_bb + 1):
        if B % bb == 0 and bb * per_batch_bytes <= cap:
            best = bb
    return best


def _pick_c_chunk(C, per_channel_bytes, cap):
    """Largest divisor of C that is a multiple of 8 (or C itself) fitting `cap`."""
    # TODO(synk): handle C not divisible by 8 with a remainder chunk instead of
    # falling back to a single whole-C chunk.
    cands = [cc for cc in range(1, C + 1) if C % cc == 0 and (cc % 8 == 0 or cc == C)]
    fitting = [cc for cc in cands if cc * per_channel_bytes <= cap]
    return max(fitting) if fitting else min(cands)


def _conv_sigmoid_attn(w_ref, rc, avg, mx, *, H, W, HWp):
    """sigmoid(conv2d([avg; max], w, padding=3, no bias)) on flat lane-dense maps.

    avg, mx : (Bb, HWp) f32 channel statistics (spatial axis flattened, zero tail).
    rc      : (2, HWp) int32 [row; col] index of every flat position.
    Returns (Bb, HWp) f32 attention map (tail positions are don't-care).
    """
    rows = rc[0:1, :]                                    # (1, HWp)
    cols = rc[1:2, :]
    # Boundary masks hoisted out of the tap loops: the row mask depends only on
    # kh, the col mask only on kw (valid iff 0 <= row+dh < H and 0 <= col+dw < W).
    rmasks = [(rows >= PAD - kh) & (rows < H + PAD - kh) for kh in range(KSIZE)]
    cmasks = [(cols >= PAD - kw) & (cols < W + PAD - kw) for kw in range(KSIZE)]

    # Two independent partial sums: enough ILP to hide add latency without
    # blowing up accumulator live ranges.
    parts = [jnp.zeros_like(avg), jnp.zeros_like(avg)]
    tap = 0
    for c, m in enumerate((avg, mx)):
        for kh in range(KSIZE):
            dh = kh - PAD
            sh = (-dh * W) % HWp
            base = m if sh == 0 else pltpu.roll(m, sh, 1)      # XLU lane rotate
            base = jnp.where(rmasks[kh], base, 0.0)            # row-boundary zeroing
            for kw in range(KSIZE):
                dw = kw - PAD
                sw = (-dw) % HWp
                val = base if sw == 0 else pltpu.roll(base, sw, 1)
                wt = w_ref[c * KSIZE * KSIZE + kh * KSIZE + kw]  # SMEM scalar
                parts[tap & 1] = parts[tap & 1] + wt * jnp.where(cmasks[kw], val, 0.0)
                tap += 1
    return jax.nn.sigmoid(parts[0] + parts[1])


def _sa_fused_kernel(w_ref, rc_ref, x_ref, o_ref, *, H, W, HWp, C, c_chunk):
    # w_ref : (2*7*7,) f32 conv weight in SMEM (flattened OIHW), grid-invariant.
    # rc_ref: (2, HWp) int32 [row; col] of every flat spatial position.
    # x_ref / o_ref: (Bb, C, HWp) block, lane-dense spatial axis.
    Bb = x_ref.shape[0]
    nchunks = C // c_chunk

    # Channel statistics accumulated in f32 chunk-by-chunk: avoids a hidden
    # full-block f32 upcast temp for sub-32-bit inputs.
    ssum = jnp.zeros((Bb, HWp), jnp.float32)
    smax = jnp.full((Bb, HWp), -jnp.inf, jnp.float32)
    for ci in range(nchunks):
        sl = slice(ci * c_chunk, (ci + 1) * c_chunk)
        chunk = x_ref[:, sl, :].astype(jnp.float32)        # (Bb, c_chunk, HWp)
        ssum = ssum + jnp.sum(chunk, axis=1)
        smax = jnp.maximum(smax, jnp.max(chunk, axis=1))
    avg = ssum * (1.0 / C)

    attn = _conv_sigmoid_attn(w_ref, rc_ref[...], avg, smax, H=H, W=W, HWp=HWp)

    # Apply in the input dtype (halves VALU work for bf16 on v6e/v7x).
    # TODO(synk): keep this multiply in f32 on v5e (no bf16 VPU) via a chip gate.
    attn_x = attn.astype(o_ref.dtype).reshape(Bb, 1, HWp)
    if nchunks == 1:
        o_ref[...] = attn_x * x_ref[...]
    else:
        attn_b = jnp.broadcast_to(attn_x, (Bb, c_chunk, HWp))  # hoisted broadcast
        for ci in range(nchunks):
            sl = slice(ci * c_chunk, (ci + 1) * c_chunk)
            o_ref[:, sl, :] = attn_b * x_ref[:, sl, :]


def _sa_stats_conv_kernel(w_ref, rc_ref, x_ref, attn_ref, sum_sc, max_sc,
                          *, H, W, HWp, C):
    # Pass 1 of the C-tiled path: reduce channel sum/max over the C grid axis,
    # then conv+sigmoid into the attention map on the last C step.
    c = pl.program_id(1)

    @pl.when(c == 0)
    def _():
        sum_sc[...] = jnp.zeros_like(sum_sc)
        max_sc[...] = jnp.full_like(max_sc, -jnp.inf)

    chunk = x_ref[...].astype(jnp.float32)                 # (1, Cc, HWp), Cc small
    sum_sc[...] += jnp.sum(chunk, axis=1)
    max_sc[...] = jnp.maximum(max_sc[...], jnp.max(chunk, axis=1))

    @pl.when(c == pl.num_programs(1) - 1)
    def _():
        avg = sum_sc[...] * (1.0 / C)
        attn = _conv_sigmoid_attn(w_ref, rc_ref[...], avg, max_sc[...],
                                  H=H, W=W, HWp=HWp)
        attn_ref[...] = attn.reshape(attn_ref.shape)


def _sa_apply_kernel(attn_ref, x_ref, o_ref):
    # Pass 2 of the C-tiled path: out = attn * x, in the input dtype.
    o_ref[...] = attn_ref[...].astype(o_ref.dtype) * x_ref[...]


def _fused_call(x_flat, w_flat, rc, *, B, C, H, W, HWp, itemsize, c_chunk):
    per_batch_bytes = C * HWp * itemsize
    Bb = _pick_batch_block(B, per_batch_bytes, _FUSED_BLOCK_CAP)
    cc = c_chunk if c_chunk is not None else _pick_c_chunk(C, HWp * 4, _STATS_F32_CHUNK_CAP)
    grid = (B // Bb,)

    cp = dict(dimension_semantics=("parallel",))
    # VMEM audit: double-buffered in + out blocks plus f32 kernel intermediates
    # (stats, conv partials, chunk temp).  Raise the scoped limit only when the
    # ~32 MiB default would not fit, clamped to device capacity minus 8 MiB.
    block_bytes = Bb * per_batch_bytes
    vmem_need = 4 * block_bytes + (cc + 16) * Bb * HWp * 4 + (1 << 20)
    if vmem_need > (32 << 20):
        try:
            cap_bytes = int(pltpu.get_tpu_info().vmem_capacity_bytes)
        except Exception:
            cap_bytes = 64 << 20                           # v7x floor
        cp["vmem_limit_bytes"] = int(min(vmem_need + (4 << 20), cap_bytes - (8 << 20)))

    kern = functools.partial(_sa_fused_kernel, H=H, W=W, HWp=HWp, C=C, c_chunk=cc)
    return pl.pallas_call(
        kern,
        out_shape=jax.ShapeDtypeStruct((B, C, HWp), x_flat.dtype),
        grid=grid,
        in_specs=[
            pl.BlockSpec(memory_space=pltpu.SMEM),                # conv weight (98 scalars)
            pl.BlockSpec((2, HWp), lambda b: (0, 0)),             # row/col ids (resident)
            pl.BlockSpec((Bb, C, HWp), lambda b: (b, 0, 0)),      # x block
        ],
        out_specs=pl.BlockSpec((Bb, C, HWp), lambda b: (b, 0, 0)),
        compiler_params=pltpu.CompilerParams(**cp),
    )(w_flat, rc, x_flat)


def _c_tiled_call(x_flat, w_flat, rc, *, B, C, H, W, HWp, itemsize, c_chunk):
    # Pass 1: attention map, C axis tiled (reduction axis last, "arbitrary").
    cc_a = c_chunk if c_chunk is not None else _pick_c_chunk(C, HWp * 4, 2 << 20)
    kern_a = functools.partial(_sa_stats_conv_kernel, H=H, W=W, HWp=HWp, C=C)
    attn = pl.pallas_call(
        kern_a,
        out_shape=jax.ShapeDtypeStruct((B, 1, HWp), jnp.float32),
        grid=(B, C // cc_a),
        in_specs=[
            pl.BlockSpec(memory_space=pltpu.SMEM),
            pl.BlockSpec((2, HWp), lambda b, c: (0, 0)),
            pl.BlockSpec((1, cc_a, HWp), lambda b, c: (b, c, 0)),
        ],
        out_specs=pl.BlockSpec((1, 1, HWp), lambda b, c: (b, 0, 0)),
        scratch_shapes=[pltpu.VMEM((1, HWp), jnp.float32),
                        pltpu.VMEM((1, HWp), jnp.float32)],
        compiler_params=pltpu.CompilerParams(
            dimension_semantics=("parallel", "arbitrary")),
    )(w_flat, rc, x_flat)

    # Pass 2: apply the attention map; both axes independent.
    cc_b = c_chunk if c_chunk is not None else _pick_c_chunk(C, HWp * itemsize, 4 << 20)
    return pl.pallas_call(
        _sa_apply_kernel,
        out_shape=jax.ShapeDtypeStruct((B, C, HWp), x_flat.dtype),
        grid=(B, C // cc_b),
        in_specs=[
            pl.BlockSpec((1, 1, HWp), lambda b, c: (b, 0, 0)),
            pl.BlockSpec((1, cc_b, HWp), lambda b, c: (b, c, 0)),
        ],
        out_specs=pl.BlockSpec((1, cc_b, HWp), lambda b, c: (b, c, 0)),
        compiler_params=pltpu.CompilerParams(
            dimension_semantics=("parallel", "parallel")),
    )(attn, x_flat)


def spatial_attention(x, conv_w, *, force_c_tiled=False, c_chunk=None):
    """x: (B, C, H, W); conv_w: (1, 2, 7, 7). Returns sigmoid(conv([avg; max])) * x."""
    B, C, H, W = x.shape
    HW = H * W
    HWp = _round_up(HW, 128)                 # lane-aligned spatial axis (unmasked vst)
    itemsize = jnp.dtype(x.dtype).itemsize

    if c_chunk is not None:
        assert C % c_chunk == 0 and (c_chunk % 8 == 0 or c_chunk == C), \
            "c_chunk must divide C and be a multiple of 8 (or C itself)"

    w_flat = conv_w.reshape(-1).astype(jnp.float32)                 # (2*7*7,)
    pos = jnp.arange(HWp, dtype=jnp.int32)
    rc = jnp.stack([pos // W, pos % W], axis=0)                     # (2, HWp) int32

    x_flat = x.reshape(B, C, HW)
    if HWp != HW:
        x_flat = jnp.pad(x_flat, ((0, 0), (0, 0), (0, HWp - HW)))   # zero tail

    per_batch_bytes = C * HWp * itemsize
    use_fused = (not force_c_tiled) and per_batch_bytes <= _FUSED_BLOCK_CAP

    if use_fused:
        out_flat = _fused_call(x_flat, w_flat, rc, B=B, C=C, H=H, W=W, HWp=HWp,
                               itemsize=itemsize, c_chunk=c_chunk)
    else:
        out_flat = _c_tiled_call(x_flat, w_flat, rc, B=B, C=C, H=H, W=W, HWp=HWp,
                                 itemsize=itemsize, c_chunk=c_chunk)

    if HWp != HW:
        out_flat = out_flat[:, :, :HW]
    return out_flat.reshape(B, C, H, W)


def _reference(x, conv_w):
    avg = jnp.mean(x, axis=1, keepdims=True)
    mx = jnp.max(x, axis=1, keepdims=True)
    cat = jnp.concatenate([avg, mx], axis=1)
    conv = jax.lax.conv_general_dilated(
        cat, conv_w, window_strides=(1, 1),
        padding=((PAD, PAD), (PAD, PAD)),
        dimension_numbers=("NCHW", "OIHW", "NCHW"))
    return jax.nn.sigmoid(conv) * x


if __name__ == "__main__":
    key = jax.random.PRNGKey(0)
    kx, kw, kx2 = jax.random.split(key, 3)

    # Deterministic synthetic init for nn.Conv2d(2, 1, 7, padding=3, bias=False).
    fan_in = 2 * KSIZE * KSIZE
    conv_w = jax.random.normal(kw, (1, 2, KSIZE, KSIZE), jnp.float32) * (1.0 / fan_in) ** 0.5

    # Primary check: fused single-call path, 128-aligned spatial axis.
    B, C, H, W = 2, 4, 16, 16
    x = jax.random.normal(kx, (B, C, H, W), jnp.float32)
    out = spatial_attention(x, conv_w)
    jax.block_until_ready(out)
    ref = _reference(x, conv_w)
    assert out.shape == (B, C, H, W) and out.dtype == x.dtype
    assert jnp.allclose(out, ref, atol=1e-5, rtol=1e-5), "fused path mismatch"

    # Secondary checks: non-128-multiple H*W (lane padding + boundary masks),
    # chunked stats/multiply in the fused kernel, and the C-tiled fallback path.
    x2 = jax.random.normal(kx2, (2, 16, 12, 12), jnp.float32)
    ref2 = _reference(x2, conv_w)
    out2a = spatial_attention(x2, conv_w)                               # fused, padded
    out2b = spatial_attention(x2, conv_w, c_chunk=8)                    # fused, chunked C
    out2c = spatial_attention(x2, conv_w, force_c_tiled=True, c_chunk=8)  # C-tiled 2-pass
    jax.block_until_ready((out2a, out2b, out2c))
    assert jnp.allclose(out2a, ref2, atol=1e-5, rtol=1e-5), "fused padded path mismatch"
    assert jnp.allclose(out2b, ref2, atol=1e-5, rtol=1e-5), "fused chunked path mismatch"
    assert jnp.allclose(out2c, ref2, atol=1e-5, rtol=1e-5), "c-tiled path mismatch"

    print("KERNEL_OK")
</pallas_src>

<mosaic_0001>
module attributes {stable_mosaic.version = 11 : i64} {
  func.func @_sa_fused_kernel(%arg0: i32, %arg1: memref<98xf32, #tpu.memory_space<smem>>, %arg2: memref<2x256xi32, #tpu.memory_space<vmem>>, %arg3: memref<1x4x256xf32, #tpu.memory_space<vmem>>, %arg4: memref<1x4x256xf32, #tpu.memory_space<vmem>>) attributes {dimension_semantics = [#tpu.dimension_semantics<parallel>], iteration_bounds = array<i64: 2>, scalar_prefetch = 0 : i64, scratch_operands = 0 : i64, tpu.core_type = #tpu.core_type<tc>, window_params = [{transform_indices = @transform_0, window_bounds = array<i64: 98>}, {pipeline_mode = #tpu.pipeline_mode<synchronous>, transform_indices = @transform_1, window_bounds = array<i64: 2, 256>}, {transform_indices = @transform_2, window_bounds = array<i64: 1, 4, 256>}, {transform_indices = @transform_3, window_bounds = array<i64: 1, 4, 256>}]} {
    %cst = arith.constant 0.000000e+00 : f32
    %0 = vector.broadcast %cst : f32 to vector<1x256xf32>
    %cst_0 = arith.constant 0xFF800000 : f32
    %1 = vector.broadcast %cst_0 : f32 to vector<1x256xf32>
    %c0 = arith.constant 0 : index
    %c0_1 = arith.constant 0 : index
    %c0_2 = arith.constant 0 : index
    %2 = vector.load %arg3[%c0, %c0_1, %c0_2] : memref<1x4x256xf32, #tpu.memory_space<vmem>>, vector<1x4x256xf32>
    %cst_3 = arith.constant dense<0.000000e+00> : vector<1x256xf32>
    %3 = vector.multi_reduction <add>, %2, %cst_3 [1] : vector<1x4x256xf32> to vector<1x256xf32>
    %4 = arith.addf %0, %3 : vector<1x256xf32>
    %cst_4 = arith.constant dense<0xFF800000> : vector<1x256xf32>
    %5 = vector.multi_reduction <maximumf>, %2, %cst_4 [1] : vector<1x4x256xf32> to vector<1x256xf32>
    %6 = arith.maximumf %1, %5 : vector<1x256xf32>
    %cst_5 = arith.constant 2.500000e-01 : f32
    %7 = vector.broadcast %cst_5 : f32 to vector<1x256xf32>
    %8 = arith.mulf %4, %7 : vector<1x256xf32>
    %c0_6 = arith.constant 0 : index
    %c0_7 = arith.constant 0 : index
    %9 = vector.load %arg2[%c0_6, %c0_7] : memref<2x256xi32, #tpu.memory_space<vmem>>, vector<2x256xi32>
    %10 = vector.extract_strided_slice %9 {offsets = [0, 0], sizes = [1, 256], strides = [1, 1]} : vector<2x256xi32> to vector<1x256xi32>
    %11 = vector.extract_strided_slice %9 {offsets = [1, 0], sizes = [1, 256], strides = [1, 1]} : vector<2x256xi32> to vector<1x256xi32>
    %c3_i32 = arith.constant 3 : i32
    %12 = vector.broadcast %c3_i32 : i32 to vector<1x256xi32>
    %13 = arith.cmpi sge, %10, %12 : vector<1x256xi32>
    %c19_i32 = arith.constant 19 : i32
    %14 = vector.broadcast %c19_i32 : i32 to vector<1x256xi32>
    %15 = arith.cmpi slt, %10, %14 : vector<1x256xi32>
    %16 = arith.andi %13, %15 : vector<1x256xi1>
    %c2_i32 = arith.constant 2 : i32
    %17 = vector.broadcast %c2_i32 : i32 to vector<1x256xi32>
    %18 = arith.cmpi sge, %10, %17 : vector<1x256xi32>
    %c18_i32 = arith.constant 18 : i32
    %19 = vector.broadcast %c18_i32 : i32 to vector<1x256xi32>
    %20 = arith.cmpi slt, %10, %19 : vector<1x256xi32>
    %21 = arith.andi %18, %20 : vector<1x256xi1>
    %c1_i32 = arith.constant 1 : i32
    %22 = vector.broadcast %c1_i32 : i32 to vector<1x256xi32>
    %23 = arith.cmpi sge, %10, %22 : vector<1x256xi32>
    %c17_i32 = arith.constant 17 : i32
    %24 = vector.broadcast %c17_i32 : i32 to vector<1x256xi32>
    %25 = arith.cmpi slt, %10, %24 : vector<1x256xi32>
    %26 = arith.andi %23, %25 : vector<1x256xi1>
    %c0_i32 = arith.constant 0 : i32
    %27 = vector.broadcast %c0_i32 : i32 to vector<1x256xi32>
    %28 = arith.cmpi sge, %10, %27 : vector<1x256xi32>
    %c16_i32 = arith.constant 16 : i32
    %29 = vector.broadcast %c16_i32 : i32 to vector<1x256xi32>
    %30 = arith.cmpi slt, %10, %29 : vector<1x256xi32>
    %31 = arith.andi %28, %30 : vector<1x256xi1>
    %c-1_i32 = arith.constant -1 : i32
    %32 = vector.broadcast %c-1_i32 : i32 to vector<1x256xi32>
    %33 = arith.cmpi sge, %10, %32 : vector<1x256xi32>
    %c15_i32 = arith.constant 15 : i32
    %34 = vector.broadcast %c15_i32 : i32 to vector<1x256xi32>
    %35 = arith.cmpi slt, %10, %34 : vector<1x256xi32>
    %36 = arith.andi %33, %35 : vector<1x256xi1>
    %c-2_i32 = arith.constant -2 : i32
    %37 = vector.broadcast %c-2_i32 : i32 to vector<1x256xi32>
    %38 = arith.cmpi sge, %10, %37 : vector<1x256xi32>
    %c14_i32 = arith.constant 14 : i32
    %39 = vector.broadcast %c14_i32 : i32 to vector<1x256xi32>
    %40 = arith.cmpi slt, %10, %39 : vector<1x256xi32>
    %41 = arith.andi %38, %40 : vector<1x256xi1>
    %c-3_i32 = arith.constant -3 : i32
    %42 = vector.broadcast %c-3_i32 : i32 to vector<1x256xi32>
    %43 = arith.cmpi sge, %10, %42 : vector<1x256xi32>
    %c13_i32 = arith.constant 13 : i32
    %44 = vector.broadcast %c13_i32 : i32 to vector<1x256xi32>
    %45 = arith.cmpi slt, %10, %44 : vector<1x256xi32>
    %46 = arith.andi %43, %45 : vector<1x256xi1>
    %c3_i32_8 = arith.constant 3 : i32
    %47 = vector.broadcast %c3_i32_8 : i32 to vector<1x256xi32>
    %48 = arith.cmpi sge, %11, %47 : vector<1x256xi32>
    %c19_i32_9 = arith.constant 19 : i32
    %49 = vector.broadcast %c19_i32_9 : i32 to vector<1x256xi32>
    %50 = arith.cmpi slt, %11, %49 : vector<1x256xi32>
    %51 = arith.andi %48, %50 : vector<1x256xi1>
    %c2_i32_10 = arith.constant 2 : i32
    %52 = vector.broadcast %c2_i32_10 : i32 to vector<1x256xi32>
    %53 = arith.cmpi sge, %11, %52 : vector<1x256xi32>
    %c18_i32_11 = arith.constant 18 : i32
    %54 = vector.broadcast %c18_i32_11 : i32 to vector<1x256xi32>
    %55 = arith.cmpi slt, %11, %54 : vector<1x256xi32>
    %56 = arith.andi %53, %55 : vector<1x256xi1>
    %c1_i32_12 = arith.constant 1 : i32
    %57 = vector.broadcast %c1_i32_12 : i32 to vector<1x256xi32>
    %58 = arith.cmpi sge, %11, %57 : vector<1x256xi32>
    %c17_i32_13 = arith.constant 17 : i32
    %59 = vector.broadcast %c17_i32_13 : i32 to vector<1x256xi32>
    %60 = arith.cmpi slt, %11, %59 : vector<1x256xi32>
    %61 = arith.andi %58, %60 : vector<1x256xi1>
    %c0_i32_14 = arith.constant 0 : i32
    %62 = vector.broadcast %c0_i32_14 : i32 to vector<1x256xi32>
    %63 = arith.cmpi sge, %11, %62 : vector<1x256xi32>
    %c16_i32_15 = arith.constant 16 : i32
    %64 = vector.broadcast %c16_i32_15 : i32 to vector<1x256xi32>
    %65 = arith.cmpi slt, %11, %64 : vector<1x256xi32>
    %66 = arith.andi %63, %65 : vector<1x256xi1>
    %c-1_i32_16 = arith.constant -1 : i32
    %67 = vector.broadcast %c-1_i32_16 : i32 to vector<1x256xi32>
    %68 = arith.cmpi sge, %11, %67 : vector<1x256xi32>
    %c15_i32_17 = arith.constant 15 : i32
    %69 = vector.broadcast %c15_i32_17 : i32 to vector<1x256xi32>
    %70 = arith.cmpi slt, %11, %69 : vector<1x256xi32>
    %71 = arith.andi %68, %70 : vector<1x256xi1>
    %c-2_i32_18 = arith.constant -2 : i32
    %72 = vector.broadcast %c-2_i32_18 : i32 to vector<1x256xi32>
    %73 = arith.cmpi sge, %11, %72 : vector<1x256xi32>
    %c14_i32_19 = arith.constant 14 : i32
    %74 = vector.broadcast %c14_i32_19 : i32 to vector<1x256xi32>
    %75 = arith.cmpi slt, %11, %74 : vector<1x256xi32>
    %76 = arith.andi %73, %75 : vector<1x256xi1>
    %c-3_i32_20 = arith.constant -3 : i32
    %77 = vector.broadcast %c-3_i32_20 : i32 to vector<1x256xi32>
    %78 = arith.cmpi sge, %11, %77 : vector<1x256xi32>
    %c13_i32_21 = arith.constant 13 : i32
    %79 = vector.broadcast %c13_i32_21 : i32 to vector<1x256xi32>
    %80 = arith.cmpi slt, %11, %79 : vector<1x256xi32>
    %81 = arith.andi %78, %80 : vector<1x256xi1>
    %cst_22 = arith.constant 0.000000e+00 : f32
    %82 = vector.broadcast %cst_22 : f32 to vector<1x256xf32>
    %cst_23 = arith.constant 0.000000e+00 : f32
    %83 = vector.broadcast %cst_23 : f32 to vector<1x256xf32>
    %c48_i32 = arith.constant 48 : i32
    %84 = tpu.dynamic_rotate %8 by %c48_i32 dim 1 : vector<1x256xf32>, i32 -> vector<1x256xf32>
    %cst_24 = arith.constant 0.000000e+00 : f32
    %85 = vector.broadcast %cst_24 : f32 to vector<1x256xf32>
    %86 = arith.select %16, %84, %85 : vector<1x256xi1>, vector<1x256xf32>
    %c3_i32_25 = arith.constant 3 : i32
    %87 = tpu.dynamic_rotate %86 by %c3_i32_25 dim 1 : vector<1x256xf32>, i32 -> vector<1x256xf32>
    %c0_26 = arith.constant 0 : index
    %88 = memref.load %arg1[%c0_26] : memref<98xf32, #tpu.memory_space<smem>>
    %cst_27 = arith.constant 0.000000e+00 : f32
    %89 = vector.broadcast %cst_27 : f32 to vector<1x256xf32>
    %90 = arith.select %51, %87, %89 : vector<1x256xi1>, vector<1x256xf32>
    %91 = vector.broadcast %88 : f32 to vector<1x256xf32>
    %92 = arith.mulf %91, %90 : vector<1x256xf32>
    %93 = arith.addf %82, %92 : vector<1x256xf32>
    %c2_i32_28 = arith.constant 2 : i32
    %94 = tpu.dynamic_rotate %86 by %c2_i32_28 dim 1 : vector<1x256xf32>, i32 -> vector<1x256xf32>
    %c1 = arith.constant 1 : index
    %95 = memref.load %arg1[%c1] : memref<98xf32, #tpu.memory_space<smem>>
    %cst_29 = arith.constant 0.000000e+00 : f32
    %96 = vector.broadcast %cst_29 : f32 to vector<1x256xf32>
    %97 = arith.select %56, %94, %96 : vector<1x256xi1>, vector<1x256xf32>
    %98 = vector.broadcast %95 : f32 to vector<1x256xf32>
    %99 = arith.mulf %98, %97 : vector<1x256xf32>
    %100 = arith.addf %83, %99 : vector<1x256xf32>
    %c1_i32_30 = arith.constant 1 : i32
    %101 = tpu.dynamic_rotate %86 by %c1_i32_30 dim 1 : vector<1x256xf32>, i32 -> vector<1x256xf32>
    %c2 = arith.constant 2 : index
    %102 = memref.load %arg1[%c2] : memref<98xf32, #tpu.memory_space<smem>>
    %cst_31 = arith.constant 0.000000e+00 : f32
    %103 = vector.broadcast %cst_31 : f32 to vector<1x256xf32>
    %104 = arith.select %61, %101, %103 : vector<1x256xi1>, vector<1x256xf32>
    %105 = vector.broadcast %102 : f32 to vector<1x256xf32>
    %106 = arith.mulf %105, %104 : vector<1x256xf32>
    %107 = arith.addf %93, %106 : vector<1x256xf32>
    %c3 = arith.constant 3 : index
    %108 = memref.load %arg1[%c3] : memref<98xf32, #tpu.memory_space<smem>>
    %cst_32 = arith.constant 0.000000e+00 : f32
    %109 = vector.broadcast %cst_32 : f32 to vector<1x256xf32>
    %110 = arith.select %66, %86, %109 : vector<1x256xi1>, vector<1x256xf32>
    %111 = vector.broadcast %108 : f32 to vector<1x256xf32>
    %112 = arith.mulf %111, %110 : vector<1x256xf32>
    %113 = arith.addf %100, %112 : vector<1x256xf32>
    %c255_i32 = arith.constant 255 : i32
    %114 = tpu.dynamic_rotate %86 by %c255_i32 dim 1 : vector<1x256xf32>, i32 -> vector<1x256xf32>
    %c4 = arith.constant 4 : index
    %115 = memref.load %arg1[%c4] : memref<98xf32, #tpu.memory_space<smem>>
    %cst_33 = arith.constant 0.000000e+00 : f32
    %116 = vector.broadcast %cst_33 : f32 to vector<1x256xf32>
    %117 = arith.select %71, %114, %116 : vector<1x256xi1>, vector<1x256xf32>
    %118 = vector.broadcast %115 : f32 to vector<1x256xf32>
    %119 = arith.mulf %118, %117 : vector<1x256xf32>
    %120 = arith.addf %107, %119 : vector<1x256xf32>
    %c254_i32 = arith.constant 254 : i32
    %121 = tpu.dynamic_rotate %86 by %c254_i32 dim 1 : vector<1x256xf32>, i32 -> vector<1x256xf32>
    %c5 = arith.constant 5 : index
    %122 = memref.load %arg1[%c5] : memref<98xf32, #tpu.memory_space<smem>>
    %cst_34 = arith.constant 0.000000e+00 : f32
    %123 = vector.broadcast %cst_34 : f32 to vector<1x256xf32>
    %124 = arith.select %76, %121, %123 : vector<1x256xi1>, vector<1x256xf32>
    %125 = vector.broadcast %122 : f32 to vector<1x256xf32>
    %126 = arith.mulf %125, %124 : vector<1x256xf32>
    %127 = arith.addf %113, %126 : vector<1x256xf32>
    %c253_i32 = arith.constant 253 : i32
    %128 = tpu.dynamic_rotate %86 by %c253_i32 dim 1 : vector<1x256xf32>, i32 -> vector<1x256xf32>
    %c6 = arith.constant 6 : index
    %129 = memref.load %arg1[%c6] : memref<98xf32, #tpu.memory_space<smem>>
    %cst_35 = arith.constant 0.000000e+00 : f32
    %130 = vector.broadcast %cst_35 : f32 to vector<1x256xf32>
    %131 = arith.select %81, %128, %130 : vector<1x256xi1>, vector<1x256xf32>
    %132 = vector.broadcast %129 : f32 to vector<1x256xf32>
    %133 = arith.mulf %132, %131 : vector<1x256xf32>
    %134 = arith.addf %120, %133 : vector<1x256xf32>
    %c32_i32 = arith.constant 32 : i32
    %135 = tpu.dynamic_rotate %8 by %c32_i32 dim 1 : vector<1x256xf32>, i32 -> vector<1x256xf32>
    %cst_36 = arith.constant 0.000000e+00 : f32
    %136 = vector.broadcast %cst_36 : f32 to vector<1x256xf32>
    %137 = arith.select %21, %135, %136 : vector<1x256xi1>, vector<1x256xf32>
    %c3_i32_37 = arith.constant 3 : i32
    %138 = tpu.dynamic_rotate %137 by %c3_i32_37 dim 1 : vector<1x256xf32>, i32 -> vector<1x256xf32>
    %c7 = arith.constant 7 : index
    %139 = memref.load %arg1[%c7] : memref<98xf32, #tpu.memory_space<smem>>
    %cst_38 = arith.constant 0.000000e+00 : f32
    %140 = vector.broadcast %cst_38 : f32 to vector<1x256xf32>
    %141 = arith.select %51, %138, %140 : vector<1x256xi1>, vector<1x256xf32>
    %142 = vector.broadcast %139 : f32 to vector<1x256xf32>
    %143 = arith.mulf %142, %141 : vector<1x256xf32>
    %144 = arith.addf %127, %143 : vector<1x256xf32>
    %c2_i32_39 = arith.constant 2 : i32
    %145 = tpu.dynamic_rotate %137 by %c2_i32_39 dim 1 : vector<1x256xf32>, i32 -> vector<1x256xf32>
    %c8 = arith.constant 8 : index
    %146 = memref.load %arg1[%c8] : memref<98xf32, #tpu.memory_space<smem>>
    %cst_40 = arith.constant 0.000000e+00 : f32
    %147 = vector.broadcast %cst_40 : f32 to vector<1x256xf32>
    %148 = arith.select %56, %145, %147 : vector<1x256xi1>, vector<1x256xf32>
    %149 = vector.broadcast %146 : f32 to vector<1x256xf32>
    %150 = arith.mulf %149, %148 : vector<1x256xf32>
    %151 = arith.addf %134, %150 : vector<1x256xf32>
    %c1_i32_41 = arith.constant 1 : i32
    %152 = tpu.dynamic_rotate %137 by %c1_i32_41 dim 1 : vector<1x256xf32>, i32 -> vector<1x256xf32>
    %c9 = arith.constant 9 : index
    %153 = memref.load %arg1[%c9] : memref<98xf32, #tpu.memory_space<smem>>
    %cst_42 = arith.constant 0.000000e+00 : f32
    %154 = vector.broadcast %cst_42 : f32 to vector<1x256xf32>
    %155 = arith.select %61, %152, %154 : vector<1x256xi1>, vector<1x256xf32>
    %156 = vector.broadcast %153 : f32 to vector<1x256xf32>
    %157 = arith.mulf %156, %155 : vector<1x256xf32>
    %158 = arith.addf %144, %157 : vector<1x256xf32>
    %c10 = arith.constant 10 : index
    %159 = memref.load %arg1[%c10] : memref<98xf32, #tpu.memory_space<smem>>
    %cst_43 = arith.constant 0.000000e+00 : f32
    %160 = vector.broadcast %cst_43 : f32 to vector<1x256xf32>
    %161 = arith.select %66, %137, %160 : vector<1x256xi1>, vector<1x256xf32>
    %162 = vector.broadcast %159 : f32 to vector<1x256xf32>
    %163 = arith.mulf %162, %161 : vector<1x256xf32>
    %164 = arith.addf %151, %163 : vector<1x256xf32>
    %c255_i32_44 = arith.constant 255 : i32
    %165 = tpu.dynamic_rotate %137 by %c255_i32_44 dim 1 : vector<1x256xf32>, i32 -> vector<1x256xf32>
    %c11 = arith.constant 11 : index
    %166 = memref.load %arg1[%c11] : memref<98xf32, #tpu.memory_space<smem>>
    %cst_45 = arith.constant 0.000000e+00 : f32
    %167 = vector.broadcast %cst_45 : f32 to vector<1x256xf32>
    %168 = arith.select %71, %165, %167 : vector<1x256xi1>, vector<1x256xf32>
    %169 = vector.broadcast %166 : f32 to vector<1x256xf32>
    %170 = arith.mulf %169, %168 : vector<1x256xf32>
    %171 = arith.addf %158, %170 : vector<1x256xf32>
    %c254_i32_46 = arith.constant 254 : i32
    %172 = tpu.dynamic_rotate %137 by %c254_i32_46 dim 1 : vector<1x256xf32>, i32 -> vector<1x256xf32>
    %c12 = arith.constant 12 : index
    %173 = memref.load %arg1[%c12] : memref<98xf32, #tpu.memory_space<smem>>
    %cst_47 = arith.constant 0.000000e+00 : f32
    %174 = vector.broadcast %cst_47 : f32 to vector<1x256xf32>
    %175 = arith.select %76, %172, %174 : vector<1x256xi1>, vector<1x256xf32>
    %176 = vector.broadcast %173 : f32 to vector<1x256xf32>
    %177 = arith.mulf %176, %175 : vector<1x256xf32>
    %178 = arith.addf %164, %177 : vector<1x256xf32>
    %c253_i32_48 = arith.constant 253 : i32
    %179 = tpu.dynamic_rotate %137 by %c253_i32_48 dim 1 : vector<1x256xf32>, i32 -> vector<1x256xf32>
    %c13 = arith.constant 13 : index
    %180 = memref.load %arg1[%c13] : memref<98xf32, #tpu.memory_space<smem>>
    %cst_49 = arith.constant 0.000000e+00 : f32
    %181 = vector.broadcast %cst_49 : f32 to vector<1x256xf32>
    %182 = arith.select %81, %179, %181 : vector<1x256xi1>, vector<1x256xf32>
    %183 = vector.broadcast %180 : f32 to vector<1x256xf32>
    %184 = arith.mulf %183, %182 : vector<1x256xf32>
    %185 = arith.addf %171, %184 : vector<1x256xf32>
    %c16_i32_50 = arith.constant 16 : i32
    %186 = tpu.dynamic_rotate %8 by %c16_i32_50 dim 1 : vector<1x256xf32>, i32 -> vector<1x256xf32>
    %cst_51 = arith.constant 0.000000e+00 : f32
    %187 = vector.broadcast %cst_51 : f32 to vector<1x256xf32>
    %188 = arith.select %26, %186, %187 : vector<1x256xi1>, vector<1x256xf32>
    %c3_i32_52 = arith.constant 3 : i32
    %189 = tpu.dynamic_rotate %188 by %c3_i32_52 dim 1 : vector<1x256xf32>, i32 -> vector<1x256xf32>
    %c14 = arith.constant 14 : index
    %190 = memref.load %arg1[%c14] : memref<98xf32, #tpu.memory_space<smem>>
    %cst_53 = arith.constant 0.000000e+00 : f32
    %191 = vector.broadcast %cst_53 : f32 to vector<1x256xf32>
    %192 = arith.select %51, %189, %191 : vector<1x256xi1>, vector<1x256xf32>
    %193 = vector.broadcast %190 : f32 to vector<1x256xf32>
    %194 = arith.mulf %193, %192 : vector<1x256xf32>
    %195 = arith.addf %178, %194 : vector<1x256xf32>
    %c2_i32_54 = arith.constant 2 : i32
    %196 = tpu.dynamic_rotate %188 by %c2_i32_54 dim 1 : vector<1x256xf32>, i32 -> vector<1x256xf32>
    %c15 = arith.constant 15 : index
    %197 = memref.load %arg1[%c15] : memref<98xf32, #tpu.memory_space<smem>>
    %cst_55 = arith.constant 0.000000e+00 : f32
    %198 = vector.broadcast %cst_55 : f32 to vector<1x256xf32>
    %199 = arith.select %56, %196, %198 : vector<1x256xi1>, vector<1x256xf32>
    %200 = vector.broadcast %197 : f32 to vector<1x256xf32>
    %201 = arith.mulf %200, %199 : vector<1x256xf32>
    %202 = arith.addf %185, %201 : vector<1x256xf32>
    %c1_i32_56 = arith.constant 1 : i32
    %203 = tpu.dynamic_rotate %188 by %c1_i32_56 dim 1 : vector<1x256xf32>, i32 -> vector<1x256xf32>
    %c16 = arith.constant 16 : index
    %204 = memref.load %arg1[%c16] : memref<98xf32, #tpu.memory_space<smem>>
    %cst_57 = arith.constant 0.000000e+00 : f32
    %205 = vector.broadcast %cst_57 : f32 to vector<1x256xf32>
    %206 = arith.select %61, %203, %205 : vector<1x256xi1>, vector<1x256xf32>
    %207 = vector.broadcast %204 : f32 to vector<1x256xf32>
    %208 = arith.mulf %207, %206 : vector<1x256xf32>
    %209 = arith.addf %195, %208 : vector<1x256xf32>
    %c17 = arith.constant 17 : index
    %210 = memref.load %arg1[%c17] : memref<98xf32, #tpu.memory_space<smem>>
    %cst_58 = arith.constant 0.000000e+00 : f32
    %211 = vector.broadcast %cst_58 : f32 to vector<1x256xf32>
    %212 = arith.select %66, %188, %211 : vector<1x256xi1>, vector<1x256xf32>
    %213 = vector.broadcast %210 : f32 to vector<1x256xf32>
    %214 = arith.mulf %213, %212 : vector<1x256xf32>
    %215 = arith.addf %202, %214 : vector<1x256xf32>
    %c255_i32_59 = arith.constant 255 : i32
    %216 = tpu.dynamic_rotate %188 by %c255_i32_59 dim 1 : vector<1x256xf32>, i32 -> vector<1x256xf32>
    %c18 = arith.constant 18 : index
    %217 = memref.load %arg1[%c18] : memref<98xf32, #tpu.memory_space<smem>>
    %cst_60 = arith.constant 0.000000e+00 : f32
    %218 = vector.broadcast %cst_60 : f32 to vector<1x256xf32>
    %219 = arith.select %71, %216, %218 : vector<1x256xi1>, vector<1x256xf32>
    %220 = vector.broadcast %217 : f32 to vector<1x256xf32>
    %221 = arith.mulf %220, %219 : vector<1x256xf32>
    %222 = arith.addf %209, %221 : vector<1x256xf32>
    %c254_i32_61 = arith.constant 254 : i32
    %223 = tpu.dynamic_rotate %188 by %c254_i32_61 dim 1 : vector<1x256xf32>, i32 -> vector<1x256xf32>
    %c19 = arith.constant 19 : index
    %224 = memref.load %arg1[%c19] : memref<98xf32, #tpu.memory_space<smem>>
    %cst_62 = arith.constant 0.000000e+00 : f32
    %225 = vector.broadcast %cst_62 : f32 to vector<1x256xf32>
    %226 = arith.select %76, %223, %225 : vector<1x256xi1>, vector<1x256xf32>
    %227 = vector.broadcast %224 : f32 to vector<1x256xf32>
    %228 = arith.mulf %227, %226 : vector<1x256xf32>
    %229 = arith.addf %215, %228 : vector<1x256xf32>
    %c253_i32_63 = arith.constant 253 : i32
    %230 = tpu.dynamic_rotate %188 by %c253_i32_63 dim 1 : vector<1x256xf32>, i32 -> vector<1x256xf32>
    %c20 = arith.constant 20 : index
    %231 = memref.load %arg1[%c20] : memref<98xf32, #tpu.memory_space<smem>>
    %cst_64 = arith.constant 0.000000e+00 : f32
    %232 = vector.broadcast %cst_64 : f32 to vector<1x256xf32>
    %233 = arith.select %81, %230, %232 : vector<1x256xi1>, vector<1x256xf32>
    %234 = vector.broadcast %231 : f32 to vector<1x256xf32>
    %235 = arith.mulf %234, %233 : vector<1x256xf32>
    %236 = arith.addf %222, %235 : vector<1x256xf32>
    %cst_65 = arith.constant 0.000000e+00 : f32
    %237 = vector.broadcast %cst_65 : f32 to vector<1x256xf32>
    %238 = arith.select %31, %8, %237 : vector<1x256xi1>, vector<1x256xf32>
    %c3_i32_66 = arith.constant 3 : i32
    %239 = tpu.dynamic_rotate %238 by %c3_i32_66 dim 1 : vector<1x256xf32>, i32 -> vector<1x256xf32>
    %c21 = arith.constant 21 : index
    %240 = memref.load %arg1[%c21] : memref<98xf32, #tpu.memory_space<smem>>
    %cst_67 = arith.constant 0.000000e+00 : f32
    %241 = vector.broadcast %cst_67 : f32 to vector<1x256xf32>
    %242 = arith.select %51, %239, %241 : vector<1x256xi1>, vector<1x256xf32>
    %243 = vector.broadcast %240 : f32 to vector<1x256xf32>
    %244 = arith.mulf %243, %242 : vector<1x256xf32>
    %245 = arith.addf %229, %244 : vector<1x256xf32>
    %c2_i32_68 = arith.constant 2 : i32
    %246 = tpu.dynamic_rotate %238 by %c2_i32_68 dim 1 : vector<1x256xf32>, i32 -> vector<1x256xf32>
    %c22 = arith.constant 22 : index
    %247 = memref.load %arg1[%c22] : memref<98xf32, #tpu.memory_space<smem>>
    %cst_69 = arith.constant 0.000000e+00 : f32
    %248 = vector.broadcast %cst_69 : f32 to vector<1x256xf32>
    %249 = arith.select %56, %246, %248 : vector<1x256xi1>, vector<1x256xf32>
    %250 = vector.broadcast %247 : f32 to vector<1x256xf32>
    %251 = arith.mulf %250, %249 : vector<1x256xf32>
    %252 = arith.addf %236, %251 : vector<1x256xf32>
    %c1_i32_70 = arith.constant 1 : i32
    %253 = tpu.dynamic_rotate %238 by %c1_i32_70 dim 1 : vector<1x256xf32>, i32 -> vector<1x256xf32>
    %c23 = arith.constant 23 : index
    %254 = memref.load %arg1[%c23] : memref<98xf32, #tpu.memory_space<smem>>
    %cst_71 = arith.constant 0.000000e+00 : f32
    %255 = vector.broadcast %cst_71 : f32 to vector<1x256xf32>
    %256 = arith.select %61, %253, %255 : vector<1x256xi1>, vector<1x256xf32>
    %257 = vector.broadcast %254 : f32 to vector<1x256xf32>
    %258 = arith.mulf %257, %256 : vector<1x256xf32>
    %259 = arith.addf %245, %258 : vector<1x256xf32>
    %c24 = arith.constant 24 : index
    %260 = memref.load %arg1[%c24] : memref<98xf32, #tpu.memory_space<smem>>
    %cst_72 = arith.constant 0.000000e+00 : f32
    %261 = vector.broadcast %cst_72 : f32 to vector<1x256xf32>
    %262 = arith.select %66, %238, %261 : vector<1x256xi1>, vector<1x256xf32>
    %263 = vector.broadcast %260 : f32 to vector<1x256xf32>
    %264 = arith.mulf %263, %262 : vector<1x256xf32>
    %265 = arith.addf %252, %264 : vector<1x256xf32>
    %c255_i32_73 = arith.constant 255 : i32
    %266 = tpu.dynamic_rotate %238 by %c255_i32_73 dim 1 : vector<1x256xf32>, i32 -> vector<1x256xf32>
    %c25 = arith.constant 25 : index
    %267 = memref.load %arg1[%c25] : memref<98xf32, #tpu.memory_space<smem>>
    %cst_74 = arith.constant 0.000000e+00 : f32
    %268 = vector.broadcast %cst_74 : f32 to vector<1x256xf32>
    %269 = arith.select %71, %266, %268 : vector<1x256xi1>, vector<1x256xf32>
    %270 = vector.broadcast %267 : f32 to vector<1x256xf32>
    %271 = arith.mulf %270, %269 : vector<1x256xf32>
    %272 = arith.addf %259, %271 : vector<1x256xf32>
    %c254_i32_75 = arith.constant 254 : i32
    %273 = tpu.dynamic_rotate %238 by %c254_i32_75 dim 1 : vector<1x256xf32>, i32 -> vector<1x256xf32>
    %c26 = arith.constant 26 : index
    %274 = memref.load %arg1[%c26] : memref<98xf32, #tpu.memory_space<smem>>
    %cst_76 = arith.constant 0.000000e+00 : f32
    %275 = vector.broadcast %cst_76 : f32 to vector<1x256xf32>
    %276 = arith.select %76, %273, %275 : vector<1x256xi1>, vector<1x256xf32>
    %277 = vector.broadcast %274 : f32 to vector<1x256xf32>
    %278 = arith.mulf %277, %276 : vector<1x256xf32>
    %279 = arith.addf %265, %278 : vector<1x256xf32>
    %c253_i32_77 = arith.constant 253 : i32
    %280 = tpu.dynamic_rotate %238 by %c253_i32_77 dim 1 : vector<1x256xf32>, i32 -> vector<1x256xf32>
    %c27 = arith.constant 27 : index
    %281 = memref.load %arg1[%c27] : memref<98xf32, #tpu.memory_space<smem>>
    %cst_78 = arith.constant 0.000000e+00 : f32
    %282 = vector.broadcast %cst_78 : f32 to vector<1x256xf32>
    %283 = arith.select %81, %280, %282 : vector<1x256xi1>, vector<1x256xf32>
    %284 = vector.broadcast %281 : f32 to vector<1x256xf32>
    %285 = arith.mulf %284, %283 : vector<1x256xf32>
    %286 = arith.addf %272, %285 : vector<1x256xf32>
    %c240_i32 = arith.constant 240 : i32
    %287 = tpu.dynamic_rotate %8 by %c240_i32 dim 1 : vector<1x256xf32>, i32 -> vector<1x256xf32>
    %cst_79 = arith.constant 0.000000e+00 : f32
    %288 = vector.broadcast %cst_79 : f32 to vector<1x256xf32>
    %289 = arith.select %36, %287, %288 : vector<1x256xi1>, vector<1x256xf32>
    %c3_i32_80 = arith.constant 3 : i32
    %290 = tpu.dynamic_rotate %289 by %c3_i32_80 dim 1 : vector<1x256xf32>, i32 -> vector<1x256xf32>
    %c28 = arith.constant 28 : index
    %291 = memref.load %arg1[%c28] : memref<98xf32, #tpu.memory_space<smem>>
    %cst_81 = arith.constant 0.000000e+00 : f32
    %292 = vector.broadcast %cst_81 : f32 to vector<1x256xf32>
    %293 = arith.select %51, %290, %292 : vector<1x256xi1>, vector<1x256xf32>
    %294 = vector.broadcast %291 : f32 to vector<1x256xf32>
    %295 = arith.mulf %294, %293 : vector<1x256xf32>
    %296 = arith.addf %279, %295 : vector<1x256xf32>
    %c2_i32_82 = arith.constant 2 : i32
    %297 = tpu.dynamic_rotate %289 by %c2_i32_82 dim 1 : vector<1x256xf32>, i32 -> vector<1x256xf32>
    %c29 = arith.constant 29 : index
    %298 = memref.load %arg1[%c29] : memref<98xf32, #tpu.memory_space<smem>>
    %cst_83 = arith.constant 0.000000e+00 : f32
    %299 = vector.broadcast %cst_83 : f32 to vector<1x256xf32>
    %300 = arith.select %56, %297, %299 : vector<1x256xi1>, vector<1x256xf32>
    %301 = vector.broadcast %298 : f32 to vector<1x256xf32>
    %302 = arith.mulf %301, %300 : vector<1x256xf32>
    %303 = arith.addf %286, %302 : vector<1x256xf32>
    %c1_i32_84 = arith.constant 1 : i32
    %304 = tpu.dynamic_rotate %289 by %c1_i32_84 dim 1 : vector<1x256xf32>, i32 -> vector<1x256xf32>
    %c30 = arith.constant 30 : index
    %305 = memref.load %arg1[%c30] : memref<98xf32, #tpu.memory_space<smem>>
    %cst_85 = arith.constant 0.000000e+00 : f32
    %306 = vector.broadcast %cst_85 : f32 to vector<1x256xf32>
    %307 = arith.select %61, %304, %306 : vector<1x256xi1>, vector<1x256xf32>
    %308 = vector.broadcast %305 : f32 to vector<1x256xf32>
    %309 = arith.mulf %308, %307 : vector<1x256xf32>
    %310 = arith.addf %296, %309 : vector<1x256xf32>
    %c31 = arith.constant 31 : index
    %311 = memref.load %arg1[%c31] : memref<98xf32, #tpu.memory_space<smem>>
    %cst_86 = arith.constant 0.000000e+00 : f32
    %312 = vector.broadcast %cst_86 : f32 to vector<1x256xf32>
    %313 = arith.select %66, %289, %312 : vector<1x256xi1>, vector<1x256xf32>
    %314 = vector.broadcast %311 : f32 to vector<1x256xf32>
    %315 = arith.mulf %314, %313 : vector<1x256xf32>
    %316 = arith.addf %303, %315 : vector<1x256xf32>
    %c255_i32_87 = arith.constant 255 : i32
    %317 = tpu.dynamic_rotate %289 by %c255_i32_87 dim 1 : vector<1x256xf32>, i32 -> vector<1x256xf32>
    %c32 = arith.constant 32 : index
    %318 = memref.load %arg1[%c32] : memref<98xf32, #tpu.memory_space<smem>>
    %cst_88 = arith.constant 0.000000e+00 : f32
    %319 = vector.broadcast %cst_88 : f32 to vector<1x256xf32>
    %320 = arith.select %71, %317, %319 : vector<1x256xi1>, vector<1x256xf32>
    %321 = vector.broadcast %318 : f32 to vector<1x256xf32>
    %322 = arith.mulf %321, %320 : vector<1x256xf32>
    %323 = arith.addf %310, %322 : vector<1x256xf32>
    %c254_i32_89 = arith.constant 254 : i32
    %324 = tpu.dynamic_rotate %289 by %c254_i32_89 dim 1 : vector<1x256xf32>, i32 -> vector<1x256xf32>
    %c33 = arith.constant 33 : index
    %325 = memref.load %arg1[%c33] : memref<98xf32, #tpu.memory_space<smem>>
    %cst_90 = arith.constant 0.000000e+00 : f32
    %326 = vector.broadcast %cst_90 : f32 to vector<1x256xf32>
    %327 = arith.select %76, %324, %326 : vector<1x256xi1>, vector<1x256xf32>
    %328 = vector.broadcast %325 : f32 to vector<1x256xf32>
    %329 = arith.mulf %328, %327 : vector<1x256xf32>
    %330 = arith.addf %316, %329 : vector<1x256xf32>
    %c253_i32_91 = arith.constant 253 : i32
    %331 = tpu.dynamic_rotate %289 by %c253_i32_91 dim 1 : vector<1x256xf32>, i32 -> vector<1x256xf32>
    %c34 = arith.constant 34 : index
    %332 = memref.load %arg1[%c34] : memref<98xf32, #tpu.memory_space<smem>>
    %cst_92 = arith.constant 0.000000e+00 : f32
    %333 = vector.broadcast %cst_92 : f32 to vector<1x256xf32>
    %334 = arith.select %81, %331, %333 : vector<1x256xi1>, vector<1x256xf32>
    %335 = vector.broadcast %332 : f32 to vector<1x256xf32>
    %336 = arith.mulf %335, %334 : vector<1x256xf32>
    %337 = arith.addf %323, %336 : vector<1x256xf32>
    %c224_i32 = arith.constant 224 : i32
    %338 = tpu.dynamic_rotate %8 by %c224_i32 dim 1 : vector<1x256xf32>, i32 -> vector<1x256xf32>
    %cst_93 = arith.constant 0.000000e+00 : f32
    %339 = vector.broadcast %cst_93 : f32 to vector<1x256xf32>
    %340 = arith.select %41, %338, %339 : vector<1x256xi1>, vector<1x256xf32>
    %c3_i32_94 = arith.constant 3 : i32
    %341 = tpu.dynamic_rotate %340 by %c3_i32_94 dim 1 : vector<1x256xf32>, i32 -> vector<1x256xf32>
    %c35 = arith.constant 35 : index
    %342 = memref.load %arg1[%c35] : memref<98xf32, #tpu.memory_space<smem>>
    %cst_95 = arith.constant 0.000000e+00 : f32
    %343 = vector.broadcast %cst_95 : f32 to vector<1x256xf32>
    %344 = arith.select %51, %341, %343 : vector<1x256xi1>, vector<1x256xf32>
    %345 = vector.broadcast %342 : f32 to vector<1x256xf32>
    %346 = arith.mulf %345, %344 : vector<1x256xf32>
    %347 = arith.addf %330, %346 : vector<1x256xf32>
    %c2_i32_96 = arith.constant 2 : i32
    %348 = tpu.dynamic_rotate %340 by %c2_i32_96 dim 1 : vector<1x256xf32>, i32 -> vector<1x256xf32>
    %c36 = arith.constant 36 : index
    %349 = memref.load %arg1[%c36] : memref<98xf32, #tpu.memory_space<smem>>
    %cst_97 = arith.constant 0.000000e+00 : f32
    %350 = vector.broadcast %cst_97 : f32 to vector<1x256xf32>
    %351 = arith.select %56, %348, %350 : vector<1x256xi1>, vector<1x256xf32>
    %352 = vector.broadcast %349 : f32 to vector<1x256xf32>
    %353 = arith.mulf %352, %351 : vector<1x256xf32>
    %354 = arith.addf %337, %353 : vector<1x256xf32>
    %c1_i32_98 = arith.constant 1 : i32
    %355 = tpu.dynamic_rotate %340 by %c1_i32_98 dim 1 : vector<1x256xf32>, i32 -> vector<1x256xf32>
    %c37 = arith.constant 37 : index
    %356 = memref.load %arg1[%c37] : memref<98xf32, #tpu.memory_space<smem>>
    %cst_99 = arith.constant 0.000000e+00 : f32
    %357 = vector.broadcast %cst_99 : f32 to vector<1x256xf32>
    %358 = arith.select %61, %355, %357 : vector<1x256xi1>, vector<1x256xf32>
    %359 = vector.broadcast %356 : f32 to vector<1x256xf32>
    %360 = arith.mulf %359, %358 : vector<1x256xf32>
    %361 = arith.addf %347, %360 : vector<1x256xf32>
    %c38 = arith.constant 38 : index
    %362 = memref.load %arg1[%c38] : memref<98xf32, #tpu.memory_space<smem>>
    %cst_100 = arith.constant 0.000000e+00 : f32
    %363 = vector.broadcast %cst_100 : f32 to vector<1x256xf32>
    %364 = arith.select %66, %340, %363 : vector<1x256xi1>, vector<1x256xf32>
    %365 = vector.broadcast %362 : f32 to vector<1x256xf32>
    %366 = arith.mulf %365, %364 : vector<1x256xf32>
    %367 = arith.addf %354, %366 : vector<1x256xf32>
    %c255_i32_101 = arith.constant 255 : i32
    %368 = tpu.dynamic_rotate %340 by %c255_i32_101 dim 1 : vector<1x256xf32>, i32 -> vector<1x256xf32>
    %c39 = arith.constant 39 : index
    %369 = memref.load %arg1[%c39] : memref<98xf32, #tpu.memory_space<smem>>
    %cst_102 = arith.constant 0.000000e+00 : f32
    %370 = vector.broadcast %cst_102 : f32 to vector<1x256xf32>
    %371 = arith.select %71, %368, %370 : vector<1x256xi1>, vector<1x256xf32>
    %372 = vector.broadcast %369 : f32 to vector<1x256xf32>
    %373 = arith.mulf %372, %371 : vector<1x256xf32>
    %374 = arith.addf %361, %373 : vector<1x256xf32>
    %c254_i32_103 = arith.constant 254 : i32
    %375 = tpu.dynamic_rotate %340 by %c254_i32_103 dim 1 : vector<1x256xf32>, i32 -> vector<1x256xf32>
    %c40 = arith.constant 40 : index
    %376 = memref.load %arg1[%c40] : memref<98xf32, #tpu.memory_space<smem>>
    %cst_104 = arith.constant 0.000000e+00 : f32
    %377 = vector.broadcast %cst_104 : f32 to vector<1x256xf32>
    %378 = arith.select %76, %375, %377 : vector<1x256xi1>, vector<1x256xf32>
    %379 = vector.broadcast %376 : f32 to vector<1x256xf32>
    %380 = arith.mulf %379, %378 : vector<1x256xf32>
    %381 = arith.addf %367, %380 : vector<1x256xf32>
    %c253_i32_105 = arith.constant 253 : i32
    %382 = tpu.dynamic_rotate %340 by %c253_i32_105 dim 1 : vector<1x256xf32>, i32 -> vector<1x256xf32>
    %c41 = arith.constant 41 : index
    %383 = memref.load %arg1[%c41] : memref<98xf32, #tpu.memory_space<smem>>
    %cst_106 = arith.constant 0.000000e+00 : f32
    %384 = vector.broadcast %cst_106 : f32 to vector<1x256xf32>
    %385 = arith.select %81, %382, %384 : vector<1x256xi1>, vector<1x256xf32>
    %386 = vector.broadcast %383 : f32 to vector<1x256xf32>
    %387 = arith.mulf %386, %385 : vector<1x256xf32>
    %388 = arith.addf %374, %387 : vector<1x256xf32>
    %c208_i32 = arith.constant 208 : i32
    %389 = tpu.dynamic_rotate %8 by %c208_i32 dim 1 : vector<1x256xf32>, i32 -> vector<1x256xf32>
    %cst_107 = arith.constant 0.000000e+00 : f32
    %390 = vector.broadcast %cst_107 : f32 to vector<1x256xf32>
    %391 = arith.select %46, %389, %390 : vector<1x256xi1>, vector<1x256xf32>
    %c3_i32_108 = arith.constant 3 : i32
    %392 = tpu.dynamic_rotate %391 by %c3_i32_108 dim 1 : vector<1x256xf32>, i32 -> vector<1x256xf32>
    %c42 = arith.constant 42 : index
    %393 = memref.load %arg1[%c42] : memref<98xf32, #tpu.memory_space<smem>>
    %cst_109 = arith.constant 0.000000e+00 : f32
    %394 = vector.broadcast %cst_109 : f32 to vector<1x256xf32>
    %395 = arith.select %51, %392, %394 : vector<1x256xi1>, vector<1x256xf32>
    %396 = vector.broadcast %393 : f32 to vector<1x256xf32>
    %397 = arith.mulf %396, %395 : vector<1x256xf32>
    %398 = arith.addf %381, %397 : vector<1x256xf32>
    %c2_i32_110 = arith.constant 2 : i32
    %399 = tpu.dynamic_rotate %391 by %c2_i32_110 dim 1 : vector<1x256xf32>, i32 -> vector<1x256xf32>
    %c43 = arith.constant 43 : index
    %400 = memref.load %arg1[%c43] : memref<98xf32, #tpu.memory_space<smem>>
    %cst_111 = arith.constant 0.000000e+00 : f32
    %401 = vector.broadcast %cst_111 : f32 to vector<1x256xf32>
    %402 = arith.select %56, %399, %401 : vector<1x256xi1>, vector<1x256xf32>
    %403 = vector.broadcast %400 : f32 to vector<1x256xf32>
    %404 = arith.mulf %403, %402 : vector<1x256xf32>
    %405 = arith.addf %388, %404 : vector<1x256xf32>
    %c1_i32_112 = arith.constant 1 : i32
    %406 = tpu.dynamic_rotate %391 by %c1_i32_112 dim 1 : vector<1x256xf32>, i32 -> vector<1x256xf32>
    %c44 = arith.constant 44 : index
    %407 = memref.load %arg1[%c44] : memref<98xf32, #tpu.memory_space<smem>>
    %cst_113 = arith.constant 0.000000e+00 : f32
    %408 = vector.broadcast %cst_113 : f32 to vector<1x256xf32>
    %409 = arith.select %61, %406, %408 : vector<1x256xi1>, vector<1x256xf32>
    %410 = vector.broadcast %407 : f32 to vector<1x256xf32>
    %411 = arith.mulf %410, %409 : vector<1x256xf32>
    %412 = arith.addf %398, %411 : vector<1x256xf32>
    %c45 = arith.constant 45 : index
    %413 = memref.load %arg1[%c45] : memref<98xf32, #tpu.memory_space<smem>>
    %cst_114 = arith.constant 0.000000e+00 : f32
    %414 = vector.broadcast %cst_114 : f32 to vector<1x256xf32>
    %415 = arith.select %66, %391, %414 : vector<1x256xi1>, vector<1x256xf32>
    %416 = vector.broadcast %413 : f32 to vector<1x256xf32>
    %417 = arith.mulf %416, %415 : vector<1x256xf32>
    %418 = arith.addf %405, %417 : vector<1x256xf32>
    %c255_i32_115 = arith.constant 255 : i32
    %419 = tpu.dynamic_rotate %391 by %c255_i32_115 dim 1 : vector<1x256xf32>, i32 -> vector<1x256xf32>
    %c46 = arith.constant 46 : index
    %420 = memref.load %arg1[%c46] : memref<98xf32, #tpu.memory_space<smem>>
    %cst_116 = arith.constant 0.000000e+00 : f32
    %421 = vector.broadcast %cst_116 : f32 to vector<1x256xf32>
    %422 = arith.select %71, %419, %421 : vector<1x256xi1>, vector<1x256xf32>
    %423 = vector.broadcast %420 : f32 to vector<1x256xf32>
    %424 = arith.mulf %423, %422 : vector<1x256xf32>
    %425 = arith.addf %412, %424 : vector<1x256xf32>
    %c254_i32_117 = arith.constant 254 : i32
    %426 = tpu.dynamic_rotate %391 by %c254_i32_117 dim 1 : vector<1x256xf32>, i32 -> vector<1x256xf32>
    %c47 = arith.constant 47 : index
    %427 = memref.load %arg1[%c47] : memref<98xf32, #tpu.memory_space<smem>>
    %cst_118 = arith.constant 0.000000e+00 : f32
    %428 = vector.broadcast %cst_118 : f32 to vector<1x256xf32>
    %429 = arith.select %76, %426, %428 : vector<1x256xi1>, vector<1x256xf32>
    %430 = vector.broadcast %427 : f32 to vector<1x256xf32>
    %431 = arith.mulf %430, %429 : vector<1x256xf32>
    %432 = arith.addf %418, %431 : vector<1x256xf32>
    %c253_i32_119 = arith.constant 253 : i32
    %433 = tpu.dynamic_rotate %391 by %c253_i32_119 dim 1 : vector<1x256xf32>, i32 -> vector<1x256xf32>
    %c48 = arith.constant 48 : index
    %434 = memref.load %arg1[%c48] : memref<98xf32, #tpu.memory_space<smem>>
    %cst_120 = arith.constant 0.000000e+00 : f32
    %435 = vector.broadcast %cst_120 : f32 to vector<1x256xf32>
    %436 = arith.select %81, %433, %435 : vector<1x256xi1>, vector<1x256xf32>
    %437 = vector.broadcast %434 : f32 to vector<1x256xf32>
    %438 = arith.mulf %437, %436 : vector<1x256xf32>
    %439 = arith.addf %425, %438 : vector<1x256xf32>
    %c48_i32_121 = arith.constant 48 : i32
    %440 = tpu.dynamic_rotate %6 by %c48_i32_121 dim 1 : vector<1x256xf32>, i32 -> vector<1x256xf32>
    %cst_122 = arith.constant 0.000000e+00 : f32
    %441 = vector.broadcast %cst_122 : f32 to vector<1x256xf32>
    %442 = arith.select %16, %440, %441 : vector<1x256xi1>, vector<1x256xf32>
    %c3_i32_123 = arith.constant 3 : i32
    %443 = tpu.dynamic_rotate %442 by %c3_i32_123 dim 1 : vector<1x256xf32>, i32 -> vector<1x256xf32>
    %c49 = arith.constant 49 : index
    %444 = memref.load %arg1[%c49] : memref<98xf32, #tpu.memory_space<smem>>
    %cst_124 = arith.constant 0.000000e+00 : f32
    %445 = vector.broadcast %cst_124 : f32 to vector<1x256xf32>
    %446 = arith.select %51, %443, %445 : vector<1x256xi1>, vector<1x256xf32>
    %447 = vector.broadcast %444 : f32 to vector<1x256xf32>
    %448 = arith.mulf %447, %446 : vector<1x256xf32>
    %449 = arith.addf %432, %448 : vector<1x256xf32>
    %c2_i32_125 = arith.constant 2 : i32
    %450 = tpu.dynamic_rotate %442 by %c2_i32_125 dim 1 : vector<1x256xf32>, i32 -> vector<1x256xf32>
    %c50 = arith.constant 50 : index
    %451 = memref.load %arg1[%c50] : memref<98xf32, #tpu.memory_space<smem>>
    %cst_126 = arith.constant 0.000000e+00 : f32
    %452 = vector.broadcast %cst_126 : f32 to vector<1x256xf32>
    %453 = arith.select %56, %450, %452 : vector<1x256xi1>, vector<1x256xf32>
    %454 = vector.broadcast %451 : f32 to vector<1x256xf32>
    %455 = arith.mulf %454, %453 : vector<1x256xf32>
    %456 = arith.addf %439, %455 : vector<1x256xf32>
    %c1_i32_127 = arith.constant 1 : i32
    %457 = tpu.dynamic_rotate %442 by %c1_i32_127 dim 1 : vector<1x256xf32>, i32 -> vector<1x256xf32>
    %c51 = arith.constant 51 : index
    %458 = memref.load %arg1[%c51] : memref<98xf32, #tpu.memory_space<smem>>
    %cst_128 = arith.constant 0.000000e+00 : f32
    %459 = vector.broadcast %cst_128 : f32 to vector<1x256xf32>
    %460 = arith.select %61, %457, %459 : vector<1x256xi1>, vector<1x256xf32>
    %461 = vector.broadcast %458 : f32 to vector<1x256xf32>
    %462 = arith.mulf %461, %460 : vector<1x256xf32>
    %463 = arith.addf %449, %462 : vector<1x256xf32>
    %c52 = arith.constant 52 : index
    %464 = memref.load %arg1[%c52] : memref<98xf32, #tpu.memory_space<smem>>
    %cst_129 = arith.constant 0.000000e+00 : f32
    %465 = vector.broadcast %cst_129 : f32 to vector<1x256xf32>
    %466 = arith.select %66, %442, %465 : vector<1x256xi1>, vector<1x256xf32>
    %467 = vector.broadcast %464 : f32 to vector<1x256xf32>
    %468 = arith.mulf %467, %466 : vector<1x256xf32>
    %469 = arith.addf %456, %468 : vector<1x256xf32>
    %c255_i32_130 = arith.constant 255 : i32
    %470 = tpu.dynamic_rotate %442 by %c255_i32_130 dim 1 : vector<1x256xf32>, i32 -> vector<1x256xf32>
    %c53 = arith.constant 53 : index
    %471 = memref.load %arg1[%c53] : memref<98xf32, #tpu.memory_space<smem>>
    %cst_131 = arith.constant 0.000000e+00 : f32
    %472 = vector.broadcast %cst_131 : f32 to vector<1x256xf32>
    %473 = arith.select %71, %470, %472 : vector<1x256xi1>, vector<1x256xf32>
    %474 = vector.broadcast %471 : f32 to vector<1x256xf32>
    %475 = arith.mulf %474, %473 : vector<1x256xf32>
    %476 = arith.addf %463, %475 : vector<1x256xf32>
    %c254_i32_132 = arith.constant 254 : i32
    %477 = tpu.dynamic_rotate %442 by %c254_i32_132 dim 1 : vector<1x256xf32>, i32 -> vector<1x256xf32>
    %c54 = arith.constant 54 : index
    %478 = memref.load %arg1[%c54] : memref<98xf32, #tpu.memory_space<smem>>
    %cst_133 = arith.constant 0.000000e+00 : f32
    %479 = vector.broadcast %cst_133 : f32 to vector<1x256xf32>
    %480 = arith.select %76, %477, %479 : vector<1x256xi1>, vector<1x256xf32>
    %481 = vector.broadcast %478 : f32 to vector<1x256xf32>
    %482 = arith.mulf %481, %480 : vector<1x256xf32>
    %483 = arith.addf %469, %482 : vector<1x256xf32>
    %c253_i32_134 = arith.constant 253 : i32
    %484 = tpu.dynamic_rotate %442 by %c253_i32_134 dim 1 : vector<1x256xf32>, i32 -> vector<1x256xf32>
    %c55 = arith.constant 55 : index
    %485 = memref.load %arg1[%c55] : memref<98xf32, #tpu.memory_space<smem>>
    %cst_135 = arith.constant 0.000000e+00 : f32
    %486 = vector.broadcast %cst_135 : f32 to vector<1x256xf32>
    %487 = arith.select %81, %484, %486 : vector<1x256xi1>, vector<1x256xf32>
    %488 = vector.broadcast %485 : f32 to vector<1x256xf32>
    %489 = arith.mulf %488, %487 : vector<1x256xf32>
    %490 = arith.addf %476, %489 : vector<1x256xf32>
    %c32_i32_136 = arith.constant 32 : i32
    %491 = tpu.dynamic_rotate %6 by %c32_i32_136 dim 1 : vector<1x256xf32>, i32 -> vector<1x256xf32>
    %cst_137 = arith.constant 0.000000e+00 : f32
    %492 = vector.broadcast %cst_137 : f32 to vector<1x256xf32>
    %493 = arith.select %21, %491, %492 : vector<1x256xi1>, vector<1x256xf32>
    %c3_i32_138 = arith.constant 3 : i32
    %494 = tpu.dynamic_rotate %493 by %c3_i32_138 dim 1 : vector<1x256xf32>, i32 -> vector<1x256xf32>
    %c56 = arith.constant 56 : index
    %495 = memref.load %arg1[%c56] : memref<98xf32, #tpu.memory_space<smem>>
    %cst_139 = arith.constant 0.000000e+00 : f32
    %496 = vector.broadcast %cst_139 : f32 to vector<1x256xf32>
    %497 = arith.select %51, %494, %496 : vector<1x256xi1>, vector<1x256xf32>
    %498 = vector.broadcast %495 : f32 to vector<1x256xf32>
    %499 = arith.mulf %498, %497 : vector<1x256xf32>
    %500 = arith.addf %483, %499 : vector<1x256xf32>
    %c2_i32_140 = arith.constant 2 : i32
    %501 = tpu.dynamic_rotate %493 by %c2_i32_140 dim 1 : vector<1x256xf32>, i32 -> vector<1x256xf32>
    %c57 = arith.constant 57 : index
    %502 = memref.load %arg1[%c57] : memref<98xf32, #tpu.memory_space<smem>>
    %cst_141 = arith.constant 0.000000e+00 : f32
    %503 = vector.broadcast %cst_141 : f32 to vector<1x256xf32>
    %504 = arith.select %56, %501, %503 : vector<1x256xi1>, vector<1x256xf32>
    %505 = vector.broadcast %502 : f32 to vector<1x256xf32>
    %506 = arith.mulf %505, %504 : vector<1x256xf32>
    %507 = arith.addf %490, %506 : vector<1x256xf32>
    %c1_i32_142 = arith.constant 1 : i32
    %508 = tpu.dynamic_rotate %493 by %c1_i32_142 dim 1 : vector<1x256xf32>, i32 -> vector<1x256xf32>
    %c58 = arith.constant 58 : index
    %509 = memref.load %arg1[%c58] : memref<98xf32, #tpu.memory_space<smem>>
    %cst_143 = arith.constant 0.000000e+00 : f32
    %510 = vector.broadcast %cst_143 : f32 to vector<1x256xf32>
    %511 = arith.select %61, %508, %510 : vector<1x256xi1>, vector<1x256xf32>
    %512 = vector.broadcast %509 : f32 to vector<1x256xf32>
    %513 = arith.mulf %512, %511 : vector<1x256xf32>
    %514 = arith.addf %500, %513 : vector<1x256xf32>
    %c59 = arith.constant 59 : index
    %515 = memref.load %arg1[%c59] : memref<98xf32, #tpu.memory_space<smem>>
    %cst_144 = arith.constant 0.000000e+00 : f32
    %516 = vector.broadcast %cst_144 : f32 to vector<1x256xf32>
    %517 = arith.select %66, %493, %516 : vector<1x256xi1>, vector<1x256xf32>
    %518 = vector.broadcast %515 : f32 to vector<1x256xf32>
    %519 = arith.mulf %518, %517 : vector<1x256xf32>
    %520 = arith.addf %507, %519 : vector<1x256xf32>
    %c255_i32_145 = arith.constant 255 : i32
    %521 = tpu.dynamic_rotate %493 by %c255_i32_145 dim 1 : vector<1x256xf32>, i32 -> vector<1x256xf32>
    %c60 = arith.constant 60 : index
    %522 = memref.load %arg1[%c60] : memref<98xf32, #tpu.memory_space<smem>>
    %cst_146 = arith.constant 0.000000e+00 : f32
    %523 = vector.broadcast %cst_146 : f32 to vector<1x256xf32>
    %524 = arith.select %71, %521, %523 : vector<1x256xi1>, vector<1x256xf32>
    %525 = vector.broadcast %522 : f32 to vector<1x256xf32>
    %526 = arith.mulf %525, %524 : vector<1x256xf32>
    %527 = arith.addf %514, %526 : vector<1x256xf32>
    %c254_i32_147 = arith.constant 254 : i32
    %528 = tpu.dynamic_rotate %493 by %c254_i32_147 dim 1 : vector<1x256xf32>, i32 -> vector<1x256xf32>
    %c61 = arith.constant 61 : index
    %529 = memref.load %arg1[%c61] : memref<98xf32, #tpu.memory_space<smem>>
    %cst_148 = arith.constant 0.000000e+00 : f32
    %530 = vector.broadcast %cst_148 : f32 to vector<1x256xf32>
    %531 = arith.select %76, %528, %530 : vector<1x256xi1>, vector<1x256xf32>
    %532 = vector.broadcast %529 : f32 to vector<1x256xf32>
    %533 = arith.mulf %532, %531 : vector<1x256xf32>
    %534 = arith.addf %520, %533 : vector<1x256xf32>
    %c253_i32_149 = arith.constant 253 : i32
    %535 = tpu.dynamic_rotate %493 by %c253_i32_149 dim 1 : vector<1x256xf32>, i32 -> vector<1x256xf32>
    %c62 = arith.constant 62 : index
    %536 = memref.load %arg1[%c62] : memref<98xf32, #tpu.memory_space<smem>>
    %cst_150 = arith.constant 0.000000e+00 : f32
    %537 = vector.broadcast %cst_150 : f32 to vector<1x256xf32>
    %538 = arith.select %81, %535, %537 : vector<1x256xi1>, vector<1x256xf32>
    %539 = vector.broadcast %536 : f32 to vector<1x256xf32>
    %540 = arith.mulf %539, %538 : vector<1x256xf32>
    %541 = arith.addf %527, %540 : vector<1x256xf32>
    %c16_i32_151 = arith.constant 16 : i32
    %542 = tpu.dynamic_rotate %6 by %c16_i32_151 dim 1 : vector<1x256xf32>, i32 -> vector<1x256xf32>
    %cst_152 = arith.constant 0.000000e+00 : f32
    %543 = vector.broadcast %cst_152 : f32 to vector<1x256xf32>
    %544 = arith.select %26, %542, %543 : vector<1x256xi1>, vector<1x256xf32>
    %c3_i32_153 = arith.constant 3 : i32
    %545 = tpu.dynamic_rotate %544 by %c3_i32_153 dim 1 : vector<1x256xf32>, i32 -> vector<1x256xf32>
    %c63 = arith.constant 63 : index
    %546 = memref.load %arg1[%c63] : memref<98xf32, #tpu.memory_space<smem>>
    %cst_154 = arith.constant 0.000000e+00 : f32
    %547 = vector.broadcast %cst_154 : f32 to vector<1x256xf32>
    %548 = arith.select %51, %545, %547 : vector<1x256xi1>, vector<1x256xf32>
    %549 = vector.broadcast %546 : f32 to vector<1x256xf32>
    %550 = arith.mulf %549, %548 : vector<1x256xf32>
    %551 = arith.addf %534, %550 : vector<1x256xf32>
    %c2_i32_155 = arith.constant 2 : i32
    %552 = tpu.dynamic_rotate %544 by %c2_i32_155 dim 1 : vector<1x256xf32>, i32 -> vector<1x256xf32>
    %c64 = arith.constant 64 : index
    %553 = memref.load %arg1[%c64] : memref<98xf32, #tpu.memory_space<smem>>
    %cst_156 = arith.constant 0.000000e+00 : f32
    %554 = vector.broadcast %cst_156 : f32 to vector<1x256xf32>
    %555 = arith.select %56, %552, %554 : vector<1x256xi1>, vector<1x256xf32>
    %556 = vector.broadcast %553 : f32 to vector<1x256xf32>
    %557 = arith.mulf %556, %555 : vector<1x256xf32>
    %558 = arith.addf %541, %557 : vector<1x256xf32>
    %c1_i32_157 = arith.constant 1 : i32
    %559 = tpu.dynamic_rotate %544 by %c1_i32_157 dim 1 : vector<1x256xf32>, i32 -> vector<1x256xf32>
    %c65 = arith.constant 65 : index
    %560 = memref.load %arg1[%c65] : memref<98xf32, #tpu.memory_space<smem>>
    %cst_158 = arith.constant 0.000000e+00 : f32
    %561 = vector.broadcast %cst_158 : f32 to vector<1x256xf32>
    %562 = arith.select %61, %559, %561 : vector<1x256xi1>, vector<1x256xf32>
    %563 = vector.broadcast %560 : f32 to vector<1x256xf32>
    %564 = arith.mulf %563, %562 : vector<1x256xf32>
    %565 = arith.addf %551, %564 : vector<1x256xf32>
    %c66 = arith.constant 66 : index
    %566 = memref.load %arg1[%c66] : memref<98xf32, #tpu.memory_space<smem>>
    %cst_159 = arith.constant 0.000000e+00 : f32
    %567 = vector.broadcast %cst_159 : f32 to vector<1x256xf32>
    %568 = arith.select %66, %544, %567 : vector<1x256xi1>, vector<1x256xf32>
    %569 = vector.broadcast %566 : f32 to vector<1x256xf32>
    %570 = arith.mulf %569, %568 : vector<1x256xf32>
    %571 = arith.addf %558, %570 : vector<1x256xf32>
    %c255_i32_160 = arith.constant 255 : i32
    %572 = tpu.dynamic_rotate %544 by %c255_i32_160 dim 1 : vector<1x256xf32>, i32 -> vector<1x256xf32>
    %c67 = arith.constant 67 : index
    %573 = memref.load %arg1[%c67] : memref<98xf32, #tpu.memory_space<smem>>
    %cst_161 = arith.constant 0.000000e+00 : f32
    %574 = vector.broadcast %cst_161 : f32 to vector<1x256xf32>
    %575 = arith.select %71, %572, %574 : vector<1x256xi1>, vector<1x256xf32>
    %576 = vector.broadcast %573 : f32 to vector<1x256xf32>
    %577 = arith.mulf %576, %575 : vector<1x256xf32>
    %578 = arith.addf %565, %577 : vector<1x256xf32>
    %c254_i32_162 = arith.constant 254 : i32
    %579 = tpu.dynamic_rotate %544 by %c254_i32_162 dim 1 : vector<1x256xf32>, i32 -> vector<1x256xf32>
    %c68 = arith.constant 68 : index
    %580 = memref.load %arg1[%c68] : memref<98xf32, #tpu.memory_space<smem>>
    %cst_163 = arith.constant 0.000000e+00 : f32
    %581 = vector.broadcast %cst_163 : f32 to vector<1x256xf32>
    %582 = arith.select %76, %579, %581 : vector<1x256xi1>, vector<1x256xf32>
    %583 = vector.broadcast %580 : f32 to vector<1x256xf32>
    %584 = arith.mulf %583, %582 : vector<1x256xf32>
    %585 = arith.addf %571, %584 : vector<1x256xf32>
    %c253_i32_164 = arith.constant 253 : i32
    %586 = tpu.dynamic_rotate %544 by %c253_i32_164 dim 1 : vector<1x256xf32>, i32 -> vector<1x256xf32>
    %c69 = arith.constant 69 : index
    %587 = memref.load %arg1[%c69] : memref<98xf32, #tpu.memory_space<smem>>
    %cst_165 = arith.constant 0.000000e+00 : f32
    %588 = vector.broadcast %cst_165 : f32 to vector<1x256xf32>
    %589 = arith.select %81, %586, %588 : vector<1x256xi1>, vector<1x256xf32>
    %590 = vector.broadcast %587 : f32 to vector<1x256xf32>
    %591 = arith.mulf %590, %589 : vector<1x256xf32>
    %592 = arith.addf %578, %591 : vector<1x256xf32>
    %cst_166 = arith.constant 0.000000e+00 : f32
    %593 = vector.broadcast %cst_166 : f32 to vector<1x256xf32>
    %594 = arith.select %31, %6, %593 : vector<1x256xi1>, vector<1x256xf32>
    %c3_i32_167 = arith.constant 3 : i32
    %595 = tpu.dynamic_rotate %594 by %c3_i32_167 dim 1 : vector<1x256xf32>, i32 -> vector<1x256xf32>
    %c70 = arith.constant 70 : index
    %596 = memref.load %arg1[%c70] : memref<98xf32, #tpu.memory_space<smem>>
    %cst_168 = arith.constant 0.000000e+00 : f32
    %597 = vector.broadcast %cst_168 : f32 to vector<1x256xf32>
    %598 = arith.select %51, %595, %597 : vector<1x256xi1>, vector<1x256xf32>
    %599 = vector.broadcast %596 : f32 to vector<1x256xf32>
    %600 = arith.mulf %599, %598 : vector<1x256xf32>
    %601 = arith.addf %585, %600 : vector<1x256xf32>
    %c2_i32_169 = arith.constant 2 : i32
    %602 = tpu.dynamic_rotate %594 by %c2_i32_169 dim 1 : vector<1x256xf32>, i32 -> vector<1x256xf32>
    %c71 = arith.constant 71 : index
    %603 = memref.load %arg1[%c71] : memref<98xf32, #tpu.memory_space<smem>>
    %cst_170 = arith.constant 0.000000e+00 : f32
    %604 = vector.broadcast %cst_170 : f32 to vector<1x256xf32>
    %605 = arith.select %56, %602, %604 : vector<1x256xi1>, vector<1x256xf32>
    %606 = vector.broadcast %603 : f32 to vector<1x256xf32>
    %607 = arith.mulf %606, %605 : vector<1x256xf32>
    %608 = arith.addf %592, %607 : vector<1x256xf32>
    %c1_i32_171 = arith.constant 1 : i32
    %609 = tpu.dynamic_rotate %594 by %c1_i32_171 dim 1 : vector<1x256xf32>, i32 -> vector<1x256xf32>
    %c72 = arith.constant 72 : index
    %610 = memref.load %arg1[%c72] : memref<98xf32, #tpu.memory_space<smem>>
    %cst_172 = arith.constant 0.000000e+00 : f32
    %611 = vector.broadcast %cst_172 : f32 to vector<1x256xf32>
    %612 = arith.select %61, %609, %611 : vector<1x256xi1>, vector<1x256xf32>
    %613 = vector.broadcast %610 : f32 to vector<1x256xf32>
    %614 = arith.mulf %613, %612 : vector<1x256xf32>
    %615 = arith.addf %601, %614 : vector<1x256xf32>
    %c73 = arith.constant 73 : index
    %616 = memref.load %arg1[%c73] : memref<98xf32, #tpu.memory_space<smem>>
    %cst_173 = arith.constant 0.000000e+00 : f32
    %617 = vector.broadcast %cst_173 : f32 to vector<1x256xf32>
    %618 = arith.select %66, %594, %617 : vector<1x256xi1>, vector<1x256xf32>
    %619 = vector.broadcast %616 : f32 to vector<1x256xf32>
    %620 = arith.mulf %619, %618 : vector<1x256xf32>
    %621 = arith.addf %608, %620 : vector<1x256xf32>
    %c255_i32_174 = arith.constant 255 : i32
    %622 = tpu.dynamic_rotate %594 by %c255_i32_174 dim 1 : vector<1x256xf32>, i32 -> vector<1x256xf32>
    %c74 = arith.constant 74 : index
    %623 = memref.load %arg1[%c74] : memref<98xf32, #tpu.memory_space<smem>>
    %cst_175 = arith.constant 0.000000e+00 : f32
    %624 = vector.broadcast %cst_175 : f32 to vector<1x256xf32>
    %625 = arith.select %71, %622, %624 : vector<1x256xi1>, vector<1x256xf32>
    %626 = vector.broadcast %623 : f32 to vector<1x256xf32>
    %627 = arith.mulf %626, %625 : vector<1x256xf32>
    %628 = arith.addf %615, %627 : vector<1x256xf32>
    %c254_i32_176 = arith.constant 254 : i32
    %629 = tpu.dynamic_rotate %594 by %c254_i32_176 dim 1 : vector<1x256xf32>, i32 -> vector<1x256xf32>
    %c75 = arith.constant 75 : index
    %630 = memref.load %arg1[%c75] : memref<98xf32, #tpu.memory_space<smem>>
    %cst_177 = arith.constant 0.000000e+00 : f32
    %631 = vector.broadcast %cst_177 : f32 to vector<1x256xf32>
    %632 = arith.select %76, %629, %631 : vector<1x256xi1>, vector<1x256xf32>
    %633 = vector.broadcast %630 : f32 to vector<1x256xf32>
    %634 = arith.mulf %633, %632 : vector<1x256xf32>
    %635 = arith.addf %621, %634 : vector<1x256xf32>
    %c253_i32_178 = arith.constant 253 : i32
    %636 = tpu.dynamic_rotate %594 by %c253_i32_178 dim 1 : vector<1x256xf32>, i32 -> vector<1x256xf32>
    %c76 = arith.constant 76 : index
    %637 = memref.load %arg1[%c76] : memref<98xf32, #tpu.memory_space<smem>>
    %cst_179 = arith.constant 0.000000e+00 : f32
    %638 = vector.broadcast %cst_179 : f32 to vector<1x256xf32>
    %639 = arith.select %81, %636, %638 : vector<1x256xi1>, vector<1x256xf32>
    %640 = vector.broadcast %637 : f32 to vector<1x256xf32>
    %641 = arith.mulf %640, %639 : vector<1x256xf32>
    %642 = arith.addf %628, %641 : vector<1x256xf32>
    %c240_i32_180 = arith.constant 240 : i32
    %643 = tpu.dynamic_rotate %6 by %c240_i32_180 dim 1 : vector<1x256xf32>, i32 -> vector<1x256xf32>
    %cst_181 = arith.constant 0.000000e+00 : f32
    %644 = vector.broadcast %cst_181 : f32 to vector<1x256xf32>
    %645 = arith.select %36, %643, %644 : vector<1x256xi1>, vector<1x256xf32>
    %c3_i32_182 = arith.constant 3 : i32
    %646 = tpu.dynamic_rotate %645 by %c3_i32_182 dim 1 : vector<1x256xf32>, i32 -> vector<1x256xf32>
    %c77 = arith.constant 77 : index
    %647 = memref.load %arg1[%c77] : memref<98xf32, #tpu.memory_space<smem>>
    %cst_183 = arith.constant 0.000000e+00 : f32
    %648 = vector.broadcast %cst_183 : f32 to vector<1x256xf32>
    %649 = arith.select %51, %646, %648 : vector<1x256xi1>, vector<1x256xf32>
    %650 = vector.broadcast %647 : f32 to vector<1x256xf32>
    %651 = arith.mulf %650, %649 : vector<1x256xf32>
    %652 = arith.addf %635, %651 : vector<1x256xf32>
    %c2_i32_184 = arith.constant 2 : i32
    %653 = tpu.dynamic_rotate %645 by %c2_i32_184 dim 1 : vector<1x256xf32>, i32 -> vector<1x256xf32>
    %c78 = arith.constant 78 : index
    %654 = memref.load %arg1[%c78] : memref<98xf32, #tpu.memory_space<smem>>
    %cst_185 = arith.constant 0.000000e+00 : f32
    %655 = vector.broadcast %cst_185 : f32 to vector<1x256xf32>
    %656 = arith.select %56, %653, %655 : vector<1x256xi1>, vector<1x256xf32>
    %657 = vector.broadcast %654 : f32 to vector<1x256xf32>
    %658 = arith.mulf %657, %656 : vector<1x256xf32>
    %659 = arith.addf %642, %658 : vector<1x256xf32>
    %c1_i32_186 = arith.constant 1 : i32
    %660 = tpu.dynamic_rotate %645 by %c1_i32_186 dim 1 : vector<1x256xf32>, i32 -> vector<1x256xf32>
    %c79 = arith.constant 79 : index
    %661 = memref.load %arg1[%c79] : memref<98xf32, #tpu.memory_space<smem>>
    %cst_187 = arith.constant 0.000000e+00 : f32
    %662 = vector.broadcast %cst_187 : f32 to vector<1x256xf32>
    %663 = arith.select %61, %660, %662 : vector<1x256xi1>, vector<1x256xf32>
    %664 = vector.broadcast %661 : f32 to vector<1x256xf32>
    %665 = arith.mulf %664, %663 : vector<1x256xf32>
    %666 = arith.addf %652, %665 : vector<1x256xf32>
    %c80 = arith.constant 80 : index
    %667 = memref.load %arg1[%c80] : memref<98xf32, #tpu.memory_space<smem>>
    %cst_188 = arith.constant 0.000000e+00 : f32
    %668 = vector.broadcast %cst_188 : f32 to vector<1x256xf32>
    %669 = arith.select %66, %645, %668 : vector<1x256xi1>, vector<1x256xf32>
    %670 = vector.broadcast %667 : f32 to vector<1x256xf32>
    %671 = arith.mulf %670, %669 : vector<1x256xf32>
    %672 = arith.addf %659, %671 : vector<1x256xf32>
    %c255_i32_189 = arith.constant 255 : i32
    %673 = tpu.dynamic_rotate %645 by %c255_i32_189 dim 1 : vector<1x256xf32>, i32 -> vector<1x256xf32>
    %c81 = arith.constant 81 : index
    %674 = memref.load %arg1[%c81] : memref<98xf32, #tpu.memory_space<smem>>
    %cst_190 = arith.constant 0.000000e+00 : f32
    %675 = vector.broadcast %cst_190 : f32 to vector<1x256xf32>
    %676 = arith.select %71, %673, %675 : vector<1x256xi1>, vector<1x256xf32>
    %677 = vector.broadcast %674 : f32 to vector<1x256xf32>
    %678 = arith.mulf %677, %676 : vector<1x256xf32>
    %679 = arith.addf %666, %678 : vector<1x256xf32>
    %c254_i32_191 = arith.constant 254 : i32
    %680 = tpu.dynamic_rotate %645 by %c254_i32_191 dim 1 : vector<1x256xf32>, i32 -> vector<1x256xf32>
    %c82 = arith.constant 82 : index
    %681 = memref.load %arg1[%c82] : memref<98xf32, #tpu.memory_space<smem>>
    %cst_192 = arith.constant 0.000000e+00 : f32
    %682 = vector.broadcast %cst_192 : f32 to vector<1x256xf32>
    %683 = arith.select %76, %680, %682 : vector<1x256xi1>, vector<1x256xf32>
    %684 = vector.broadcast %681 : f32 to vector<1x256xf32>
    %685 = arith.mulf %684, %683 : vector<1x256xf32>
    %686 = arith.addf %672, %685 : vector<1x256xf32>
    %c253_i32_193 = arith.constant 253 : i32
    %687 = tpu.dynamic_rotate %645 by %c253_i32_193 dim 1 : vector<1x256xf32>, i32 -> vector<1x256xf32>
    %c83 = arith.constant 83 : index
    %688 = memref.load %arg1[%c83] : memref<98xf32, #tpu.memory_space<smem>>
    %cst_194 = arith.constant 0.000000e+00 : f32
    %689 = vector.broadcast %cst_194 : f32 to vector<1x256xf32>
    %690 = arith.select %81, %687, %689 : vector<1x256xi1>, vector<1x256xf32>
    %691 = vector.broadcast %688 : f32 to vector<1x256xf32>
    %692 = arith.mulf %691, %690 : vector<1x256xf32>
    %693 = arith.addf %679, %692 : vector<1x256xf32>
    %c224_i32_195 = arith.constant 224 : i32
    %694 = tpu.dynamic_rotate %6 by %c224_i32_195 dim 1 : vector<1x256xf32>, i32 -> vector<1x256xf32>
    %cst_196 = arith.constant 0.000000e+00 : f32
    %695 = vector.broadcast %cst_196 : f32 to vector<1x256xf32>
    %696 = arith.select %41, %694, %695 : vector<1x256xi1>, vector<1x256xf32>
    %c3_i32_197 = arith.constant 3 : i32
    %697 = tpu.dynamic_rotate %696 by %c3_i32_197 dim 1 : vector<1x256xf32>, i32 -> vector<1x256xf32>
    %c84 = arith.constant 84 : index
    %698 = memref.load %arg1[%c84] : memref<98xf32, #tpu.memory_space<smem>>
    %cst_198 = arith.constant 0.000000e+00 : f32
    %699 = vector.broadcast %cst_198 : f32 to vector<1x256xf32>
    %700 = arith.select %51, %697, %699 : vector<1x256xi1>, vector<1x256xf32>
    %701 = vector.broadcast %698 : f32 to vector<1x256xf32>
    %702 = arith.mulf %701, %700 : vector<1x256xf32>
    %703 = arith.addf %686, %702 : vector<1x256xf32>
    %c2_i32_199 = arith.constant 2 : i32
    %704 = tpu.dynamic_rotate %696 by %c2_i32_199 dim 1 : vector<1x256xf32>, i32 -> vector<1x256xf32>
    %c85 = arith.constant 85 : index
    %705 = memref.load %arg1[%c85] : memref<98xf32, #tpu.memory_space<smem>>
    %cst_200 = arith.constant 0.000000e+00 : f32
    %706 = vector.broadcast %cst_200 : f32 to vector<1x256xf32>
    %707 = arith.select %56, %704, %706 : vector<1x256xi1>, vector<1x256xf32>
    %708 = vector.broadcast %705 : f32 to vector<1x256xf32>
    %709 = arith.mulf %708, %707 : vector<1x256xf32>
    %710 = arith.addf %693, %709 : vector<1x256xf32>
    %c1_i32_201 = arith.constant 1 : i32
    %711 = tpu.dynamic_rotate %696 by %c1_i32_201 dim 1 : vector<1x256xf32>, i32 -> vector<1x256xf32>
    %c86 = arith.constant 86 : index
    %712 = memref.load %arg1[%c86] : memref<98xf32, #tpu.memory_space<smem>>
    %cst_202 = arith.constant 0.000000e+00 : f32
    %713 = vector.broadcast %cst_202 : f32 to vector<1x256xf32>
    %714 = arith.select %61, %711, %713 : vector<1x256xi1>, vector<1x256xf32>
    %715 = vector.broadcast %712 : f32 to vector<1x256xf32>
    %716 = arith.mulf %715, %714 : vector<1x256xf32>
    %717 = arith.addf %703, %716 : vector<1x256xf32>
    %c87 = arith.constant 87 : index
    %718 = memref.load %arg1[%c87] : memref<98xf32, #tpu.memory_space<smem>>
    %cst_203 = arith.constant 0.000000e+00 : f32
    %719 = vector.broadcast %cst_203 : f32 to vector<1x256xf32>
    %720 = arith.select %66, %696, %719 : vector<1x256xi1>, vector<1x256xf32>
    %721 = vector.broadcast %718 : f32 to vector<1x256xf32>
    %722 = arith.mulf %721, %720 : vector<1x256xf32>
    %723 = arith.addf %710, %722 : vector<1x256xf32>
    %c255_i32_204 = arith.constant 255 : i32
    %724 = tpu.dynamic_rotate %696 by %c255_i32_204 dim 1 : vector<1x256xf32>, i32 -> vector<1x256xf32>
    %c88 = arith.constant 88 : index
    %725 = memref.load %arg1[%c88] : memref<98xf32, #tpu.memory_space<smem>>
    %cst_205 = arith.constant 0.000000e+00 : f32
    %726 = vector.broadcast %cst_205 : f32 to vector<1x256xf32>
    %727 = arith.select %71, %724, %726 : vector<1x256xi1>, vector<1x256xf32>
    %728 = vector.broadcast %725 : f32 to vector<1x256xf32>
    %729 = arith.mulf %728, %727 : vector<1x256xf32>
    %730 = arith.addf %717, %729 : vector<1x256xf32>
    %c254_i32_206 = arith.constant 254 : i32
    %731 = tpu.dynamic_rotate %696 by %c254_i32_206 dim 1 : vector<1x256xf32>, i32 -> vector<1x256xf32>
    %c89 = arith.constant 89 : index
    %732 = memref.load %arg1[%c89] : memref<98xf32, #tpu.memory_space<smem>>
    %cst_207 = arith.constant 0.000000e+00 : f32
    %733 = vector.broadcast %cst_207 : f32 to vector<1x256xf32>
    %734 = arith.select %76, %731, %733 : vector<1x256xi1>, vector<1x256xf32>
    %735 = vector.broadcast %732 : f32 to vector<1x256xf32>
    %736 = arith.mulf %735, %734 : vector<1x256xf32>
    %737 = arith.addf %723, %736 : vector<1x256xf32>
    %c253_i32_208 = arith.constant 253 : i32
    %738 = tpu.dynamic_rotate %696 by %c253_i32_208 dim 1 : vector<1x256xf32>, i32 -> vector<1x256xf32>
    %c90 = arith.constant 90 : index
    %739 = memref.load %arg1[%c90] : memref<98xf32, #tpu.memory_space<smem>>
    %cst_209 = arith.constant 0.000000e+00 : f32
    %740 = vector.broadcast %cst_209 : f32 to vector<1x256xf32>
    %741 = arith.select %81, %738, %740 : vector<1x256xi1>, vector<1x256xf32>
    %742 = vector.broadcast %739 : f32 to vector<1x256xf32>
    %743 = arith.mulf %742, %741 : vector<1x256xf32>
    %744 = arith.addf %730, %743 : vector<1x256xf32>
    %c208_i32_210 = arith.constant 208 : i32
    %745 = tpu.dynamic_rotate %6 by %c208_i32_210 dim 1 : vector<1x256xf32>, i32 -> vector<1x256xf32>
    %cst_211 = arith.constant 0.000000e+00 : f32
    %746 = vector.broadcast %cst_211 : f32 to vector<1x256xf32>
    %747 = arith.select %46, %745, %746 : vector<1x256xi1>, vector<1x256xf32>
    %c3_i32_212 = arith.constant 3 : i32
    %748 = tpu.dynamic_rotate %747 by %c3_i32_212 dim 1 : vector<1x256xf32>, i32 -> vector<1x256xf32>
    %c91 = arith.constant 91 : index
    %749 = memref.load %arg1[%c91] : memref<98xf32, #tpu.memory_space<smem>>
    %cst_213 = arith.constant 0.000000e+00 : f32
    %750 = vector.broadcast %cst_213 : f32 to vector<1x256xf32>
    %751 = arith.select %51, %748, %750 : vector<1x256xi1>, vector<1x256xf32>
    %752 = vector.broadcast %749 : f32 to vector<1x256xf32>
    %753 = arith.mulf %752, %751 : vector<1x256xf32>
    %754 = arith.addf %737, %753 : vector<1x256xf32>
    %c2_i32_214 = arith.constant 2 : i32
    %755 = tpu.dynamic_rotate %747 by %c2_i32_214 dim 1 : vector<1x256xf32>, i32 -> vector<1x256xf32>
    %c92 = arith.constant 92 : index
    %756 = memref.load %arg1[%c92] : memref<98xf32, #tpu.memory_space<smem>>
    %cst_215 = arith.constant 0.000000e+00 : f32
    %757 = vector.broadcast %cst_215 : f32 to vector<1x256xf32>
    %758 = arith.select %56, %755, %757 : vector<1x256xi1>, vector<1x256xf32>
    %759 = vector.broadcast %756 : f32 to vector<1x256xf32>
    %760 = arith.mulf %759, %758 : vector<1x256xf32>
    %761 = arith.addf %744, %760 : vector<1x256xf32>
    %c1_i32_216 = arith.constant 1 : i32
    %762 = tpu.dynamic_rotate %747 by %c1_i32_216 dim 1 : vector<1x256xf32>, i32 -> vector<1x256xf32>
    %c93 = arith.constant 93 : index
    %763 = memref.load %arg1[%c93] : memref<98xf32, #tpu.memory_space<smem>>
    %cst_217 = arith.constant 0.000000e+00 : f32
    %764 = vector.broadcast %cst_217 : f32 to vector<1x256xf32>
    %765 = arith.select %61, %762, %764 : vector<1x256xi1>, vector<1x256xf32>
    %766 = vector.broadcast %763 : f32 to vector<1x256xf32>
    %767 = arith.mulf %766, %765 : vector<1x256xf32>
    %768 = arith.addf %754, %767 : vector<1x256xf32>
    %c94 = arith.constant 94 : index
    %769 = memref.load %arg1[%c94] : memref<98xf32, #tpu.memory_space<smem>>
    %cst_218 = arith.constant 0.000000e+00 : f32
    %770 = vector.broadcast %cst_218 : f32 to vector<1x256xf32>
    %771 = arith.select %66, %747, %770 : vector<1x256xi1>, vector<1x256xf32>
    %772 = vector.broadcast %769 : f32 to vector<1x256xf32>
    %773 = arith.mulf %772, %771 : vector<1x256xf32>
    %774 = arith.addf %761, %773 : vector<1x256xf32>
    %c255_i32_219 = arith.constant 255 : i32
    %775 = tpu.dynamic_rotate %747 by %c255_i32_219 dim 1 : vector<1x256xf32>, i32 -> vector<1x256xf32>
    %c95 = arith.constant 95 : index
    %776 = memref.load %arg1[%c95] : memref<98xf32, #tpu.memory_space<smem>>
    %cst_220 = arith.constant 0.000000e+00 : f32
    %777 = vector.broadcast %cst_220 : f32 to vector<1x256xf32>
    %778 = arith.select %71, %775, %777 : vector<1x256xi1>, vector<1x256xf32>
    %779 = vector.broadcast %776 : f32 to vector<1x256xf32>
    %780 = arith.mulf %779, %778 : vector<1x256xf32>
    %781 = arith.addf %768, %780 : vector<1x256xf32>
    %c254_i32_221 = arith.constant 254 : i32
    %782 = tpu.dynamic_rotate %747 by %c254_i32_221 dim 1 : vector<1x256xf32>, i32 -> vector<1x256xf32>
    %c96 = arith.constant 96 : index
    %783 = memref.load %arg1[%c96] : memref<98xf32, #tpu.memory_space<smem>>
    %cst_222 = arith.constant 0.000000e+00 : f32
    %784 = vector.broadcast %cst_222 : f32 to vector<1x256xf32>
    %785 = arith.select %76, %782, %784 : vector<1x256xi1>, vector<1x256xf32>
    %786 = vector.broadcast %783 : f32 to vector<1x256xf32>
    %787 = arith.mulf %786, %785 : vector<1x256xf32>
    %788 = arith.addf %774, %787 : vector<1x256xf32>
    %c253_i32_223 = arith.constant 253 : i32
    %789 = tpu.dynamic_rotate %747 by %c253_i32_223 dim 1 : vector<1x256xf32>, i32 -> vector<1x256xf32>
    %c97 = arith.constant 97 : index
    %790 = memref.load %arg1[%c97] : memref<98xf32, #tpu.memory_space<smem>>
    %cst_224 = arith.constant 0.000000e+00 : f32
    %791 = vector.broadcast %cst_224 : f32 to vector<1x256xf32>
    %792 = arith.select %81, %789, %791 : vector<1x256xi1>, vector<1x256xf32>
    %793 = vector.broadcast %790 : f32 to vector<1x256xf32>
    %794 = arith.mulf %793, %792 : vector<1x256xf32>
    %795 = arith.addf %781, %794 : vector<1x256xf32>
    %796 = arith.addf %788, %795 : vector<1x256xf32>
    %797 = arith.negf %796 : vector<1x256xf32>
    %798 = math.exp %797 : vector<1x256xf32>
    %cst_225 = arith.constant 1.000000e+00 : f32
    %799 = vector.broadcast %cst_225 : f32 to vector<1x256xf32>
    %800 = arith.addf %799, %798 : vector<1x256xf32>
    %801 = arith.divf %799, %800 : vector<1x256xf32>
    %802 = vector.shape_cast %801 : vector<1x256xf32> to vector<1x1x256xf32>
    %c0_226 = arith.constant 0 : index
    %c0_227 = arith.constant 0 : index
    %c0_228 = arith.constant 0 : index
    %803 = vector.load %arg3[%c0_226, %c0_227, %c0_228] : memref<1x4x256xf32, #tpu.memory_space<vmem>>, vector<1x4x256xf32>
    %804 = vector.broadcast %802 : vector<1x1x256xf32> to vector<1x4x256xf32>
    %805 = arith.mulf %804, %803 : vector<1x4x256xf32>
    %c0_229 = arith.constant 0 : index
    %c0_230 = arith.constant 0 : index
    %c0_231 = arith.constant 0 : index
    %806 = vector.load %arg4[%c0_229, %c0_230, %c0_231] : memref<1x4x256xf32, #tpu.memory_space<vmem>>, vector<1x4x256xf32>
    tpu.vector_store %arg4[%c0_229, %c0_230, %c0_231], %805 {strides = array<i32>} : memref<1x4x256xf32, #tpu.memory_space<vmem>>, vector<1x4x256xf32>,
    return
  }
  func.func @transform_0(%arg0: i32) -> i32 {
    %c0_i32 = arith.constant 0 : i32
    %c0_i32_0 = arith.constant 0 : i32
    return %c0_i32 : i32
  }
  func.func @transform_1(%arg0: i32) -> (i32, i32) {
    %c0_i32 = arith.constant 0 : i32
    %c0_i32_0 = arith.constant 0 : i32
    %c0_i32_1 = arith.constant 0 : i32
    return %c0_i32, %c0_i32_0 : i32, i32
  }
  func.func @transform_2(%arg0: i32) -> (i32, i32, i32) {
    %c0_i32 = arith.constant 0 : i32
    %c0_i32_0 = arith.constant 0 : i32
    %c0_i32_1 = arith.constant 0 : i32
    return %arg0, %c0_i32, %c0_i32_0 : i32, i32, i32
  }
  func.func @transform_3(%arg0: i32) -> (i32, i32, i32) {
    %c0_i32 = arith.constant 0 : i32
    %c0_i32_0 = arith.constant 0 : i32
    %c0_i32_1 = arith.constant 0 : i32
    return %arg0, %c0_i32, %c0_i32_0 : i32, i32, i32
  }
}

</mosaic_0001>

<llo_original>
// kernel: tpu_custom_call.1
$region0: #{tpu_custom_call.1}
  #allocation0 [shape = 'u32[]', space=smem, size = 0x4, offset = 0x4, fixed_abs, tag = 'smem constant byte address 0x4 - core index']
  #allocation1 [shape = 'u32[72,128]{1,0:T(1,128)}', space=vmem, size = 0x9000, scoped, tag = 'internal scratch']
  %s0 = inlined_call_operand.hbm [shape: f32[98], index: 0, kind: input, shape index: {}]
  %s1 = inlined_call_operand.hbm [shape: s32[2,256], index: 1, kind: input, shape index: {}]
  %s2 = inlined_call_operand.hbm [shape: f32[2,4,256], index: 2, kind: input, shape index: {}]
  %s3 = inlined_call_operand.hbm [shape: f32[2,4,256], index: 3, kind: output, shape index: {}]
  %s4 = sld [smem:[#allocation0]]
  $region57: #{tpu_custom_call.1} parent=0
    _
  %s6 = ssub.s32 1, %s4
  %s7 = scalar_select 0, %s6, %s4
  $region1: #{tpu_custom_call.1} parent=0
    #allocation2 [shape = 'u8[512]{0}', space=smem, size = 0x200, scoped, tag = 'input window, operand 0, single buffered']
    #allocation3 [shape = 's32[2]{0}', space=sflag, size = 0x8, scoped, tag = 'scoped memory for tpu_custom_call.1']
    #allocation4 [shape = 's32[2]{0}', space=sflag, size = 0x8, scoped, tag = 'scoped memory for tpu_custom_call.1']
    #allocation5 [shape = 's32[2]{0}', space=sflag, size = 0x8, scoped, tag = 'scoped memory for tpu_custom_call.1']
    #allocation6 [shape = 'u8[2048]{0}', space=vmem, size = 0x800, scoped, tag = 'input window, operand 1, single buffered']
    #allocation7 [shape = 'u8[8192]{0}', space=vmem, size = 0x2000, scoped, tag = 'input window, operand 2']
    #allocation8 [shape = 's32[2]{0}', space=sflag, size = 0x8, scoped, tag = 'scoped memory for tpu_custom_call.1']
    #allocation9 [shape = 'u8[8192]{0}', space=vmem, size = 0x2000, scoped, tag = 'output window, operand 0']
    %8 = vsyncpa [#allocation5], 0
    %9 = vsyncpa [#allocation3], 0
    %10 = vsyncpa [#allocation8], 0
    %s11 = scalar_lea.sflag [#allocation8], 1
    %12 = vsyncpa %s11, 0
    %13 = vsyncpa [#allocation4], 0
    %s14 = scalar_lea.sflag [#allocation4], 1
    %15 = vsyncpa %s14, 0
    loop: start=0, step=1, limit=4
    $region2: #{tpu_custom_call.1} parent=1 // loop_pre_header
      _
    $region3: #{tpu_custom_call.1} parent=1 // loop_header
      %s17 = sphi 0, %s21
      %p18 = scmp.ge.s32.totalorder %s17, 4
      %s25 = sphi 0, %s25
      %s27 = sphi 0, %s25
      %s28 = sphi 0, %s27
      %s42 = sphi 0, %s28
      %s46 = sphi 0, %s46
      %s48 = sphi 0, %s46
      %s49 = sphi 0, %s48
      %s63 = sphi 0, %s49
      %s69 = sphi 0, %s71
      %s72 = sphi 0, %s69
      %s73 = sphi 0, %s72
      %s89 = sphi 0, %s73
      %s95 = sphi 0, %s97
      %s98 = sphi 0, %s95
      %s99 = sphi 0, %s98
      %s115 = sphi 0, %s99
    $region4: #{tpu_custom_call.1} parent=1 // loop_header_branch
      %20 = sbr.rel (%p18) target = $region8
    $region5: #{tpu_custom_call.1} parent=1 // loop_body
      %s22 = ssub.s32 %s17, 1
      %s23 = ssub.s32 %s17, 2
      %s24 = sadd.s32 %s17, 1
      %s26 = sadd.s32 %s25, 1
      %p29 = scmp.eq.s32.totalorder %s17, 1
      %p30 = scmp.ne.s32.totalorder %s25, %s27
      %p31 = scmp.eq.s32.totalorder %s17, 0
      %p32 = por %p30, %p31
      %p33 = scmp.ne.s32.totalorder %s25, %s27
      %p34 = scmp.eq.s32.totalorder %s22, 1
      %p35 = por %p33, %p34
      %p36 = scmp.ne.s32.totalorder %s27, %s28
      %p37 = scmp.eq.s32.totalorder %s22, 0
      %p38 = por %p36, %p37
      %p39 = scmp.ne.s32.totalorder %s27, %s28
      %p40 = scmp.eq.s32.totalorder %s23, 1
      %p41 = por %p39, %p40
      %p43 = scmp.ne.s32.totalorder %s28, %s42
      %p44 = scmp.eq.s32.totalorder %s23, 0
      %p45 = por %p43, %p44
      %s47 = sadd.s32 %s46, 1
      %p50 = scmp.eq.s32.totalorder %s17, 1
      %p51 = scmp.ne.s32.totalorder %s46, %s48
      %p52 = scmp.eq.s32.totalorder %s17, 0
      %p53 = por %p51, %p52
      %p54 = scmp.ne.s32.totalorder %s46, %s48
      %p55 = scmp.eq.s32.totalorder %s22, 1
      %p56 = por %p54, %p55
      %p57 = scmp.ne.s32.totalorder %s48, %s49
      %p58 = scmp.eq.s32.totalorder %s22, 0
      %p59 = por %p57, %p58
      %p60 = scmp.ne.s32.totalorder %s48, %s49
      %p61 = scmp.eq.s32.totalorder %s23, 1
      %p62 = por %p60, %p61
      %p64 = scmp.ne.s32.totalorder %s49, %s63
      %p65 = scmp.eq.s32.totalorder %s23, 0
      %p66 = por %p64, %p65
      %s67 = ssub.s32 %s17, %s24
      %p68 = scmp.eq.s32.totalorder %s67, 0
      %s70 = sadd.s32 %s69, 1
      %s71 = scalar_select %p68, %s69, %s70
      %p74 = pneg %p68
      %p75 = scmp.eq.s32.totalorder %s17, 1
      %p76 = por %p74, %p75
      %p77 = scmp.ne.s32.totalorder %s69, %s72
      %p78 = scmp.eq.s32.totalorder %s17, 0
      %p79 = por %p77, %p78
      %p80 = scmp.ne.s32.totalorder %s69, %s72
      %p81 = scmp.eq.s32.totalorder %s22, 1
      %p82 = por %p80, %p81
      %p83 = scmp.ne.s32.totalorder %s72, %s73
      %p84 = scmp.eq.s32.totalorder %s22, 0
      %p85 = por %p83, %p84
      %p86 = scmp.ne.s32.totalorder %s72, %s73
      %p87 = scmp.eq.s32.totalorder %s23, 1
      %p88 = por %p86, %p87
      %p90 = scmp.ne.s32.totalorder %s73, %s89
      %p91 = scmp.eq.s32.totalorder %s23, 0
      %p92 = por %p90, %p91
      %s93 = ssub.s32 %s17, %s24
      %p94 = scmp.eq.s32.totalorder %s93, 0
      %s96 = sadd.s32 %s95, 1
      %s97 = scalar_select %p94, %s95, %s96
      %p100 = pneg %p94
      %p101 = scmp.eq.s32.totalorder %s17, 1
      %p102 = por %p100, %p101
      %p103 = scmp.ne.s32.totalorder %s95, %s98
      %p104 = scmp.eq.s32.totalorder %s17, 0
      %p105 = por %p103, %p104
      %p106 = scmp.ne.s32.totalorder %s95, %s98
      %p107 = scmp.eq.s32.totalorder %s22, 1
      %p108 = por %p106, %p107
      %p109 = scmp.ne.s32.totalorder %s98, %s99
      %p110 = scmp.eq.s32.totalorder %s22, 0
      %p111 = por %p109, %p110
      %p112 = scmp.ne.s32.totalorder %s98, %s99
      %p113 = scmp.eq.s32.totalorder %s23, 1
      %p114 = por %p112, %p113
      %p116 = scmp.ne.s32.totalorder %s99, %s115
      %p117 = scmp.eq.s32.totalorder %s23, 0
      %p118 = por %p116, %p117
      %p119 = scmp.le.s32.totalorder 1, %s17
      %p120 = scmp.lt.s32.totalorder %s17, 3
      %p121 = pnand %p119, %p120
      %p122 = pneg %p121
      // Predicated region
      $region9: #{tpu_custom_call.1} parent=5 // pred_check
        _
      $region10: #{tpu_custom_call.1} parent=5 // pred_check_branch
        %124 = sbr.rel (%p121) target = $region12
      $region11: #{tpu_custom_call.1} parent=5 // pred_region
        %s125 = ssub.s32 %s17, 1
        // Predicated region
        $region13: #{tpu_custom_call.1} parent=11 // pred_check
          %p126 = pneg %p38
        $region14: #{tpu_custom_call.1} parent=11 // pred_check_branch
          %128 = sbr.rel (%p126) target = $region16
        $region15: #{tpu_custom_call.1} parent=11 // pred_region
          %130 = vsyncadd [#allocation5], 0
          %s132 = sshll.u32 %s0, 4
          %s133 = int_to_ptr.hbm [resolvable:$true] %s132
          %135 = dma.hbm_to_smem %s133, 16, [#allocation2], [#allocation5]
        $region16: #{tpu_custom_call.1} parent=11 // pred_fallthru
          _
        // Predicated region
        $region17: #{tpu_custom_call.1} parent=11 // pred_check
          %p136 = pneg %p59
        $region18: #{tpu_custom_call.1} parent=11 // pred_check_branch
          %138 = sbr.rel (%p136) target = $region20
        $region19: #{tpu_custom_call.1} parent=11 // pred_region
          %140 = vsyncadd [#allocation3], 0
          %s142 = sshll.u32 %s1, 4
          %s143 = int_to_ptr.hbm [resolvable:$true] %s142
          %s144 = sshll.u32 [#allocation6], 4
          %s145 = int_to_ptr.vmem [resolvable:$true] %s144
          %147 = dma.hbm_to_vmem [thread:$0]  %s143, 64, %s145, [#allocation3]
        $region20: #{tpu_custom_call.1} parent=11 // pred_fallthru
          _
      $region12: #{tpu_custom_call.1} parent=5 // pred_fallthru
        _
      %p148 = scmp.lt.s32.totalorder %s17, 2
      // Predicated region
      $region21: #{tpu_custom_call.1} parent=5 // pred_check
        %p149 = pneg %p148
      $region22: #{tpu_custom_call.1} parent=5 // pred_check_branch
        %151 = sbr.rel (%p149) target = $region24
      $region23: #{tpu_custom_call.1} parent=5 // pred_region
        // Predicated region
        $region25: #{tpu_custom_call.1} parent=23 // pred_check
          %p152 = pneg %p79
        $region26: #{tpu_custom_call.1} parent=23 // pred_check_branch
          %154 = sbr.rel (%p152) target = $region28
        $region27: #{tpu_custom_call.1} parent=23 // pred_region
          %s155 = sand.u32 %s69, 1
          %s156 = scalar_lea.sflag [#allocation8], %s155
          %s157 = sand.u32 %s69, 1
          %s158 = smul.addr %s157, 8
          %s159 = scalar_lea.vmem [#allocation7], %s158
          %161 = vsyncadd %s156, 0
          %s162 = smul.addr %s17, 2
          %s163 = smul.addr %s162, 4
          %s164 = scalar_lea.hbm %s2, %s163
          %s166 = sshll.u32 %s164, 4
          %s167 = int_to_ptr.hbm [resolvable:$true] %s166
          %s168 = sshll.u32 %s159, 4
          %s169 = int_to_ptr.vmem [resolvable:$true] %s168
          %171 = dma.hbm_to_vmem [thread:$0]  %s167, 128, %s169, %s156
        $region28: #{tpu_custom_call.1} parent=23 // pred_fallthru
          _
      $region24: #{tpu_custom_call.1} parent=5 // pred_fallthru
        _
      %p172 = scmp.le.s32.totalorder 1, %s17
      %p173 = scmp.lt.s32.totalorder %s17, 3
      %p174 = pnand %p172, %p173
      %p175 = pneg %p174
      // Predicated region
      $region29: #{tpu_custom_call.1} parent=5 // pred_check
        _
      $region30: #{tpu_custom_call.1} parent=5 // pred_check_branch
        %177 = sbr.rel (%p174) target = $region32
      $region31: #{tpu_custom_call.1} parent=5 // pred_region
        %s178 = ssub.s32 %s17, 1
        // Predicated region
        $region33: #{tpu_custom_call.1} parent=31 // pred_check
          %p179 = pneg %p38
        $region34: #{tpu_custom_call.1} parent=31 // pred_check_branch
          %181 = sbr.rel (%p179) target = $region36
        $region35: #{tpu_custom_call.1} parent=31 // pred_region
          %183 = dma.done [#allocation5], 16
        $region36: #{tpu_custom_call.1} parent=31 // pred_fallthru
          _
        // Predicated region
        $region37: #{tpu_custom_call.1} parent=31 // pred_check
          %p184 = pneg %p59
        $region38: #{tpu_custom_call.1} parent=31 // pred_check_branch
          %186 = sbr.rel (%p184) target = $region40
        $region39: #{tpu_custom_call.1} parent=31 // pred_region
          %188 = dma.done [#allocation3], 64
        $region40: #{tpu_custom_call.1} parent=31 // pred_fallthru
          _
        %s189 = sand.u32 %s72, 1
        %s190 = scalar_lea.sflag [#allocation8], %s189
        %s191 = sand.u32 %s72, 1
        %s192 = smul.addr %s191, 8
        %s193 = scalar_lea.vmem [#allocation7], %s192
        // Predicated region
        $region41: #{tpu_custom_call.1} parent=31 // pred_check
          %p194 = pneg %p85
        $region42: #{tpu_custom_call.1} parent=31 // pred_check_branch
          %196 = sbr.rel (%p194) target = $region44
        $region43: #{tpu_custom_call.1} parent=31 // pred_region
          %198 = dma.done %s190, 128
        $region44: #{tpu_custom_call.1} parent=31 // pred_fallthru
          _
        %199 = sfence
        %p200 = pneg %p38
        %p201 = pneg %p35
        %p202 = pneg %p59
        %p203 = pneg %p56
        %s204 = sand.u32 %s72, 1
        %s205 = scalar_lea.sflag [#allocation8], %s204
        %s206 = sand.u32 %s72, 1
        %s207 = smul.addr %s206, 8
        %s208 = scalar_lea.vmem [#allocation7], %s207
        %p209 = pneg %p85
        %p210 = pneg %p82
        %p211 = pneg %p111
        %p212 = pneg %p108
        %s213 = sand.u32 %s98, 1
        %s214 = scalar_lea.sflag [#allocation4], %s213
        %s215 = sand.u32 %s98, 1
        %s216 = smul.addr %s215, 8
        %s217 = scalar_lea.vmem [#allocation9], %s216
        %v218 = vld [vmem:[%s193] sm:$0xff]
        %220 = vst [vmem:[#allocation1] ss:$2 sm:$0xff] %v218
        %v221 = vld.sshfl [vmem:[#allocation1] sm:$0xff pattern:$0x75316420]
        %v222 = vld.sshfl [vmem:[#allocation1 + $0x8] sm:$0xff pattern:$0x75316420]
        %vm225 = vcmask 1043456
        %v226 = vsel %vm225, %v221, 0.0
        %v227 = vrot.slane %v226, 4
        %v228 = vadd.f32 %v226, %v227
        %v229 = vrot.slane %v228, 2
        %v230 = vadd.f32 %v228, %v229
        %v231 = vrot.slane %v230, 1
        %v232 = vadd.f32 %v230, %v231
        %v233 = vsel %vm225, %v222, 0.0
        %v234 = vrot.slane %v233, 4
        %v235 = vadd.f32 %v233, %v234
        %v236 = vrot.slane %v235, 2
        %v237 = vadd.f32 %v235, %v236
        %v238 = vrot.slane %v237, 1
        %v239 = vadd.f32 %v237, %v238
        %v240 = vadd.f32 %v232, 0.0
        %v241 = vadd.f32 %v239, 0.0
        %242 = vst [vmem:[#allocation1] ss:$2 sm:$0xff] %v218
        %v243 = vld.sshfl [vmem:[#allocation1] sm:$0xff pattern:$0x75316420]
        %v244 = vld.sshfl [vmem:[#allocation1 + $0x8] sm:$0xff pattern:$0x75316420]
        %v247 = vsel %vm225, %v243, -inf
        %v248 = vrot.slane %v247, 4
        %v249 = vmax.f32 %v247, %v248
        %v250 = vrot.slane %v249, 2
        %v251 = vmax.f32 %v249, %v250
        %v252 = vrot.slane %v251, 1
        %v253 = vmax.f32 %v251, %v252
        %v254 = vsel %vm225, %v244, -inf
        %v255 = vrot.slane %v254, 4
        %v256 = vmax.f32 %v254, %v255
        %v257 = vrot.slane %v256, 2
        %v258 = vmax.f32 %v256, %v257
        %v259 = vrot.slane %v258, 1
        %v260 = vmax.f32 %v258, %v259
        %v261 = vmul.f32 %v240, 0.25
        %v262 = vmul.f32 %v241, 0.25
        %v263 = vld [vmem:[#allocation6] sm:$0xf]
        %vm264 = vcmp.ge.s32.totalorder %v263, 3
        %vm265 = vcmp.lt.s32.totalorder %v263, 19
        %vm266 = vmand %vm264, %vm265
        %vm267 = vcmp.ge.s32.totalorder %v263, 2
        %vm268 = vcmp.lt.s32.totalorder %v263, 18
        %vm269 = vmand %vm267, %vm268
        %vm270 = vcmp.ge.s32.totalorder %v263, 1
        %vm271 = vcmp.lt.s32.totalorder %v263, 17
        %vm272 = vmand %vm270, %vm271
        %vm273 = vcmp.ge.s32.totalorder %v263, 0
        %vm274 = vcmp.lt.s32.totalorder %v263, 16
        %vm275 = vmand %vm273, %vm274
        %vm276 = vcmp.ge.s32.totalorder %v263, 4294967295
        %vm277 = vcmp.lt.s32.totalorder %v263, 15
        %vm278 = vmand %vm276, %vm277
        %vm279 = vcmp.ge.s32.totalorder %v263, 4294967294
        %vm280 = vcmp.lt.s32.totalorder %v263, 14
        %vm281 = vmand %vm279, %vm280
        %vm282 = vcmp.ge.s32.totalorder %v263, 4294967293
        %vm283 = vcmp.lt.s32.totalorder %v263, 13
        %vm284 = vmand %vm282, %vm283
        %285 = vrot.lane.b32.xlu0 %v261, 48
        %v286 = vpop.permute.xlu0 %285
        %287 = vrot.lane.b32.xlu0 %v262, 48
        %v288 = vpop.permute.xlu0 %287
        %v289 = vlaneseq
        %v290 = vand.u32 %v289, 127
        %vm291 = vcmp.lt.s32.totalorder %v290, 48
        %v292 = vsel %vm291, %v286, %v288
        %v293 = vsel %vm291, %v288, %v286
        %v296 = vrot.slane %v292, 6
        %vm297 = vcmask 1041408
        %v298 = vsel %vm297, %v293, %v296
        %v300 = vsel %vm266, %v298, 0.0
        %v302 = vperm.slane %v300, 0
        %v303 = vperm.slane %v300, 2
        %306 = vrot.lane.b32.xlu0 %v302, 3
        %v307 = vpop.permute.xlu0 %306
        %308 = vrot.lane.b32.xlu0 %v303, 3
        %v309 = vpop.permute.xlu0 %308
        %vm310 = vcmp.lt.s32.totalorder %v290, 3
        %v311 = vsel %vm310, %v307, %v309
        %v312 = vsel %vm310, %v309, %v307
        %s313 = sld [smem:[#allocation2]]
        %v316 = vrot.slane %v311, 6
        %v317 = vsel %vm297, %v312, %v316
        %v318 = vrot.slane %v317, 7
        %v320 = vsel %vm266, %v318, 0.0
        %v321 = vstv %s313
        %v322 = vmul.f32 %v321, %v320
        %v323 = vadd.f32 %v322, 0.0
        %324 = vrot.lane.b32.xlu0 %v302, 2
        %v325 = vpop.permute.xlu0 %324
        %326 = vrot.lane.b32.xlu0 %v303, 2
        %v327 = vpop.permute.xlu0 %326
        %vm328 = vcmp.lt.s32.totalorder %v290, 2
        %v329 = vsel %vm328, %v325, %v327
        %v330 = vsel %vm328, %v327, %v325
        %s331 = sld [smem:[#allocation2 + $0x1]]
        %v334 = vrot.slane %v329, 6
        %v335 = vsel %vm297, %v330, %v334
        %v336 = vrot.slane %v335, 7
        %v338 = vsel %vm269, %v336, 0.0
        %v339 = vstv %s331
        %v340 = vmul.f32 %v339, %v338
        %v341 = vadd.f32 %v340, 0.0
        %342 = vrot.lane.b32.xlu0 %v302, 1
        %v343 = vpop.permute.xlu0 %342
        %344 = vrot.lane.b32.xlu0 %v303, 1
        %v345 = vpop.permute.xlu0 %344
        %vm346 = vcmp.lt.s32.totalorder %v290, 1
        %v347 = vsel %vm346, %v343, %v345
        %v348 = vsel %vm346, %v345, %v343
        %s349 = sld [smem:[#allocation2 + $0x2]]
        %v352 = vrot.slane %v347, 6
        %v353 = vsel %vm297, %v348, %v352
        %v354 = vrot.slane %v353, 7
        %v356 = vsel %vm272, %v354, 0.0
        %v357 = vstv %s349
        %v358 = vmul.f32 %v357, %v356
        %v359 = vadd.f32 %v323, %v358
        %s360 = sld [smem:[#allocation2 + $0x3]]
        %v361 = vrot.slane %v300, 7
        %v363 = vsel %vm275, %v361, 0.0
        %v364 = vstv %s360
        %v365 = vmul.f32 %v364, %v363
        %v366 = vadd.f32 %v341, %v365
        %367 = vrot.lane.b32.xlu0 %v302, 127
        %v368 = vpop.permute.xlu0 %367
        %369 = vrot.lane.b32.xlu0 %v303, 127
        %v370 = vpop.permute.xlu0 %369
        %vm371 = vcmp.lt.s32.totalorder %v290, 127
        %v372 = vsel %vm371, %v368, %v370
        %v373 = vsel %vm371, %v370, %v368
        %s374 = sld [smem:[#allocation2 + $0x4]]
        %v377 = vrot.slane %v373, 6
        %v378 = vsel %vm297, %v372, %v377
        %v379 = vrot.slane %v378, 7
        %v381 = vsel %vm278, %v379, 0.0
        %v382 = vstv %s374
        %v383 = vmul.f32 %v382, %v381
        %v384 = vadd.f32 %v359, %v383
        %385 = vrot.lane.b32.xlu0 %v302, 126
        %v386 = vpop.permute.xlu0 %385
        %387 = vrot.lane.b32.xlu0 %v303, 126
        %v388 = vpop.permute.xlu0 %387
        %vm389 = vcmp.lt.s32.totalorder %v290, 126
        %v390 = vsel %vm389, %v386, %v388
        %v391 = vsel %vm389, %v388, %v386
        %s392 = sld [smem:[#allocation2 + $0x5]]
        %v395 = vrot.slane %v391, 6
        %v396 = vsel %vm297, %v390, %v395
        %v397 = vrot.slane %v396, 7
        %v399 = vsel %vm281, %v397, 0.0
        %v400 = vstv %s392
        %v401 = vmul.f32 %v400, %v399
        %v402 = vadd.f32 %v366, %v401
        %403 = vrot.lane.b32.xlu0 %v302, 125
        %v404 = vpop.permute.xlu0 %403
        %405 = vrot.lane.b32.xlu0 %v303, 125
        %v406 = vpop.permute.xlu0 %405
        %vm407 = vcmp.lt.s32.totalorder %v290, 125
        %v408 = vsel %vm407, %v404, %v406
        %v409 = vsel %vm407, %v406, %v404
        %s410 = sld [smem:[#allocation2 + $0x6]]
        %v413 = vrot.slane %v409, 6
        %v414 = vsel %vm297, %v408, %v413
        %v415 = vrot.slane %v414, 7
        %v417 = vsel %vm284, %v415, 0.0
        %v418 = vstv %s410
        %v419 = vmul.f32 %v418, %v417
        %v420 = vadd.f32 %v384, %v419
        %421 = vrot.lane.b32.xlu0 %v261, 32
        %v422 = vpop.permute.xlu0 %421
        %423 = vrot.lane.b32.xlu0 %v262, 32
        %v424 = vpop.permute.xlu0 %423
        %vm425 = vcmp.lt.s32.totalorder %v290, 32
        %v426 = vsel %vm425, %v422, %v424
        %v427 = vsel %vm425, %v424, %v422
        %v430 = vrot.slane %v426, 6
        %v431 = vsel %vm297, %v427, %v430
        %v433 = vsel %vm269, %v431, 0.0
        %v435 = vperm.slane %v433, 0
        %v436 = vperm.slane %v433, 2
        %439 = vrot.lane.b32.xlu0 %v435, 3
        %v440 = vpop.permute.xlu0 %439
        %441 = vrot.lane.b32.xlu0 %v436, 3
        %v442 = vpop.permute.xlu0 %441
        %v443 = vsel %vm310, %v440, %v442
        %v444 = vsel %vm310, %v442, %v440
        %s445 = sld [smem:[#allocation2 + $0x7]]
        %v448 = vrot.slane %v443, 6
        %v449 = vsel %vm297, %v444, %v448
        %v450 = vrot.slane %v449, 7
        %v452 = vsel %vm266, %v450, 0.0
        %v453 = vstv %s445
        %v454 = vmul.f32 %v453, %v452
        %v455 = vadd.f32 %v402, %v454
        %456 = vrot.lane.b32.xlu0 %v435, 2
        %v457 = vpop.permute.xlu0 %456
        %458 = vrot.lane.b32.xlu0 %v436, 2
        %v459 = vpop.permute.xlu0 %458
        %v460 = vsel %vm328, %v457, %v459
        %v461 = vsel %vm328, %v459, %v457
        %s462 = sld [smem:[#allocation2 + $0x8]]
        %v465 = vrot.slane %v460, 6
        %v466 = vsel %vm297, %v461, %v465
        %v467 = vrot.slane %v466, 7
        %v469 = vsel %vm269, %v467, 0.0
        %v470 = vstv %s462
        %v471 = vmul.f32 %v470, %v469
        %v472 = vadd.f32 %v420, %v471
        %473 = vrot.lane.b32.xlu0 %v435, 1
        %v474 = vpop.permute.xlu0 %473
        %475 = vrot.lane.b32.xlu0 %v436, 1
        %v476 = vpop.permute.xlu0 %475
        %v477 = vsel %vm346, %v474, %v476
        %v478 = vsel %vm346, %v476, %v474
        %s479 = sld [smem:[#allocation2 + $0x9]]
        %v482 = vrot.slane %v477, 6
        %v483 = vsel %vm297, %v478, %v482
        %v484 = vrot.slane %v483, 7
        %v486 = vsel %vm272, %v484, 0.0
        %v487 = vstv %s479
        %v488 = vmul.f32 %v487, %v486
        %v489 = vadd.f32 %v455, %v488
        %s490 = sld [smem:[#allocation2 + $0xa]]
        %v491 = vrot.slane %v433, 7
        %v493 = vsel %vm275, %v491, 0.0
        %v494 = vstv %s490
        %v495 = vmul.f32 %v494, %v493
        %v496 = vadd.f32 %v472, %v495
        %497 = vrot.lane.b32.xlu0 %v435, 127
        %v498 = vpop.permute.xlu0 %497
        %499 = vrot.lane.b32.xlu0 %v436, 127
        %v500 = vpop.permute.xlu0 %499
        %v501 = vsel %vm371, %v498, %v500
        %v502 = vsel %vm371, %v500, %v498
        %s503 = sld [smem:[#allocation2 + $0xb]]
        %v506 = vrot.slane %v502, 6
        %v507 = vsel %vm297, %v501, %v506
        %v508 = vrot.slane %v507, 7
        %v510 = vsel %vm278, %v508, 0.0
        %v511 = vstv %s503
        %v512 = vmul.f32 %v511, %v510
        %v513 = vadd.f32 %v489, %v512
        %514 = vrot.lane.b32.xlu0 %v435, 126
        %v515 = vpop.permute.xlu0 %514
        %516 = vrot.lane.b32.xlu0 %v436, 126
        %v517 = vpop.permute.xlu0 %516
        %v518 = vsel %vm389, %v515, %v517
        %v519 = vsel %vm389, %v517, %v515
        %s520 = sld [smem:[#allocation2 + $0xc]]
        %v523 = vrot.slane %v519, 6
        %v524 = vsel %vm297, %v518, %v523
        %v525 = vrot.slane %v524, 7
        %v527 = vsel %vm281, %v525, 0.0
        %v528 = vstv %s520
        %v529 = vmul.f32 %v528, %v527
        %v530 = vadd.f32 %v496, %v529
        %531 = vrot.lane.b32.xlu0 %v435, 125
        %v532 = vpop.permute.xlu0 %531
        %533 = vrot.lane.b32.xlu0 %v436, 125
        %v534 = vpop.permute.xlu0 %533
        %v535 = vsel %vm407, %v532, %v534
        %v536 = vsel %vm407, %v534, %v532
        %s537 = sld [smem:[#allocation2 + $0xd]]
        %v540 = vrot.slane %v536, 6
        %v541 = vsel %vm297, %v535, %v540
        %v542 = vrot.slane %v541, 7
        %v544 = vsel %vm284, %v542, 0.0
        %v545 = vstv %s537
        %v546 = vmul.f32 %v545, %v544
        %v547 = vadd.f32 %v513, %v546
        %548 = vrot.lane.b32.xlu0 %v261, 16
        %v549 = vpop.permute.xlu0 %548
        %550 = vrot.lane.b32.xlu0 %v262, 16
        %v551 = vpop.permute.xlu0 %550
        %vm552 = vcmp.lt.s32.totalorder %v290, 16
        %v553 = vsel %vm552, %v549, %v551
        %v554 = vsel %vm552, %v551, %v549
        %v557 = vrot.slane %v553, 6
        %v558 = vsel %vm297, %v554, %v557
        %v560 = vsel %vm272, %v558, 0.0
        %v562 = vperm.slane %v560, 0
        %v563 = vperm.slane %v560, 2
        %566 = vrot.lane.b32.xlu0 %v562, 3
        %v567 = vpop.permute.xlu0 %566
        %568 = vrot.lane.b32.xlu0 %v563, 3
        %v569 = vpop.permute.xlu0 %568
        %v570 = vsel %vm310, %v567, %v569
        %v571 = vsel %vm310, %v569, %v567
        %s572 = sld [smem:[#allocation2 + $0xe]]
        %v575 = vrot.slane %v570, 6
        %v576 = vsel %vm297, %v571, %v575
        %v577 = vrot.slane %v576, 7
        %v579 = vsel %vm266, %v577, 0.0
        %v580 = vstv %s572
        %v581 = vmul.f32 %v580, %v579
        %v582 = vadd.f32 %v530, %v581
        %583 = vrot.lane.b32.xlu0 %v562, 2
        %v584 = vpop.permute.xlu0 %583
        %585 = vrot.lane.b32.xlu0 %v563, 2
        %v586 = vpop.permute.xlu0 %585
        %v587 = vsel %vm328, %v584, %v586
        %v588 = vsel %vm328, %v586, %v584
        %s589 = sld [smem:[#allocation2 + $0xf]]
        %v592 = vrot.slane %v587, 6
        %v593 = vsel %vm297, %v588, %v592
        %v594 = vrot.slane %v593, 7
        %v596 = vsel %vm269, %v594, 0.0
        %v597 = vstv %s589
        %v598 = vmul.f32 %v597, %v596
        %v599 = vadd.f32 %v547, %v598
        %600 = vrot.lane.b32.xlu0 %v562, 1
        %v601 = vpop.permute.xlu0 %600
        %602 = vrot.lane.b32.xlu0 %v563, 1
        %v603 = vpop.permute.xlu0 %602
        %v604 = vsel %vm346, %v601, %v603
        %v605 = vsel %vm346, %v603, %v601
        %s606 = sld [smem:[#allocation2 + $0x10]]
        %v609 = vrot.slane %v604, 6
        %v610 = vsel %vm297, %v605, %v609
        %v611 = vrot.slane %v610, 7
        %v613 = vsel %vm272, %v611, 0.0
        %v614 = vstv %s606
        %v615 = vmul.f32 %v614, %v613
        %v616 = vadd.f32 %v582, %v615
        %s617 = sld [smem:[#allocation2 + $0x11]]
        %v618 = vrot.slane %v560, 7
        %v620 = vsel %vm275, %v618, 0.0
        %v621 = vstv %s617
        %v622 = vmul.f32 %v621, %v620
        %v623 = vadd.f32 %v599, %v622
        %624 = vrot.lane.b32.xlu0 %v562, 127
        %v625 = vpop.permute.xlu0 %624
        %626 = vrot.lane.b32.xlu0 %v563, 127
        %v627 = vpop.permute.xlu0 %626
        %v628 = vsel %vm371, %v625, %v627
        %v629 = vsel %vm371, %v627, %v625
        %s630 = sld [smem:[#allocation2 + $0x12]]
        %v633 = vrot.slane %v629, 6
        %v634 = vsel %vm297, %v628, %v633
        %v635 = vrot.slane %v634, 7
        %v637 = vsel %vm278, %v635, 0.0
        %v638 = vstv %s630
        %v639 = vmul.f32 %v638, %v637
        %v640 = vadd.f32 %v616, %v639
        %641 = vrot.lane.b32.xlu0 %v562, 126
        %v642 = vpop.permute.xlu0 %641
        %643 = vrot.lane.b32.xlu0 %v563, 126
        %v644 = vpop.permute.xlu0 %643
        %v645 = vsel %vm389, %v642, %v644
        %v646 = vsel %vm389, %v644, %v642
        %s647 = sld [smem:[#allocation2 + $0x13]]
        %v650 = vrot.slane %v646, 6
        %v651 = vsel %vm297, %v645, %v650
        %v652 = vrot.slane %v651, 7
        %v654 = vsel %vm281, %v652, 0.0
        %v655 = vstv %s647
        %v656 = vmul.f32 %v655, %v654
        %v657 = vadd.f32 %v623, %v656
        %658 = vrot.lane.b32.xlu0 %v562, 125
        %v659 = vpop.permute.xlu0 %658
        %660 = vrot.lane.b32.xlu0 %v563, 125
        %v661 = vpop.permute.xlu0 %660
        %v662 = vsel %vm407, %v659, %v661
        %v663 = vsel %vm407, %v661, %v659
        %s664 = sld [smem:[#allocation2 + $0x14]]
        %v667 = vrot.slane %v663, 6
        %v668 = vsel %vm297, %v662, %v667
        %v669 = vrot.slane %v668, 7
        %v671 = vsel %vm284, %v669, 0.0
        %v672 = vstv %s664
        %v673 = vmul.f32 %v672, %v671
        %v674 = vadd.f32 %v640, %v673
        %v677 = vrot.slane %v262, 6
        %v678 = vsel %vm297, %v261, %v677
        %v680 = vsel %vm275, %v678, 0.0
        %v682 = vperm.slane %v680, 0
        %v683 = vperm.slane %v680, 2
        %686 = vrot.lane.b32.xlu0 %v682, 3
        %v687 = vpop.permute.xlu0 %686
        %688 = vrot.lane.b32.xlu0 %v683, 3
        %v689 = vpop.permute.xlu0 %688
        %v690 = vsel %vm310, %v687, %v689
        %v691 = vsel %vm310, %v689, %v687
        %s692 = sld [smem:[#allocation2 + $0x15]]
        %v695 = vrot.slane %v690, 6
        %v696 = vsel %vm297, %v691, %v695
        %v697 = vrot.slane %v696, 7
        %v699 = vsel %vm266, %v697, 0.0
        %v700 = vstv %s692
        %v701 = vmul.f32 %v700, %v699
        %v702 = vadd.f32 %v657, %v701
        %703 = vrot.lane.b32.xlu0 %v682, 2
        %v704 = vpop.permute.xlu0 %703
        %705 = vrot.lane.b32.xlu0 %v683, 2
        %v706 = vpop.permute.xlu0 %705
        %v707 = vsel %vm328, %v704, %v706
        %v708 = vsel %vm328, %v706, %v704
        %s709 = sld [smem:[#allocation2 + $0x16]]
        %v712 = vrot.slane %v707, 6
        %v713 = vsel %vm297, %v708, %v712
        %v714 = vrot.slane %v713, 7
        %v716 = vsel %vm269, %v714, 0.0
        %v717 = vstv %s709
        %v718 = vmul.f32 %v717, %v716
        %v719 = vadd.f32 %v674, %v718
        %720 = vrot.lane.b32.xlu0 %v682, 1
        %v721 = vpop.permute.xlu0 %720
        %722 = vrot.lane.b32.xlu0 %v683, 1
        %v723 = vpop.permute.xlu0 %722
        %v724 = vsel %vm346, %v721, %v723
        %v725 = vsel %vm346, %v723, %v721
        %s726 = sld [smem:[#allocation2 + $0x17]]
        %v729 = vrot.slane %v724, 6
        %v730 = vsel %vm297, %v725, %v729
        %v731 = vrot.slane %v730, 7
        %v733 = vsel %vm272, %v731, 0.0
        %v734 = vstv %s726
        %v735 = vmul.f32 %v734, %v733
        %v736 = vadd.f32 %v702, %v735
        %s737 = sld [smem:[#allocation2 + $0x18]]
        %v738 = vrot.slane %v680, 7
        %v740 = vsel %vm275, %v738, 0.0
        %v741 = vstv %s737
        %v742 = vmul.f32 %v741, %v740
        %v743 = vadd.f32 %v719, %v742
        %744 = vrot.lane.b32.xlu0 %v682, 127
        %v745 = vpop.permute.xlu0 %744
        %746 = vrot.lane.b32.xlu0 %v683, 127
        %v747 = vpop.permute.xlu0 %746
        %v748 = vsel %vm371, %v745, %v747
        %v749 = vsel %vm371, %v747, %v745
        %s750 = sld [smem:[#allocation2 + $0x19]]
        %v753 = vrot.slane %v749, 6
        %v754 = vsel %vm297, %v748, %v753
        %v755 = vrot.slane %v754, 7
        %v757 = vsel %vm278, %v755, 0.0
        %v758 = vstv %s750
        %v759 = vmul.f32 %v758, %v757
        %v760 = vadd.f32 %v736, %v759
        %761 = vrot.lane.b32.xlu0 %v682, 126
        %v762 = vpop.permute.xlu0 %761
        %763 = vrot.lane.b32.xlu0 %v683, 126
        %v764 = vpop.permute.xlu0 %763
        %v765 = vsel %vm389, %v762, %v764
        %v766 = vsel %vm389, %v764, %v762
        %s767 = sld [smem:[#allocation2 + $0x1a]]
        %v770 = vrot.slane %v766, 6
        %v771 = vsel %vm297, %v765, %v770
        %v772 = vrot.slane %v771, 7
        %v774 = vsel %vm281, %v772, 0.0
        %v775 = vstv %s767
        %v776 = vmul.f32 %v775, %v774
        %v777 = vadd.f32 %v743, %v776
        %778 = vrot.lane.b32.xlu0 %v682, 125
        %v779 = vpop.permute.xlu0 %778
        %780 = vrot.lane.b32.xlu0 %v683, 125
        %v781 = vpop.permute.xlu0 %780
        %v782 = vsel %vm407, %v779, %v781
        %v783 = vsel %vm407, %v781, %v779
        %s784 = sld [smem:[#allocation2 + $0x1b]]
        %v787 = vrot.slane %v783, 6
        %v788 = vsel %vm297, %v782, %v787
        %v789 = vrot.slane %v788, 7
        %v791 = vsel %vm284, %v789, 0.0
        %v792 = vstv %s784
        %v793 = vmul.f32 %v792, %v791
        %v794 = vadd.f32 %v760, %v793
        %795 = vrot.lane.b32.xlu0 %v261, 112
        %v796 = vpop.permute.xlu0 %795
        %797 = vrot.lane.b32.xlu0 %v262, 112
        %v798 = vpop.permute.xlu0 %797
        %vm799 = vcmp.lt.s32.totalorder %v290, 112
        %v800 = vsel %vm799, %v796, %v798
        %v801 = vsel %vm799, %v798, %v796
        %v804 = vrot.slane %v801, 6
        %v805 = vsel %vm297, %v800, %v804
        %v807 = vsel %vm278, %v805, 0.0
        %v809 = vperm.slane %v807, 0
        %v810 = vperm.slane %v807, 2
        %813 = vrot.lane.b32.xlu0 %v809, 3
        %v814 = vpop.permute.xlu0 %813
        %815 = vrot.lane.b32.xlu0 %v810, 3
        %v816 = vpop.permute.xlu0 %815
        %v817 = vsel %vm310, %v814, %v816
        %v818 = vsel %vm310, %v816, %v814
        %s819 = sld [smem:[#allocation2 + $0x1c]]
        %v822 = vrot.slane %v817, 6
        %v823 = vsel %vm297, %v818, %v822
        %v824 = vrot.slane %v823, 7
        %v826 = vsel %vm266, %v824, 0.0
        %v827 = vstv %s819
        %v828 = vmul.f32 %v827, %v826
        %v829 = vadd.f32 %v777, %v828
        %830 = vrot.lane.b32.xlu0 %v809, 2
        %v831 = vpop.permute.xlu0 %830
        %832 = vrot.lane.b32.xlu0 %v810, 2
        %v833 = vpop.permute.xlu0 %832
        %v834 = vsel %vm328, %v831, %v833
        %v835 = vsel %vm328, %v833, %v831
        %s836 = sld [smem:[#allocation2 + $0x1d]]
        %v839 = vrot.slane %v834, 6
        %v840 = vsel %vm297, %v835, %v839
        %v841 = vrot.slane %v840, 7
        %v843 = vsel %vm269, %v841, 0.0
        %v844 = vstv %s836
        %v845 = vmul.f32 %v844, %v843
        %v846 = vadd.f32 %v794, %v845
        %847 = vrot.lane.b32.xlu0 %v809, 1
        %v848 = vpop.permute.xlu0 %847
        %849 = vrot.lane.b32.xlu0 %v810, 1
        %v850 = vpop.permute.xlu0 %849
        %v851 = vsel %vm346, %v848, %v850
        %v852 = vsel %vm346, %v850, %v848
        %s853 = sld [smem:[#allocation2 + $0x1e]]
        %v856 = vrot.slane %v851, 6
        %v857 = vsel %vm297, %v852, %v856
        %v858 = vrot.slane %v857, 7
        %v860 = vsel %vm272, %v858, 0.0
        %v861 = vstv %s853
        %v862 = vmul.f32 %v861, %v860
        %v863 = vadd.f32 %v829, %v862
        %s864 = sld [smem:[#allocation2 + $0x1f]]
        %v865 = vrot.slane %v807, 7
        %v867 = vsel %vm275, %v865, 0.0
        %v868 = vstv %s864
        %v869 = vmul.f32 %v868, %v867
        %v870 = vadd.f32 %v846, %v869
        %871 = vrot.lane.b32.xlu0 %v809, 127
        %v872 = vpop.permute.xlu0 %871
        %873 = vrot.lane.b32.xlu0 %v810, 127
        %v874 = vpop.permute.xlu0 %873
        %v875 = vsel %vm371, %v872, %v874
        %v876 = vsel %vm371, %v874, %v872
        %s877 = sld [smem:[#allocation2 + $0x20]]
        %v880 = vrot.slane %v876, 6
        %v881 = vsel %vm297, %v875, %v880
        %v882 = vrot.slane %v881, 7
        %v884 = vsel %vm278, %v882, 0.0
        %v885 = vstv %s877
        %v886 = vmul.f32 %v885, %v884
        %v887 = vadd.f32 %v863, %v886
        %888 = vrot.lane.b32.xlu0 %v809, 126
        %v889 = vpop.permute.xlu0 %888
        %890 = vrot.lane.b32.xlu0 %v810, 126
        %v891 = vpop.permute.xlu0 %890
        %v892 = vsel %vm389, %v889, %v891
        %v893 = vsel %vm389, %v891, %v889
        %s894 = sld [smem:[#allocation2 + $0x21]]
        %v897 = vrot.slane %v893, 6
        %v898 = vsel %vm297, %v892, %v897
        %v899 = vrot.slane %v898, 7
        %v901 = vsel %vm281, %v899, 0.0
        %v902 = vstv %s894
        %v903 = vmul.f32 %v902, %v901
        %v904 = vadd.f32 %v870, %v903
        %905 = vrot.lane.b32.xlu0 %v809, 125
        %v906 = vpop.permute.xlu0 %905
        %907 = vrot.lane.b32.xlu0 %v810, 125
        %v908 = vpop.permute.xlu0 %907
        %v909 = vsel %vm407, %v906, %v908
        %v910 = vsel %vm407, %v908, %v906
        %s911 = sld [smem:[#allocation2 + $0x22]]
        %v914 = vrot.slane %v910, 6
        %v915 = vsel %vm297, %v909, %v914
        %v916 = vrot.slane %v915, 7
        %v918 = vsel %vm284, %v916, 0.0
        %v919 = vstv %s911
        %v920 = vmul.f32 %v919, %v918
        %v921 = vadd.f32 %v887, %v920
        %922 = vrot.lane.b32.xlu0 %v261, 96
        %v923 = vpop.permute.xlu0 %922
        %924 = vrot.lane.b32.xlu0 %v262, 96
        %v925 = vpop.permute.xlu0 %924
        %vm926 = vcmp.lt.s32.totalorder %v290, 96
        %v927 = vsel %vm926, %v923, %v925
        %v928 = vsel %vm926, %v925, %v923
        %v931 = vrot.slane %v928, 6
        %v932 = vsel %vm297, %v927, %v931
        %v934 = vsel %vm281, %v932, 0.0
        %v936 = vperm.slane %v934, 0
        %v937 = vperm.slane %v934, 2
        %940 = vrot.lane.b32.xlu0 %v936, 3
        %v941 = vpop.permute.xlu0 %940
        %942 = vrot.lane.b32.xlu0 %v937, 3
        %v943 = vpop.permute.xlu0 %942
        %v944 = vsel %vm310, %v941, %v943
        %v945 = vsel %vm310, %v943, %v941
        %s946 = sld [smem:[#allocation2 + $0x23]]
        %v949 = vrot.slane %v944, 6
        %v950 = vsel %vm297, %v945, %v949
        %v951 = vrot.slane %v950, 7
        %v953 = vsel %vm266, %v951, 0.0
        %v954 = vstv %s946
        %v955 = vmul.f32 %v954, %v953
        %v956 = vadd.f32 %v904, %v955
        %957 = vrot.lane.b32.xlu0 %v936, 2
        %v958 = vpop.permute.xlu0 %957
        %959 = vrot.lane.b32.xlu0 %v937, 2
        %v960 = vpop.permute.xlu0 %959
        %v961 = vsel %vm328, %v958, %v960
        %v962 = vsel %vm328, %v960, %v958
        %s963 = sld [smem:[#allocation2 + $0x24]]
        %v966 = vrot.slane %v961, 6
        %v967 = vsel %vm297, %v962, %v966
        %v968 = vrot.slane %v967, 7
        %v970 = vsel %vm269, %v968, 0.0
        %v971 = vstv %s963
        %v972 = vmul.f32 %v971, %v970
        %v973 = vadd.f32 %v921, %v972
        %974 = vrot.lane.b32.xlu0 %v936, 1
        %v975 = vpop.permute.xlu0 %974
        %976 = vrot.lane.b32.xlu0 %v937, 1
        %v977 = vpop.permute.xlu0 %976
        %v978 = vsel %vm346, %v975, %v977
        %v979 = vsel %vm346, %v977, %v975
        %s980 = sld [smem:[#allocation2 + $0x25]]
        %v983 = vrot.slane %v978, 6
        %v984 = vsel %vm297, %v979, %v983
        %v985 = vrot.slane %v984, 7
        %v987 = vsel %vm272, %v985, 0.0
        %v988 = vstv %s980
        %v989 = vmul.f32 %v988, %v987
        %v990 = vadd.f32 %v956, %v989
        %s991 = sld [smem:[#allocation2 + $0x26]]
        %v992 = vrot.slane %v934, 7
        %v994 = vsel %vm275, %v992, 0.0
        %v995 = vstv %s991
        %v996 = vmul.f32 %v995, %v994
        %v997 = vadd.f32 %v973, %v996
        %998 = vrot.lane.b32.xlu0 %v936, 127
        %v999 = vpop.permute.xlu0 %998
        %1000 = vrot.lane.b32.xlu0 %v937, 127
        %v1001 = vpop.permute.xlu0 %1000
        %v1002 = vsel %vm371, %v999, %v1001
        %v1003 = vsel %vm371, %v1001, %v999
        %s1004 = sld [smem:[#allocation2 + $0x27]]
        %v1007 = vrot.slane %v1003, 6
        %v1008 = vsel %vm297, %v1002, %v1007
        %v1009 = vrot.slane %v1008, 7
        %v1011 = vsel %vm278, %v1009, 0.0
        %v1012 = vstv %s1004
        %v1013 = vmul.f32 %v1012, %v1011
        %v1014 = vadd.f32 %v990, %v1013
        %1015 = vrot.lane.b32.xlu0 %v936, 126
        %v1016 = vpop.permute.xlu0 %1015
        %1017 = vrot.lane.b32.xlu0 %v937, 126
        %v1018 = vpop.permute.xlu0 %1017
        %v1019 = vsel %vm389, %v1016, %v1018
        %v1020 = vsel %vm389, %v1018, %v1016
        %s1021 = sld [smem:[#allocation2 + $0x28]]
        %v1024 = vrot.slane %v1020, 6
        %v1025 = vsel %vm297, %v1019, %v1024
        %v1026 = vrot.slane %v1025, 7
        %v1028 = vsel %vm281, %v1026, 0.0
        %v1029 = vstv %s1021
        %v1030 = vmul.f32 %v1029, %v1028
        %v1031 = vadd.f32 %v997, %v1030
        %1032 = vrot.lane.b32.xlu0 %v936, 125
        %v1033 = vpop.permute.xlu0 %1032
        %1034 = vrot.lane.b32.xlu0 %v937, 125
        %v1035 = vpop.permute.xlu0 %1034
        %v1036 = vsel %vm407, %v1033, %v1035
        %v1037 = vsel %vm407, %v1035, %v1033
        %s1038 = sld [smem:[#allocation2 + $0x29]]
        %v1041 = vrot.slane %v1037, 6
        %v1042 = vsel %vm297, %v1036, %v1041
        %v1043 = vrot.slane %v1042, 7
        %v1045 = vsel %vm284, %v1043, 0.0
        %v1046 = vstv %s1038
        %v1047 = vmul.f32 %v1046, %v1045
        %v1048 = vadd.f32 %v1014, %v1047
        %1049 = vrot.lane.b32.xlu0 %v261, 80
        %v1050 = vpop.permute.xlu0 %1049
        %1051 = vrot.lane.b32.xlu0 %v262, 80
        %v1052 = vpop.permute.xlu0 %1051
        %vm1053 = vcmp.lt.s32.totalorder %v290, 80
        %v1054 = vsel %vm1053, %v1050, %v1052
        %v1055 = vsel %vm1053, %v1052, %v1050
        %v1058 = vrot.slane %v1055, 6
        %v1059 = vsel %vm297, %v1054, %v1058
        %v1061 = vsel %vm284, %v1059, 0.0
        %v1063 = vperm.slane %v1061, 0
        %v1064 = vperm.slane %v1061, 2
        %1067 = vrot.lane.b32.xlu0 %v1063, 3
        %v1068 = vpop.permute.xlu0 %1067
        %1069 = vrot.lane.b32.xlu0 %v1064, 3
        %v1070 = vpop.permute.xlu0 %1069
        %v1071 = vsel %vm310, %v1068, %v1070
        %v1072 = vsel %vm310, %v1070, %v1068
        %s1073 = sld [smem:[#allocation2 + $0x2a]]
        %v1076 = vrot.slane %v1071, 6
        %v1077 = vsel %vm297, %v1072, %v1076
        %v1078 = vrot.slane %v1077, 7
        %v1080 = vsel %vm266, %v1078, 0.0
        %v1081 = vstv %s1073
        %v1082 = vmul.f32 %v1081, %v1080
        %v1083 = vadd.f32 %v1031, %v1082
        %1084 = vrot.lane.b32.xlu0 %v1063, 2
        %v1085 = vpop.permute.xlu0 %1084
        %1086 = vrot.lane.b32.xlu0 %v1064, 2
        %v1087 = vpop.permute.xlu0 %1086
        %v1088 = vsel %vm328, %v1085, %v1087
        %v1089 = vsel %vm328, %v1087, %v1085
        %s1090 = sld [smem:[#allocation2 + $0x2b]]
        %v1093 = vrot.slane %v1088, 6
        %v1094 = vsel %vm297, %v1089, %v1093
        %v1095 = vrot.slane %v1094, 7
        %v1097 = vsel %vm269, %v1095, 0.0
        %v1098 = vstv %s1090
        %v1099 = vmul.f32 %v1098, %v1097
        %v1100 = vadd.f32 %v1048, %v1099
        %1101 = vrot.lane.b32.xlu0 %v1063, 1
        %v1102 = vpop.permute.xlu0 %1101
        %1103 = vrot.lane.b32.xlu0 %v1064, 1
        %v1104 = vpop.permute.xlu0 %1103
        %v1105 = vsel %vm346, %v1102, %v1104
        %v1106 = vsel %vm346, %v1104, %v1102
        %s1107 = sld [smem:[#allocation2 + $0x2c]]
        %v1110 = vrot.slane %v1105, 6
        %v1111 = vsel %vm297, %v1106, %v1110
        %v1112 = vrot.slane %v1111, 7
        %v1114 = vsel %vm272, %v1112, 0.0
        %v1115 = vstv %s1107
        %v1116 = vmul.f32 %v1115, %v1114
        %v1117 = vadd.f32 %v1083, %v1116
        %s1118 = sld [smem:[#allocation2 + $0x2d]]
        %v1119 = vrot.slane %v1061, 7
        %v1121 = vsel %vm275, %v1119, 0.0
        %v1122 = vstv %s1118
        %v1123 = vmul.f32 %v1122, %v1121
        %v1124 = vadd.f32 %v1100, %v1123
        %1125 = vrot.lane.b32.xlu0 %v1063, 127
        %v1126 = vpop.permute.xlu0 %1125
        %1127 = vrot.lane.b32.xlu0 %v1064, 127
        %v1128 = vpop.permute.xlu0 %1127
        %v1129 = vsel %vm371, %v1126, %v1128
        %v1130 = vsel %vm371, %v1128, %v1126
        %s1131 = sld [smem:[#allocation2 + $0x2e]]
        %v1134 = vrot.slane %v1130, 6
        %v1135 = vsel %vm297, %v1129, %v1134
        %v1136 = vrot.slane %v1135, 7
        %v1138 = vsel %vm278, %v1136, 0.0
        %v1139 = vstv %s1131
        %v1140 = vmul.f32 %v1139, %v1138
        %v1141 = vadd.f32 %v1117, %v1140
        %1142 = vrot.lane.b32.xlu0 %v1063, 126
        %v1143 = vpop.permute.xlu0 %1142
        %1144 = vrot.lane.b32.xlu0 %v1064, 126
        %v1145 = vpop.permute.xlu0 %1144
        %v1146 = vsel %vm389, %v1143, %v1145
        %v1147 = vsel %vm389, %v1145, %v1143
        %s1148 = sld [smem:[#allocation2 + $0x2f]]
        %v1151 = vrot.slane %v1147, 6
        %v1152 = vsel %vm297, %v1146, %v1151
        %v1153 = vrot.slane %v1152, 7
        %v1155 = vsel %vm281, %v1153, 0.0
        %v1156 = vstv %s1148
        %v1157 = vmul.f32 %v1156, %v1155
        %v1158 = vadd.f32 %v1124, %v1157
        %1159 = vrot.lane.b32.xlu0 %v1063, 125
        %v1160 = vpop.permute.xlu0 %1159
        %1161 = vrot.lane.b32.xlu0 %v1064, 125
        %v1162 = vpop.permute.xlu0 %1161
        %v1163 = vsel %vm407, %v1160, %v1162
        %v1164 = vsel %vm407, %v1162, %v1160
        %s1165 = sld [smem:[#allocation2 + $0x30]]
        %v1168 = vrot.slane %v1164, 6
        %v1169 = vsel %vm297, %v1163, %v1168
        %v1170 = vrot.slane %v1169, 7
        %v1172 = vsel %vm284, %v1170, 0.0
        %v1173 = vstv %s1165
        %v1174 = vmul.f32 %v1173, %v1172
        %v1175 = vadd.f32 %v1141, %v1174
        %1176 = vrot.lane.b32.xlu0 %v253, 48
        %v1177 = vpop.permute.xlu0 %1176
        %1178 = vrot.lane.b32.xlu0 %v260, 48
        %v1179 = vpop.permute.xlu0 %1178
        %v1180 = vsel %vm291, %v1177, %v1179
        %v1181 = vsel %vm291, %v1179, %v1177
        %v1184 = vrot.slane %v1180, 6
        %v1185 = vsel %vm297, %v1181, %v1184
        %v1187 = vsel %vm266, %v1185, 0.0
        %v1189 = vperm.slane %v1187, 0
        %v1190 = vperm.slane %v1187, 2
        %1193 = vrot.lane.b32.xlu0 %v1189, 3
        %v1194 = vpop.permute.xlu0 %1193
        %1195 = vrot.lane.b32.xlu0 %v1190, 3
        %v1196 = vpop.permute.xlu0 %1195
        %v1197 = vsel %vm310, %v1194, %v1196
        %v1198 = vsel %vm310, %v1196, %v1194
        %s1199 = sld [smem:[#allocation2 + $0x31]]
        %v1202 = vrot.slane %v1197, 6
        %v1203 = vsel %vm297, %v1198, %v1202
        %v1204 = vrot.slane %v1203, 7
        %v1206 = vsel %vm266, %v1204, 0.0
        %v1207 = vstv %s1199
        %v1208 = vmul.f32 %v1207, %v1206
        %v1209 = vadd.f32 %v1158, %v1208
        %1210 = vrot.lane.b32.xlu0 %v1189, 2
        %v1211 = vpop.permute.xlu0 %1210
        %1212 = vrot.lane.b32.xlu0 %v1190, 2
        %v1213 = vpop.permute.xlu0 %1212
        %v1214 = vsel %vm328, %v1211, %v1213
        %v1215 = vsel %vm328, %v1213, %v1211
        %s1216 = sld [smem:[#allocation2 + $0x32]]
        %v1219 = vrot.slane %v1214, 6
        %v1220 = vsel %vm297, %v1215, %v1219
        %v1221 = vrot.slane %v1220, 7
        %v1223 = vsel %vm269, %v1221, 0.0
        %v1224 = vstv %s1216
        %v1225 = vmul.f32 %v1224, %v1223
        %v1226 = vadd.f32 %v1175, %v1225
        %1227 = vrot.lane.b32.xlu0 %v1189, 1
        %v1228 = vpop.permute.xlu0 %1227
        %1229 = vrot.lane.b32.xlu0 %v1190, 1
        %v1230 = vpop.permute.xlu0 %1229
        %v1231 = vsel %vm346, %v1228, %v1230
        %v1232 = vsel %vm346, %v1230, %v1228
        %s1233 = sld [smem:[#allocation2 + $0x33]]
        %v1236 = vrot.slane %v1231, 6
        %v1237 = vsel %vm297, %v1232, %v1236
        %v1238 = vrot.slane %v1237, 7
        %v1240 = vsel %vm272, %v1238, 0.0
        %v1241 = vstv %s1233
        %v1242 = vmul.f32 %v1241, %v1240
        %v1243 = vadd.f32 %v1209, %v1242
        %s1244 = sld [smem:[#allocation2 + $0x34]]
        %v1245 = vrot.slane %v1187, 7
        %v1247 = vsel %vm275, %v1245, 0.0
        %v1248 = vstv %s1244
        %v1249 = vmul.f32 %v1248, %v1247
        %v1250 = vadd.f32 %v1226, %v1249
        %1251 = vrot.lane.b32.xlu0 %v1189, 127
        %v1252 = vpop.permute.xlu0 %1251
        %1253 = vrot.lane.b32.xlu0 %v1190, 127
        %v1254 = vpop.permute.xlu0 %1253
        %v1255 = vsel %vm371, %v1252, %v1254
        %v1256 = vsel %vm371, %v1254, %v1252
        %s1257 = sld [smem:[#allocation2 + $0x35]]
        %v1260 = vrot.slane %v1256, 6
        %v1261 = vsel %vm297, %v1255, %v1260
        %v1262 = vrot.slane %v1261, 7
        %v1264 = vsel %vm278, %v1262, 0.0
        %v1265 = vstv %s1257
        %v1266 = vmul.f32 %v1265, %v1264
        %v1267 = vadd.f32 %v1243, %v1266
        %1268 = vrot.lane.b32.xlu0 %v1189, 126
        %v1269 = vpop.permute.xlu0 %1268
        %1270 = vrot.lane.b32.xlu0 %v1190, 126
        %v1271 = vpop.permute.xlu0 %1270
        %v1272 = vsel %vm389, %v1269, %v1271
        %v1273 = vsel %vm389, %v1271, %v1269
        %s1274 = sld [smem:[#allocation2 + $0x36]]
        %v1277 = vrot.slane %v1273, 6
        %v1278 = vsel %vm297, %v1272, %v1277
        %v1279 = vrot.slane %v1278, 7
        %v1281 = vsel %vm281, %v1279, 0.0
        %v1282 = vstv %s1274
        %v1283 = vmul.f32 %v1282, %v1281
        %v1284 = vadd.f32 %v1250, %v1283
        %1285 = vrot.lane.b32.xlu0 %v1189, 125
        %v1286 = vpop.permute.xlu0 %1285
        %1287 = vrot.lane.b32.xlu0 %v1190, 125
        %v1288 = vpop.permute.xlu0 %1287
        %v1289 = vsel %vm407, %v1286, %v1288
        %v1290 = vsel %vm407, %v1288, %v1286
        %s1291 = sld [smem:[#allocation2 + $0x37]]
        %v1294 = vrot.slane %v1290, 6
        %v1295 = vsel %vm297, %v1289, %v1294
        %v1296 = vrot.slane %v1295, 7
        %v1298 = vsel %vm284, %v1296, 0.0
        %v1299 = vstv %s1291
        %v1300 = vmul.f32 %v1299, %v1298
        %v1301 = vadd.f32 %v1267, %v1300
        %1302 = vrot.lane.b32.xlu0 %v253, 32
        %v1303 = vpop.permute.xlu0 %1302
        %1304 = vrot.lane.b32.xlu0 %v260, 32
        %v1305 = vpop.permute.xlu0 %1304
        %v1306 = vsel %vm425, %v1303, %v1305
        %v1307 = vsel %vm425, %v1305, %v1303
        %v1310 = vrot.slane %v1306, 6
        %v1311 = vsel %vm297, %v1307, %v1310
        %v1313 = vsel %vm269, %v1311, 0.0
        %v1315 = vperm.slane %v1313, 0
        %v1316 = vperm.slane %v1313, 2
        %1319 = vrot.lane.b32.xlu0 %v1315, 3
        %v1320 = vpop.permute.xlu0 %1319
        %1321 = vrot.lane.b32.xlu0 %v1316, 3
        %v1322 = vpop.permute.xlu0 %1321
        %v1323 = vsel %vm310, %v1320, %v1322
        %v1324 = vsel %vm310, %v1322, %v1320
        %s1325 = sld [smem:[#allocation2 + $0x38]]
        %v1328 = vrot.slane %v1323, 6
        %v1329 = vsel %vm297, %v1324, %v1328
        %v1330 = vrot.slane %v1329, 7
        %v1332 = vsel %vm266, %v1330, 0.0
        %v1333 = vstv %s1325
        %v1334 = vmul.f32 %v1333, %v1332
        %v1335 = vadd.f32 %v1284, %v1334
        %1336 = vrot.lane.b32.xlu0 %v1315, 2
        %v1337 = vpop.permute.xlu0 %1336
        %1338 = vrot.lane.b32.xlu0 %v1316, 2
        %v1339 = vpop.permute.xlu0 %1338
        %v1340 = vsel %vm328, %v1337, %v1339
        %v1341 = vsel %vm328, %v1339, %v1337
        %s1342 = sld [smem:[#allocation2 + $0x39]]
        %v1345 = vrot.slane %v1340, 6
        %v1346 = vsel %vm297, %v1341, %v1345
        %v1347 = vrot.slane %v1346, 7
        %v1349 = vsel %vm269, %v1347, 0.0
        %v1350 = vstv %s1342
        %v1351 = vmul.f32 %v1350, %v1349
        %v1352 = vadd.f32 %v1301, %v1351
        %1353 = vrot.lane.b32.xlu0 %v1315, 1
        %v1354 = vpop.permute.xlu0 %1353
        %1355 = vrot.lane.b32.xlu0 %v1316, 1
        %v1356 = vpop.permute.xlu0 %1355
        %v1357 = vsel %vm346, %v1354, %v1356
        %v1358 = vsel %vm346, %v1356, %v1354
        %s1359 = sld [smem:[#allocation2 + $0x3a]]
        %v1362 = vrot.slane %v1357, 6
        %v1363 = vsel %vm297, %v1358, %v1362
        %v1364 = vrot.slane %v1363, 7
        %v1366 = vsel %vm272, %v1364, 0.0
        %v1367 = vstv %s1359
        %v1368 = vmul.f32 %v1367, %v1366
        %v1369 = vadd.f32 %v1335, %v1368
        %s1370 = sld [smem:[#allocation2 + $0x3b]]
        %v1371 = vrot.slane %v1313, 7
        %v1373 = vsel %vm275, %v1371, 0.0
        %v1374 = vstv %s1370
        %v1375 = vmul.f32 %v1374, %v1373
        %v1376 = vadd.f32 %v1352, %v1375
        %1377 = vrot.lane.b32.xlu0 %v1315, 127
        %v1378 = vpop.permute.xlu0 %1377
        %1379 = vrot.lane.b32.xlu0 %v1316, 127
        %v1380 = vpop.permute.xlu0 %1379
        %v1381 = vsel %vm371, %v1378, %v1380
        %v1382 = vsel %vm371, %v1380, %v1378
        %s1383 = sld [smem:[#allocation2 + $0x3c]]
        %v1386 = vrot.slane %v1382, 6
        %v1387 = vsel %vm297, %v1381, %v1386
        %v1388 = vrot.slane %v1387, 7
        %v1390 = vsel %vm278, %v1388, 0.0
        %v1391 = vstv %s1383
        %v1392 = vmul.f32 %v1391, %v1390
        %v1393 = vadd.f32 %v1369, %v1392
        %1394 = vrot.lane.b32.xlu0 %v1315, 126
        %v1395 = vpop.permute.xlu0 %1394
        %1396 = vrot.lane.b32.xlu0 %v1316, 126
        %v1397 = vpop.permute.xlu0 %1396
        %v1398 = vsel %vm389, %v1395, %v1397
        %v1399 = vsel %vm389, %v1397, %v1395
        %s1400 = sld [smem:[#allocation2 + $0x3d]]
        %v1403 = vrot.slane %v1399, 6
        %v1404 = vsel %vm297, %v1398, %v1403
        %v1405 = vrot.slane %v1404, 7
        %v1407 = vsel %vm281, %v1405, 0.0
        %v1408 = vstv %s1400
        %v1409 = vmul.f32 %v1408, %v1407
        %v1410 = vadd.f32 %v1376, %v1409
        %1411 = vrot.lane.b32.xlu0 %v1315, 125
        %v1412 = vpop.permute.xlu0 %1411
        %1413 = vrot.lane.b32.xlu0 %v1316, 125
        %v1414 = vpop.permute.xlu0 %1413
        %v1415 = vsel %vm407, %v1412, %v1414
        %v1416 = vsel %vm407, %v1414, %v1412
        %s1417 = sld [smem:[#allocation2 + $0x3e]]
        %v1420 = vrot.slane %v1416, 6
        %v1421 = vsel %vm297, %v1415, %v1420
        %v1422 = vrot.slane %v1421, 7
        %v1424 = vsel %vm284, %v1422, 0.0
        %v1425 = vstv %s1417
        %v1426 = vmul.f32 %v1425, %v1424
        %v1427 = vadd.f32 %v1393, %v1426
        %1428 = vrot.lane.b32.xlu0 %v253, 16
        %v1429 = vpop.permute.xlu0 %1428
        %1430 = vrot.lane.b32.xlu0 %v260, 16
        %v1431 = vpop.permute.xlu0 %1430
        %v1432 = vsel %vm552, %v1429, %v1431
        %v1433 = vsel %vm552, %v1431, %v1429
        %v1436 = vrot.slane %v1432, 6
        %v1437 = vsel %vm297, %v1433, %v1436
        %v1439 = vsel %vm272, %v1437, 0.0
        %v1441 = vperm.slane %v1439, 0
        %v1442 = vperm.slane %v1439, 2
        %1445 = vrot.lane.b32.xlu0 %v1441, 3
        %v1446 = vpop.permute.xlu0 %1445
        %1447 = vrot.lane.b32.xlu0 %v1442, 3
        %v1448 = vpop.permute.xlu0 %1447
        %v1449 = vsel %vm310, %v1446, %v1448
        %v1450 = vsel %vm310, %v1448, %v1446
        %s1451 = sld [smem:[#allocation2 + $0x3f]]
        %v1454 = vrot.slane %v1449, 6
        %v1455 = vsel %vm297, %v1450, %v1454
        %v1456 = vrot.slane %v1455, 7
        %v1458 = vsel %vm266, %v1456, 0.0
        %v1459 = vstv %s1451
        %v1460 = vmul.f32 %v1459, %v1458
        %v1461 = vadd.f32 %v1410, %v1460
        %1462 = vrot.lane.b32.xlu0 %v1441, 2
        %v1463 = vpop.permute.xlu0 %1462
        %1464 = vrot.lane.b32.xlu0 %v1442, 2
        %v1465 = vpop.permute.xlu0 %1464
        %v1466 = vsel %vm328, %v1463, %v1465
        %v1467 = vsel %vm328, %v1465, %v1463
        %s1468 = sld [smem:[#allocation2 + $0x40]]
        %v1471 = vrot.slane %v1466, 6
        %v1472 = vsel %vm297, %v1467, %v1471
        %v1473 = vrot.slane %v1472, 7
        %v1475 = vsel %vm269, %v1473, 0.0
        %v1476 = vstv %s1468
        %v1477 = vmul.f32 %v1476, %v1475
        %v1478 = vadd.f32 %v1427, %v1477
        %1479 = vrot.lane.b32.xlu0 %v1441, 1
        %v1480 = vpop.permute.xlu0 %1479
        %1481 = vrot.lane.b32.xlu0 %v1442, 1
        %v1482 = vpop.permute.xlu0 %1481
        %v1483 = vsel %vm346, %v1480, %v1482
        %v1484 = vsel %vm346, %v1482, %v1480
        %s1485 = sld [smem:[#allocation2 + $0x41]]
        %v1488 = vrot.slane %v1483, 6
        %v1489 = vsel %vm297, %v1484, %v1488
        %v1490 = vrot.slane %v1489, 7
        %v1492 = vsel %vm272, %v1490, 0.0
        %v1493 = vstv %s1485
        %v1494 = vmul.f32 %v1493, %v1492
        %v1495 = vadd.f32 %v1461, %v1494
        %s1496 = sld [smem:[#allocation2 + $0x42]]
        %v1497 = vrot.slane %v1439, 7
        %v1499 = vsel %vm275, %v1497, 0.0
        %v1500 = vstv %s1496
        %v1501 = vmul.f32 %v1500, %v1499
        %v1502 = vadd.f32 %v1478, %v1501
        %1503 = vrot.lane.b32.xlu0 %v1441, 127
        %v1504 = vpop.permute.xlu0 %1503
        %1505 = vrot.lane.b32.xlu0 %v1442, 127
        %v1506 = vpop.permute.xlu0 %1505
        %v1507 = vsel %vm371, %v1504, %v1506
        %v1508 = vsel %vm371, %v1506, %v1504
        %s1509 = sld [smem:[#allocation2 + $0x43]]
        %v1512 = vrot.slane %v1508, 6
        %v1513 = vsel %vm297, %v1507, %v1512
        %v1514 = vrot.slane %v1513, 7
        %v1516 = vsel %vm278, %v1514, 0.0
        %v1517 = vstv %s1509
        %v1518 = vmul.f32 %v1517, %v1516
        %v1519 = vadd.f32 %v1495, %v1518
        %1520 = vrot.lane.b32.xlu0 %v1441, 126
        %v1521 = vpop.permute.xlu0 %1520
        %1522 = vrot.lane.b32.xlu0 %v1442, 126
        %v1523 = vpop.permute.xlu0 %1522
        %v1524 = vsel %vm389, %v1521, %v1523
        %v1525 = vsel %vm389, %v1523, %v1521
        %s1526 = sld [smem:[#allocation2 + $0x44]]
        %v1529 = vrot.slane %v1525, 6
        %v1530 = vsel %vm297, %v1524, %v1529
        %v1531 = vrot.slane %v1530, 7
        %v1533 = vsel %vm281, %v1531, 0.0
        %v1534 = vstv %s1526
        %v1535 = vmul.f32 %v1534, %v1533
        %v1536 = vadd.f32 %v1502, %v1535
        %1537 = vrot.lane.b32.xlu0 %v1441, 125
        %v1538 = vpop.permute.xlu0 %1537
        %1539 = vrot.lane.b32.xlu0 %v1442, 125
        %v1540 = vpop.permute.xlu0 %1539
        %v1541 = vsel %vm407, %v1538, %v1540
        %v1542 = vsel %vm407, %v1540, %v1538
        %s1543 = sld [smem:[#allocation2 + $0x45]]
        %v1546 = vrot.slane %v1542, 6
        %v1547 = vsel %vm297, %v1541, %v1546
        %v1548 = vrot.slane %v1547, 7
        %v1550 = vsel %vm284, %v1548, 0.0
        %v1551 = vstv %s1543
        %v1552 = vmul.f32 %v1551, %v1550
        %v1553 = vadd.f32 %v1519, %v1552
        %v1556 = vrot.slane %v260, 6
        %v1557 = vsel %vm297, %v253, %v1556
        %v1559 = vsel %vm275, %v1557, 0.0
        %v1561 = vperm.slane %v1559, 0
        %v1562 = vperm.slane %v1559, 2
        %1565 = vrot.lane.b32.xlu0 %v1561, 3
        %v1566 = vpop.permute.xlu0 %1565
        %1567 = vrot.lane.b32.xlu0 %v1562, 3
        %v1568 = vpop.permute.xlu0 %1567
        %v1569 = vsel %vm310, %v1566, %v1568
        %v1570 = vsel %vm310, %v1568, %v1566
        %s1571 = sld [smem:[#allocation2 + $0x46]]
        %v1574 = vrot.slane %v1569, 6
        %v1575 = vsel %vm297, %v1570, %v1574
        %v1576 = vrot.slane %v1575, 7
        %v1578 = vsel %vm266, %v1576, 0.0
        %v1579 = vstv %s1571
        %v1580 = vmul.f32 %v1579, %v1578
        %v1581 = vadd.f32 %v1536, %v1580
        %1582 = vrot.lane.b32.xlu0 %v1561, 2
        %v1583 = vpop.permute.xlu0 %1582
        %1584 = vrot.lane.b32.xlu0 %v1562, 2
        %v1585 = vpop.permute.xlu0 %1584
        %v1586 = vsel %vm328, %v1583, %v1585
        %v1587 = vsel %vm328, %v1585, %v1583
        %s1588 = sld [smem:[#allocation2 + $0x47]]
        %v1591 = vrot.slane %v1586, 6
        %v1592 = vsel %vm297, %v1587, %v1591
        %v1593 = vrot.slane %v1592, 7
        %v1595 = vsel %vm269, %v1593, 0.0
        %v1596 = vstv %s1588
        %v1597 = vmul.f32 %v1596, %v1595
        %v1598 = vadd.f32 %v1553, %v1597
        %1599 = vrot.lane.b32.xlu0 %v1561, 1
        %v1600 = vpop.permute.xlu0 %1599
        %1601 = vrot.lane.b32.xlu0 %v1562, 1
        %v1602 = vpop.permute.xlu0 %1601
        %v1603 = vsel %vm346, %v1600, %v1602
        %v1604 = vsel %vm346, %v1602, %v1600
        %s1605 = sld [smem:[#allocation2 + $0x48]]
        %v1608 = vrot.slane %v1603, 6
        %v1609 = vsel %vm297, %v1604, %v1608
        %v1610 = vrot.slane %v1609, 7
        %v1612 = vsel %vm272, %v1610, 0.0
        %v1613 = vstv %s1605
        %v1614 = vmul.f32 %v1613, %v1612
        %v1615 = vadd.f32 %v1581, %v1614
        %s1616 = sld [smem:[#allocation2 + $0x49]]
        %v1617 = vrot.slane %v1559, 7
        %v1619 = vsel %vm275, %v1617, 0.0
        %v1620 = vstv %s1616
        %v1621 = vmul.f32 %v1620, %v1619
        %v1622 = vadd.f32 %v1598, %v1621
        %1623 = vrot.lane.b32.xlu0 %v1561, 127
        %v1624 = vpop.permute.xlu0 %1623
        %1625 = vrot.lane.b32.xlu0 %v1562, 127
        %v1626 = vpop.permute.xlu0 %1625
        %v1627 = vsel %vm371, %v1624, %v1626
        %v1628 = vsel %vm371, %v1626, %v1624
        %s1629 = sld [smem:[#allocation2 + $0x4a]]
        %v1632 = vrot.slane %v1628, 6
        %v1633 = vsel %vm297, %v1627, %v1632
        %v1634 = vrot.slane %v1633, 7
        %v1636 = vsel %vm278, %v1634, 0.0
        %v1637 = vstv %s1629
        %v1638 = vmul.f32 %v1637, %v1636
        %v1639 = vadd.f32 %v1615, %v1638
        %1640 = vrot.lane.b32.xlu0 %v1561, 126
        %v1641 = vpop.permute.xlu0 %1640
        %1642 = vrot.lane.b32.xlu0 %v1562, 126
        %v1643 = vpop.permute.xlu0 %1642
        %v1644 = vsel %vm389, %v1641, %v1643
        %v1645 = vsel %vm389, %v1643, %v1641
        %s1646 = sld [smem:[#allocation2 + $0x4b]]
        %v1649 = vrot.slane %v1645, 6
        %v1650 = vsel %vm297, %v1644, %v1649
        %v1651 = vrot.slane %v1650, 7
        %v1653 = vsel %vm281, %v1651, 0.0
        %v1654 = vstv %s1646
        %v1655 = vmul.f32 %v1654, %v1653
        %v1656 = vadd.f32 %v1622, %v1655
        %1657 = vrot.lane.b32.xlu0 %v1561, 125
        %v1658 = vpop.permute.xlu0 %1657
        %1659 = vrot.lane.b32.xlu0 %v1562, 125
        %v1660 = vpop.permute.xlu0 %1659
        %v1661 = vsel %vm407, %v1658, %v1660
        %v1662 = vsel %vm407, %v1660, %v1658
        %s1663 = sld [smem:[#allocation2 + $0x4c]]
        %v1666 = vrot.slane %v1662, 6
        %v1667 = vsel %vm297, %v1661, %v1666
        %v1668 = vrot.slane %v1667, 7
        %v1670 = vsel %vm284, %v1668, 0.0
        %v1671 = vstv %s1663
        %v1672 = vmul.f32 %v1671, %v1670
        %v1673 = vadd.f32 %v1639, %v1672
        %1674 = vrot.lane.b32.xlu0 %v253, 112
        %v1675 = vpop.permute.xlu0 %1674
        %1676 = vrot.lane.b32.xlu0 %v260, 112
        %v1677 = vpop.permute.xlu0 %1676
        %v1678 = vsel %vm799, %v1675, %v1677
        %v1679 = vsel %vm799, %v1677, %v1675
        %v1682 = vrot.slane %v1679, 6
        %v1683 = vsel %vm297, %v1678, %v1682
        %v1685 = vsel %vm278, %v1683, 0.0
        %v1687 = vperm.slane %v1685, 0
        %v1688 = vperm.slane %v1685, 2
        %1691 = vrot.lane.b32.xlu0 %v1687, 3
        %v1692 = vpop.permute.xlu0 %1691
        %1693 = vrot.lane.b32.xlu0 %v1688, 3
        %v1694 = vpop.permute.xlu0 %1693
        %v1695 = vsel %vm310, %v1692, %v1694
        %v1696 = vsel %vm310, %v1694, %v1692
        %s1697 = sld [smem:[#allocation2 + $0x4d]]
        %v1700 = vrot.slane %v1695, 6
        %v1701 = vsel %vm297, %v1696, %v1700
        %v1702 = vrot.slane %v1701, 7
        %v1704 = vsel %vm266, %v1702, 0.0
        %v1705 = vstv %s1697
        %v1706 = vmul.f32 %v1705, %v1704
        %v1707 = vadd.f32 %v1656, %v1706
        %1708 = vrot.lane.b32.xlu0 %v1687, 2
        %v1709 = vpop.permute.xlu0 %1708
        %1710 = vrot.lane.b32.xlu0 %v1688, 2
        %v1711 = vpop.permute.xlu0 %1710
        %v1712 = vsel %vm328, %v1709, %v1711
        %v1713 = vsel %vm328, %v1711, %v1709
        %s1714 = sld [smem:[#allocation2 + $0x4e]]
        %v1717 = vrot.slane %v1712, 6
        %v1718 = vsel %vm297, %v1713, %v1717
        %v1719 = vrot.slane %v1718, 7
        %v1721 = vsel %vm269, %v1719, 0.0
        %v1722 = vstv %s1714
        %v1723 = vmul.f32 %v1722, %v1721
        %v1724 = vadd.f32 %v1673, %v1723
        %1725 = vrot.lane.b32.xlu0 %v1687, 1
        %v1726 = vpop.permute.xlu0 %1725
        %1727 = vrot.lane.b32.xlu0 %v1688, 1
        %v1728 = vpop.permute.xlu0 %1727
        %v1729 = vsel %vm346, %v1726, %v1728
        %v1730 = vsel %vm346, %v1728, %v1726
        %s1731 = sld [smem:[#allocation2 + $0x4f]]
        %v1734 = vrot.slane %v1729, 6
        %v1735 = vsel %vm297, %v1730, %v1734
        %v1736 = vrot.slane %v1735, 7
        %v1738 = vsel %vm272, %v1736, 0.0
        %v1739 = vstv %s1731
        %v1740 = vmul.f32 %v1739, %v1738
        %v1741 = vadd.f32 %v1707, %v1740
        %s1742 = sld [smem:[#allocation2 + $0x50]]
        %v1743 = vrot.slane %v1685, 7
        %v1745 = vsel %vm275, %v1743, 0.0
        %v1746 = vstv %s1742
        %v1747 = vmul.f32 %v1746, %v1745
        %v1748 = vadd.f32 %v1724, %v1747
        %1749 = vrot.lane.b32.xlu0 %v1687, 127
        %v1750 = vpop.permute.xlu0 %1749
        %1751 = vrot.lane.b32.xlu0 %v1688, 127
        %v1752 = vpop.permute.xlu0 %1751
        %v1753 = vsel %vm371, %v1750, %v1752
        %v1754 = vsel %vm371, %v1752, %v1750
        %s1755 = sld [smem:[#allocation2 + $0x51]]
        %v1758 = vrot.slane %v1754, 6
        %v1759 = vsel %vm297, %v1753, %v1758
        %v1760 = vrot.slane %v1759, 7
        %v1762 = vsel %vm278, %v1760, 0.0
        %v1763 = vstv %s1755
        %v1764 = vmul.f32 %v1763, %v1762
        %v1765 = vadd.f32 %v1741, %v1764
        %1766 = vrot.lane.b32.xlu0 %v1687, 126
        %v1767 = vpop.permute.xlu0 %1766
        %1768 = vrot.lane.b32.xlu0 %v1688, 126
        %v1769 = vpop.permute.xlu0 %1768
        %v1770 = vsel %vm389, %v1767, %v1769
        %v1771 = vsel %vm389, %v1769, %v1767
        %s1772 = sld [smem:[#allocation2 + $0x52]]
        %v1775 = vrot.slane %v1771, 6
        %v1776 = vsel %vm297, %v1770, %v1775
        %v1777 = vrot.slane %v1776, 7
        %v1779 = vsel %vm281, %v1777, 0.0
        %v1780 = vstv %s1772
        %v1781 = vmul.f32 %v1780, %v1779
        %v1782 = vadd.f32 %v1748, %v1781
        %1783 = vrot.lane.b32.xlu0 %v1687, 125
        %v1784 = vpop.permute.xlu0 %1783
        %1785 = vrot.lane.b32.xlu0 %v1688, 125
        %v1786 = vpop.permute.xlu0 %1785
        %v1787 = vsel %vm407, %v1784, %v1786
        %v1788 = vsel %vm407, %v1786, %v1784
        %s1789 = sld [smem:[#allocation2 + $0x53]]
        %v1792 = vrot.slane %v1788, 6
        %v1793 = vsel %vm297, %v1787, %v1792
        %v1794 = vrot.slane %v1793, 7
        %v1796 = vsel %vm284, %v1794, 0.0
        %v1797 = vstv %s1789
        %v1798 = vmul.f32 %v1797, %v1796
        %v1799 = vadd.f32 %v1765, %v1798
        %1800 = vrot.lane.b32.xlu0 %v253, 96
        %v1801 = vpop.permute.xlu0 %1800
        %1802 = vrot.lane.b32.xlu0 %v260, 96
        %v1803 = vpop.permute.xlu0 %1802
        %v1804 = vsel %vm926, %v1801, %v1803
        %v1805 = vsel %vm926, %v1803, %v1801
        %v1808 = vrot.slane %v1805, 6
        %v1809 = vsel %vm297, %v1804, %v1808
        %v1811 = vsel %vm281, %v1809, 0.0
        %v1813 = vperm.slane %v1811, 0
        %v1814 = vperm.slane %v1811, 2
        %1817 = vrot.lane.b32.xlu0 %v1813, 3
        %v1818 = vpop.permute.xlu0 %1817
        %1819 = vrot.lane.b32.xlu0 %v1814, 3
        %v1820 = vpop.permute.xlu0 %1819
        %v1821 = vsel %vm310, %v1818, %v1820
        %v1822 = vsel %vm310, %v1820, %v1818
        %s1823 = sld [smem:[#allocation2 + $0x54]]
        %v1826 = vrot.slane %v1821, 6
        %v1827 = vsel %vm297, %v1822, %v1826
        %v1828 = vrot.slane %v1827, 7
        %v1830 = vsel %vm266, %v1828, 0.0
        %v1831 = vstv %s1823
        %v1832 = vmul.f32 %v1831, %v1830
        %v1833 = vadd.f32 %v1782, %v1832
        %1834 = vrot.lane.b32.xlu0 %v1813, 2
        %v1835 = vpop.permute.xlu0 %1834
        %1836 = vrot.lane.b32.xlu0 %v1814, 2
        %v1837 = vpop.permute.xlu0 %1836
        %v1838 = vsel %vm328, %v1835, %v1837
        %v1839 = vsel %vm328, %v1837, %v1835
        %s1840 = sld [smem:[#allocation2 + $0x55]]
        %v1843 = vrot.slane %v1838, 6
        %v1844 = vsel %vm297, %v1839, %v1843
        %v1845 = vrot.slane %v1844, 7
        %v1847 = vsel %vm269, %v1845, 0.0
        %v1848 = vstv %s1840
        %v1849 = vmul.f32 %v1848, %v1847
        %v1850 = vadd.f32 %v1799, %v1849
        %1851 = vrot.lane.b32.xlu0 %v1813, 1
        %v1852 = vpop.permute.xlu0 %1851
        %1853 = vrot.lane.b32.xlu0 %v1814, 1
        %v1854 = vpop.permute.xlu0 %1853
        %v1855 = vsel %vm346, %v1852, %v1854
        %v1856 = vsel %vm346, %v1854, %v1852
        %s1857 = sld [smem:[#allocation2 + $0x56]]
        %v1860 = vrot.slane %v1855, 6
        %v1861 = vsel %vm297, %v1856, %v1860
        %v1862 = vrot.slane %v1861, 7
        %v1864 = vsel %vm272, %v1862, 0.0
        %v1865 = vstv %s1857
        %v1866 = vmul.f32 %v1865, %v1864
        %v1867 = vadd.f32 %v1833, %v1866
        %s1868 = sld [smem:[#allocation2 + $0x57]]
        %v1869 = vrot.slane %v1811, 7
        %v1871 = vsel %vm275, %v1869, 0.0
        %v1872 = vstv %s1868
        %v1873 = vmul.f32 %v1872, %v1871
        %v1874 = vadd.f32 %v1850, %v1873
        %1875 = vrot.lane.b32.xlu0 %v1813, 127
        %v1876 = vpop.permute.xlu0 %1875
        %1877 = vrot.lane.b32.xlu0 %v1814, 127
        %v1878 = vpop.permute.xlu0 %1877
        %v1879 = vsel %vm371, %v1876, %v1878
        %v1880 = vsel %vm371, %v1878, %v1876
        %s1881 = sld [smem:[#allocation2 + $0x58]]
        %v1884 = vrot.slane %v1880, 6
        %v1885 = vsel %vm297, %v1879, %v1884
        %v1886 = vrot.slane %v1885, 7
        %v1888 = vsel %vm278, %v1886, 0.0
        %v1889 = vstv %s1881
        %v1890 = vmul.f32 %v1889, %v1888
        %v1891 = vadd.f32 %v1867, %v1890
        %1892 = vrot.lane.b32.xlu0 %v1813, 126
        %v1893 = vpop.permute.xlu0 %1892
        %1894 = vrot.lane.b32.xlu0 %v1814, 126
        %v1895 = vpop.permute.xlu0 %1894
        %v1896 = vsel %vm389, %v1893, %v1895
        %v1897 = vsel %vm389, %v1895, %v1893
        %s1898 = sld [smem:[#allocation2 + $0x59]]
        %v1901 = vrot.slane %v1897, 6
        %v1902 = vsel %vm297, %v1896, %v1901
        %v1903 = vrot.slane %v1902, 7
        %v1905 = vsel %vm281, %v1903, 0.0
        %v1906 = vstv %s1898
        %v1907 = vmul.f32 %v1906, %v1905
        %v1908 = vadd.f32 %v1874, %v1907
        %1909 = vrot.lane.b32.xlu0 %v1813, 125
        %v1910 = vpop.permute.xlu0 %1909
        %1911 = vrot.lane.b32.xlu0 %v1814, 125
        %v1912 = vpop.permute.xlu0 %1911
        %v1913 = vsel %vm407, %v1910, %v1912
        %v1914 = vsel %vm407, %v1912, %v1910
        %s1915 = sld [smem:[#allocation2 + $0x5a]]
        %v1918 = vrot.slane %v1914, 6
        %v1919 = vsel %vm297, %v1913, %v1918
        %v1920 = vrot.slane %v1919, 7
        %v1922 = vsel %vm284, %v1920, 0.0
        %v1923 = vstv %s1915
        %v1924 = vmul.f32 %v1923, %v1922
        %v1925 = vadd.f32 %v1891, %v1924
        %1926 = vrot.lane.b32.xlu0 %v253, 80
        %v1927 = vpop.permute.xlu0 %1926
        %1928 = vrot.lane.b32.xlu0 %v260, 80
        %v1929 = vpop.permute.xlu0 %1928
        %v1930 = vsel %vm1053, %v1927, %v1929
        %v1931 = vsel %vm1053, %v1929, %v1927
        %v1934 = vrot.slane %v1931, 6
        %v1935 = vsel %vm297, %v1930, %v1934
        %v1937 = vsel %vm284, %v1935, 0.0
        %v1939 = vperm.slane %v1937, 0
        %v1940 = vperm.slane %v1937, 2
        %1943 = vrot.lane.b32.xlu0 %v1939, 3
        %v1944 = vpop.permute.xlu0 %1943
        %1945 = vrot.lane.b32.xlu0 %v1940, 3
        %v1946 = vpop.permute.xlu0 %1945
        %v1947 = vsel %vm310, %v1944, %v1946
        %v1948 = vsel %vm310, %v1946, %v1944
        %s1949 = sld [smem:[#allocation2 + $0x5b]]
        %v1952 = vrot.slane %v1947, 6
        %v1953 = vsel %vm297, %v1948, %v1952
        %v1954 = vrot.slane %v1953, 7
        %v1956 = vsel %vm266, %v1954, 0.0
        %v1957 = vstv %s1949
        %v1958 = vmul.f32 %v1957, %v1956
        %v1959 = vadd.f32 %v1908, %v1958
        %1960 = vrot.lane.b32.xlu0 %v1939, 2
        %v1961 = vpop.permute.xlu0 %1960
        %1962 = vrot.lane.b32.xlu0 %v1940, 2
        %v1963 = vpop.permute.xlu0 %1962
        %v1964 = vsel %vm328, %v1961, %v1963
        %v1965 = vsel %vm328, %v1963, %v1961
        %s1966 = sld [smem:[#allocation2 + $0x5c]]
        %v1969 = vrot.slane %v1964, 6
        %v1970 = vsel %vm297, %v1965, %v1969
        %v1971 = vrot.slane %v1970, 7
        %v1973 = vsel %vm269, %v1971, 0.0
        %v1974 = vstv %s1966
        %v1975 = vmul.f32 %v1974, %v1973
        %v1976 = vadd.f32 %v1925, %v1975
        %1977 = vrot.lane.b32.xlu0 %v1939, 1
        %v1978 = vpop.permute.xlu0 %1977
        %1979 = vrot.lane.b32.xlu0 %v1940, 1
        %v1980 = vpop.permute.xlu0 %1979
        %v1981 = vsel %vm346, %v1978, %v1980
        %v1982 = vsel %vm346, %v1980, %v1978
        %s1983 = sld [smem:[#allocation2 + $0x5d]]
        %v1986 = vrot.slane %v1981, 6
        %v1987 = vsel %vm297, %v1982, %v1986
        %v1988 = vrot.slane %v1987, 7
        %v1990 = vsel %vm272, %v1988, 0.0
        %v1991 = vstv %s1983
        %v1992 = vmul.f32 %v1991, %v1990
        %v1993 = vadd.f32 %v1959, %v1992
        %s1994 = sld [smem:[#allocation2 + $0x5e]]
        %v1995 = vrot.slane %v1937, 7
        %v1997 = vsel %vm275, %v1995, 0.0
        %v1998 = vstv %s1994
        %v1999 = vmul.f32 %v1998, %v1997
        %v2000 = vadd.f32 %v1976, %v1999
        %2001 = vrot.lane.b32.xlu0 %v1939, 127
        %v2002 = vpop.permute.xlu0 %2001
        %2003 = vrot.lane.b32.xlu0 %v1940, 127
        %v2004 = vpop.permute.xlu0 %2003
        %v2005 = vsel %vm371, %v2002, %v2004
        %v2006 = vsel %vm371, %v2004, %v2002
        %s2007 = sld [smem:[#allocation2 + $0x5f]]
        %v2010 = vrot.slane %v2006, 6
        %v2011 = vsel %vm297, %v2005, %v2010
        %v2012 = vrot.slane %v2011, 7
        %v2014 = vsel %vm278, %v2012, 0.0
        %v2015 = vstv %s2007
        %v2016 = vmul.f32 %v2015, %v2014
        %v2017 = vadd.f32 %v1993, %v2016
        %2018 = vrot.lane.b32.xlu0 %v1939, 126
        %v2019 = vpop.permute.xlu0 %2018
        %2020 = vrot.lane.b32.xlu0 %v1940, 126
        %v2021 = vpop.permute.xlu0 %2020
        %v2022 = vsel %vm389, %v2019, %v2021
        %v2023 = vsel %vm389, %v2021, %v2019
        %s2024 = sld [smem:[#allocation2 + $0x60]]
        %v2027 = vrot.slane %v2023, 6
        %v2028 = vsel %vm297, %v2022, %v2027
        %v2029 = vrot.slane %v2028, 7
        %v2031 = vsel %vm281, %v2029, 0.0
        %v2032 = vstv %s2024
        %v2033 = vmul.f32 %v2032, %v2031
        %v2034 = vadd.f32 %v2000, %v2033
        %2035 = vrot.lane.b32.xlu0 %v1939, 125
        %v2036 = vpop.permute.xlu0 %2035
        %2037 = vrot.lane.b32.xlu0 %v1940, 125
        %v2038 = vpop.permute.xlu0 %2037
        %v2039 = vsel %vm407, %v2036, %v2038
        %v2040 = vsel %vm407, %v2038, %v2036
        %s2041 = sld [smem:[#allocation2 + $0x61]]
        %v2044 = vrot.slane %v2040, 6
        %v2045 = vsel %vm297, %v2039, %v2044
        %v2046 = vrot.slane %v2045, 7
        %v2048 = vsel %vm284, %v2046, 0.0
        %v2049 = vstv %s2041
        %v2050 = vmul.f32 %v2049, %v2048
        %v2051 = vadd.f32 %v2017, %v2050
        %v2052 = vadd.f32 %v2034, %v2051
        %v2053 = vxor.u32 %v2052, 2147483648
        %v2054 = vmul.f32 %v2053, 1.442695
        %v2055 = vpow.pop %v2054
        %v2056 = vadd.f32 %v2055, 1.0
        %v2057 = vrcp.pop %v2056
        %v2058 = vmul.f32 %v2056, %v2057
        %v2059 = vsub.f32 1.0, %v2058
        %v2060 = vmul.f32 %v2057, %v2059
        %v2061 = vadd.f32 %v2057, %v2060
        %vm2062 = vweird.f32 %v2056
        %vm2063 = vweird.f32 %v2057
        %vm2064 = vmor %vm2062, %vm2063
        %v2065 = vsel %vm2064, %v2057, %v2061
        %v2066 = vand.u32 2147483647, %v2056
        %vm2067 = vcmp.eq.f32.partialorder %v2066, 8.507059e+37
        %v2068 = vand.u32 %v2056, 2147483648
        %v2069 = vor.u32 1.1754944e-38, %v2068
        %v2070 = vsel %vm2067, %v2069, %v2065
        %v2071 = vmul.f32 1.0, %v2070
        %v2073 = vperm.slane %v2071, 1
        %v2074 = vperm.slane %v2071, 3
        %v2077 = vperm.slane %v2073, 1
        %v2078 = vperm.slane %v2074, 1
        %2079 = vst [vmem:[#allocation1] ss:$2 sm:$0xff] %v218
        %v2080 = vld.sshfl [vmem:[#allocation1] sm:$0xff pattern:$0x75316420]
        %v2081 = vld.sshfl [vmem:[#allocation1 + $0x8] sm:$0xff pattern:$0x75316420]
        %v2084 = vmul.f32 %v2077, %v2080
        %v2085 = vmul.f32 %v2078, %v2081
        %v2088 = vrot.slane %v2085, 4
        %v2089 = vsel %vm225, %v2084, %v2088
        %2091 = vst [vmem:[%s217] sm:$0xff] %v2089
        %s2092 = sand.u32 %s98, 1
        %s2093 = scalar_lea.sflag [#allocation4], %s2092
        %s2094 = sand.u32 %s98, 1
        %s2095 = smul.addr %s2094, 8
        %s2096 = scalar_lea.vmem [#allocation9], %s2095
        // Predicated region
        $region45: #{tpu_custom_call.1} parent=31 // pred_check
          %p2097 = pneg %p108
        $region46: #{tpu_custom_call.1} parent=31 // pred_check_branch
          %2099 = sbr.rel (%p2097) target = $region48
        $region47: #{tpu_custom_call.1} parent=31 // pred_region
          %2101 = vsyncadd %s2093, 0
          %s2102 = smul.addr %s22, 2
          %s2103 = smul.addr %s2102, 4
          %s2104 = scalar_lea.hbm %s3, %s2103
          %s2106 = sshll.u32 %s2096, 4
          %s2107 = int_to_ptr.vmem [resolvable:$true] %s2106
          %s2108 = sshll.u32 %s2104, 4
          %s2109 = int_to_ptr.hbm [resolvable:$true] %s2108
          %2111 = dma.vmem_to_hbm [thread:$0]  %s2107, 128, %s2109, %s2093
        $region48: #{tpu_custom_call.1} parent=31 // pred_fallthru
          _
      $region32: #{tpu_custom_call.1} parent=5 // pred_fallthru
        _
      %p2112 = scmp.le.s32.totalorder 2, %s17
      // Predicated region
      $region49: #{tpu_custom_call.1} parent=5 // pred_check
        %p2113 = pneg %p2112
      $region50: #{tpu_custom_call.1} parent=5 // pred_check_branch
        %2115 = sbr.rel (%p2113) target = $region52
      $region51: #{tpu_custom_call.1} parent=5 // pred_region
        %s2116 = ssub.s32 %s17, 2
        // Predicated region
        $region53: #{tpu_custom_call.1} parent=51 // pred_check
          %p2117 = pneg %p114
        $region54: #{tpu_custom_call.1} parent=51 // pred_check_branch
          %2119 = sbr.rel (%p2117) target = $region56
        $region55: #{tpu_custom_call.1} parent=51 // pred_region
          %s2120 = sand.u32 %s99, 1
          %s2121 = scalar_lea.sflag [#allocation4], %s2120
          %s2122 = sand.u32 %s99, 1
          %s2123 = smul.addr %s2122, 8
          %s2124 = scalar_lea.vmem [#allocation9], %s2123
          %2126 = dma.done %s2121, 128
        $region56: #{tpu_custom_call.1} parent=51 // pred_fallthru
          _
      $region52: #{tpu_custom_call.1} parent=5 // pred_fallthru
        _
    $region6: #{tpu_custom_call.1} parent=1 // loop_footer
      %s21 = sadd.s32 1, %s17
    $region7: #{tpu_custom_call.1} parent=1 // loop_footer_branch
      %16 = sbr.rel target = $region3
    $region8: #{tpu_custom_call.1} parent=1 // loop_exit
      _
    %2127 = vsyncpa [#allocation3], 1
    %s2128 = scalar_lea.sflag [#allocation3], 1
    %2129 = vsyncpa %s2128, 1
    %2130 = vsyncpa [#allocation8], 1
    %s2131 = scalar_lea.sflag [#allocation8], 1
    %2132 = vsyncpa %s2131, 1
    %2133 = vsyncpa [#allocation4], 1
    %s2134 = scalar_lea.sflag [#allocation4], 1
    %2135 = vsyncpa %s2134, 1
    %2136 = vsyncpa [#allocation5], 1
    %s2137 = scalar_lea.sflag [#allocation5], 1
    %2138 = vsyncpa %s2137, 1

</llo_original>
